<compile_context>
chip_gen: v5e
topology: v5e:2x2
jax: 0.10.0
libtpu: 0.0.40
codegen_flags: <defaults>
</compile_context>

<pallas_src>
import jax
import jax.numpy as jnp
from jax.experimental import pallas as pl
from jax.experimental.pallas import tpu as pltpu  # noqa: F401  (TPU backend, VMEM-resident refs)

B, T, I, H, O = 2, 8, 3, 50, 10
HP = 128   # hidden size padded so each gate starts on a 128-lane boundary
OP = 128   # output padded to a full 128-lane (unmasked) store


def lstm_linear_kernel(x_ref, wih_ref, whh_ref, b_ref, wlin_ref, blin_ref, out_ref):
    # x_ref:    (B, T, I)    raw batch-first input (whole array resident in VMEM)
    # wih_ref:  (I, 4*HP)    W_ih^T, each gate padded to its own 128-lane block
    # whh_ref:  (HP, 4*HP)   W_hh^T, padded rows + per-gate padded columns (zeros)
    # b_ref:    (1, 4*HP)    b_ih + b_hh, per-gate padded (zeros in pad lanes)
    # wlin_ref: (HP, OP)     W_lin^T padded with zeros
    # blin_ref: (1, OP)      b_lin padded with zeros
    # out_ref:  (B, T, OP)   lane-dense output slab (cols >= O are zero)
    nb, nt, _ = x_ref.shape
    hp = whh_ref.shape[0]

    # B independent recurrence chains, fully unrolled (static slices everywhere).
    for b in range(nb):
        # Hoisted input projection + bias for all timesteps of this batch row:
        # one (T, I) @ (I, 4*HP) matmul, off the serial critical path.
        xg = jnp.dot(x_ref[b], wih_ref[...],
                     preferred_element_type=jnp.float32) + b_ref[...]      # (T, 4*HP)

        h = jnp.zeros((1, hp), jnp.float32)
        c = jnp.zeros((1, hp), jnp.float32)
        rows = []
        for t in range(nt):
            # Recurrence critical path: one matmul + lane-aligned EUP/VPU work.
            gates = xg[t:t + 1, :] + jnp.dot(
                h, whh_ref[...], preferred_element_type=jnp.float32)       # (1, 4*HP)
            i_g = jax.nn.sigmoid(gates[:, 0 * hp:1 * hp])
            f_g = jax.nn.sigmoid(gates[:, 1 * hp:2 * hp])
            g_g = jnp.tanh(gates[:, 2 * hp:3 * hp])
            o_g = jax.nn.sigmoid(gates[:, 3 * hp:4 * hp])
            c = f_g * c + i_g * g_g
            h = o_g * jnp.tanh(c)
            # Padded lanes stay exactly 0: gates_pad = 0 -> i=f=o=0.5, g=0,
            # so c_pad = 0.5*0 + 0.5*0 = 0 and h_pad = 0.5*tanh(0) = 0.
            rows.append(h)

        # Deferred output projection: one (T, HP) @ (HP, OP) matmul and one
        # unmasked (T, 128) store for this batch row.
        hb = jnp.concatenate(rows, axis=0)                                  # (T, HP)
        yb = jnp.dot(hb, wlin_ref[...],
                     preferred_element_type=jnp.float32) + blin_ref[...]    # (T, OP)
        out_ref[b] = yb.astype(out_ref.dtype)


def recurrent_nn_forward(x, w_ih, w_hh, b_ih, b_hh, w_lin, b_lin):
    """x: (B, T, I) float32 (batch_first). Returns (B, T, O) float32."""
    bsz, seq, inp = x.shape

    # --- pad weights so each gate / the output starts on a 128-lane boundary ---
    wih_p = jnp.zeros((inp, 4, HP), jnp.float32).at[:, :, :H].set(
        w_ih.T.reshape(inp, 4, H)).reshape(inp, 4 * HP)                  # (I, 4*HP)
    whh_p = jnp.zeros((HP, 4, HP), jnp.float32).at[:H, :, :H].set(
        w_hh.T.reshape(H, 4, H)).reshape(HP, 4 * HP)                     # (HP, 4*HP)
    b_p = jnp.zeros((4, HP), jnp.float32).at[:, :H].set(
        (b_ih + b_hh).reshape(4, H)).reshape(1, 4 * HP)                  # (1, 4*HP)
    wlin_p = jnp.zeros((HP, OP), jnp.float32).at[:H, :O].set(w_lin.T)    # (HP, OP)
    blin_p = jnp.zeros((1, OP), jnp.float32).at[0, :O].set(b_lin)        # (1, OP)

    # Single invocation, no grid: all operands are tiny and fully VMEM-resident.
    out_padded = pl.pallas_call(
        lstm_linear_kernel,
        out_shape=jax.ShapeDtypeStruct((bsz, seq, OP), jnp.float32),
    )(x, wih_p, whh_p, b_p, wlin_p, blin_p)

    return out_padded[..., :O]                                           # (B, T, O)


def ref_forward(x, w_ih, w_hh, b_ih, b_hh, w_lin, b_lin):
    """Pure-JAX reference matching torch.nn.LSTM + Linear semantics."""
    Bx = x.shape[0]

    def step(carry, x_t):
        h, c = carry
        gates = x_t @ w_ih.T + h @ w_hh.T + b_ih + b_hh
        i = jax.nn.sigmoid(gates[:, 0 * H:1 * H])
        f = jax.nn.sigmoid(gates[:, 1 * H:2 * H])
        g = jnp.tanh(gates[:, 2 * H:3 * H])
        o = jax.nn.sigmoid(gates[:, 3 * H:4 * H])
        c = f * c + i * g
        h = o * jnp.tanh(c)
        return (h, c), h

    init = (jnp.zeros((Bx, H), jnp.float32), jnp.zeros((Bx, H), jnp.float32))
    _, hs = jax.lax.scan(step, init, jnp.transpose(x, (1, 0, 2)))   # (T, B, H)
    y = hs @ w_lin.T + b_lin                                        # (T, B, O)
    return jnp.transpose(y, (1, 0, 2))


if __name__ == "__main__":
    key = jax.random.PRNGKey(0)
    ks = jax.random.split(key, 7)
    # PyTorch default init: U(-k, k) with k = 1/sqrt(hidden_size)
    k_lstm = 1.0 / jnp.sqrt(jnp.float32(H))
    k_lin = 1.0 / jnp.sqrt(jnp.float32(H))

    x = jax.random.normal(ks[0], (B, T, I), dtype=jnp.float32)
    w_ih = jax.random.uniform(ks[1], (4 * H, I), jnp.float32, -k_lstm, k_lstm)
    w_hh = jax.random.uniform(ks[2], (4 * H, H), jnp.float32, -k_lstm, k_lstm)
    b_ih = jax.random.uniform(ks[3], (4 * H,), jnp.float32, -k_lstm, k_lstm)
    b_hh = jax.random.uniform(ks[4], (4 * H,), jnp.float32, -k_lstm, k_lstm)
    w_lin = jax.random.uniform(ks[5], (O, H), jnp.float32, -k_lin, k_lin)
    b_lin = jax.random.uniform(ks[6], (O,), jnp.float32, -k_lin, k_lin)

    fwd = jax.jit(recurrent_nn_forward)
    out = jax.block_until_ready(fwd(x, w_ih, w_hh, b_ih, b_hh, w_lin, b_lin))

    ref = jax.block_until_ready(ref_forward(x, w_ih, w_hh, b_ih, b_hh, w_lin, b_lin))
    assert out.shape == (B, T, O)
    assert jnp.allclose(out, ref, atol=1e-4, rtol=1e-4), \
        f"max abs err {jnp.max(jnp.abs(out - ref))}"

    print("KERNEL_OK")
</pallas_src>

<mosaic_0001>
module attributes {stable_mosaic.version = 11 : i64} {
  func.func @lstm_linear_kernel(%arg0: memref<2x8x3xf32, #tpu.memory_space<vmem>>, %arg1: memref<3x512xf32, #tpu.memory_space<vmem>>, %arg2: memref<128x512xf32, #tpu.memory_space<vmem>>, %arg3: memref<1x512xf32, #tpu.memory_space<vmem>>, %arg4: memref<128x128xf32, #tpu.memory_space<vmem>>, %arg5: memref<1x128xf32, #tpu.memory_space<vmem>>, %arg6: memref<2x8x128xf32, #tpu.memory_space<vmem>>) attributes {dimension_semantics = [], scalar_prefetch = 0 : i64, scratch_operands = 0 : i64, tpu.core_type = #tpu.core_type<tc>} {
    %c0 = arith.constant 0 : index
    %c0_0 = arith.constant 0 : index
    %c0_1 = arith.constant 0 : index
    %0 = vector.load %arg0[%c0, %c0_0, %c0_1] : memref<2x8x3xf32, #tpu.memory_space<vmem>>, vector<1x8x3xf32>
    %1 = vector.shape_cast %0 : vector<1x8x3xf32> to vector<8x3xf32>
    %c0_2 = arith.constant 0 : index
    %c0_3 = arith.constant 0 : index
    %2 = vector.load %arg1[%c0_2, %c0_3] : memref<3x512xf32, #tpu.memory_space<vmem>>, vector<3x512xf32>
    %cst = arith.constant dense<0.000000e+00> : vector<8x512xf32>
    %3 = tpu.matmul %1, %2, %cst {dimension_numbers = #tpu.dot_dimension_numbers<[1], [0], [0], [1], [0, 0, 1, 1], [], []>} : vector<8x3xf32>, vector<3x512xf32>, vector<8x512xf32> -> vector<8x512xf32>
    %c0_4 = arith.constant 0 : index
    %c0_5 = arith.constant 0 : index
    %4 = vector.load %arg3[%c0_4, %c0_5] : memref<1x512xf32, #tpu.memory_space<vmem>>, vector<1x512xf32>
    %5 = vector.broadcast %4 : vector<1x512xf32> to vector<8x512xf32>
    %6 = arith.addf %3, %5 : vector<8x512xf32>
    %cst_6 = arith.constant 0.000000e+00 : f32
    %7 = vector.broadcast %cst_6 : f32 to vector<1x128xf32>
    %cst_7 = arith.constant 0.000000e+00 : f32
    %8 = vector.broadcast %cst_7 : f32 to vector<1x128xf32>
    %9 = vector.extract_strided_slice %6 {offsets = [0, 0], sizes = [1, 512], strides = [1, 1]} : vector<8x512xf32> to vector<1x512xf32>
    %c0_8 = arith.constant 0 : index
    %c0_9 = arith.constant 0 : index
    %10 = vector.load %arg2[%c0_8, %c0_9] : memref<128x512xf32, #tpu.memory_space<vmem>>, vector<128x512xf32>
    %cst_10 = arith.constant dense<0.000000e+00> : vector<1x512xf32>
    %11 = tpu.matmul %7, %10, %cst_10 {dimension_numbers = #tpu.dot_dimension_numbers<[1], [0], [0], [1], [0, 0, 1, 1], [], []>} : vector<1x128xf32>, vector<128x512xf32>, vector<1x512xf32> -> vector<1x512xf32>
    %12 = arith.addf %9, %11 : vector<1x512xf32>
    %13 = vector.extract_strided_slice %12 {offsets = [0, 0], sizes = [1, 128], strides = [1, 1]} : vector<1x512xf32> to vector<1x128xf32>
    %14 = arith.negf %13 : vector<1x128xf32>
    %15 = math.exp %14 : vector<1x128xf32>
    %cst_11 = arith.constant 1.000000e+00 : f32
    %16 = vector.broadcast %cst_11 : f32 to vector<1x128xf32>
    %17 = arith.addf %16, %15 : vector<1x128xf32>
    %18 = arith.divf %16, %17 : vector<1x128xf32>
    %19 = vector.extract_strided_slice %12 {offsets = [0, 128], sizes = [1, 128], strides = [1, 1]} : vector<1x512xf32> to vector<1x128xf32>
    %20 = arith.negf %19 : vector<1x128xf32>
    %21 = math.exp %20 : vector<1x128xf32>
    %cst_12 = arith.constant 1.000000e+00 : f32
    %22 = vector.broadcast %cst_12 : f32 to vector<1x128xf32>
    %23 = arith.addf %22, %21 : vector<1x128xf32>
    %24 = arith.divf %22, %23 : vector<1x128xf32>
    %25 = vector.extract_strided_slice %12 {offsets = [0, 256], sizes = [1, 128], strides = [1, 1]} : vector<1x512xf32> to vector<1x128xf32>
    %26 = math.tanh %25 : vector<1x128xf32>
    %27 = vector.extract_strided_slice %12 {offsets = [0, 384], sizes = [1, 128], strides = [1, 1]} : vector<1x512xf32> to vector<1x128xf32>
    %28 = arith.negf %27 : vector<1x128xf32>
    %29 = math.exp %28 : vector<1x128xf32>
    %cst_13 = arith.constant 1.000000e+00 : f32
    %30 = vector.broadcast %cst_13 : f32 to vector<1x128xf32>
    %31 = arith.addf %30, %29 : vector<1x128xf32>
    %32 = arith.divf %30, %31 : vector<1x128xf32>
    %33 = arith.mulf %24, %8 : vector<1x128xf32>
    %34 = arith.mulf %18, %26 : vector<1x128xf32>
    %35 = arith.addf %33, %34 : vector<1x128xf32>
    %36 = math.tanh %35 : vector<1x128xf32>
    %37 = arith.mulf %32, %36 : vector<1x128xf32>
    %38 = vector.extract_strided_slice %6 {offsets = [1, 0], sizes = [1, 512], strides = [1, 1]} : vector<8x512xf32> to vector<1x512xf32>
    %c0_14 = arith.constant 0 : index
    %c0_15 = arith.constant 0 : index
    %39 = vector.load %arg2[%c0_14, %c0_15] : memref<128x512xf32, #tpu.memory_space<vmem>>, vector<128x512xf32>
    %cst_16 = arith.constant dense<0.000000e+00> : vector<1x512xf32>
    %40 = tpu.matmul %37, %39, %cst_16 {dimension_numbers = #tpu.dot_dimension_numbers<[1], [0], [0], [1], [0, 0, 1, 1], [], []>} : vector<1x128xf32>, vector<128x512xf32>, vector<1x512xf32> -> vector<1x512xf32>
    %41 = arith.addf %38, %40 : vector<1x512xf32>
    %42 = vector.extract_strided_slice %41 {offsets = [0, 0], sizes = [1, 128], strides = [1, 1]} : vector<1x512xf32> to vector<1x128xf32>
    %43 = arith.negf %42 : vector<1x128xf32>
    %44 = math.exp %43 : vector<1x128xf32>
    %cst_17 = arith.constant 1.000000e+00 : f32
    %45 = vector.broadcast %cst_17 : f32 to vector<1x128xf32>
    %46 = arith.addf %45, %44 : vector<1x128xf32>
    %47 = arith.divf %45, %46 : vector<1x128xf32>
    %48 = vector.extract_strided_slice %41 {offsets = [0, 128], sizes = [1, 128], strides = [1, 1]} : vector<1x512xf32> to vector<1x128xf32>
    %49 = arith.negf %48 : vector<1x128xf32>
    %50 = math.exp %49 : vector<1x128xf32>
    %cst_18 = arith.constant 1.000000e+00 : f32
    %51 = vector.broadcast %cst_18 : f32 to vector<1x128xf32>
    %52 = arith.addf %51, %50 : vector<1x128xf32>
    %53 = arith.divf %51, %52 : vector<1x128xf32>
    %54 = vector.extract_strided_slice %41 {offsets = [0, 256], sizes = [1, 128], strides = [1, 1]} : vector<1x512xf32> to vector<1x128xf32>
    %55 = math.tanh %54 : vector<1x128xf32>
    %56 = vector.extract_strided_slice %41 {offsets = [0, 384], sizes = [1, 128], strides = [1, 1]} : vector<1x512xf32> to vector<1x128xf32>
    %57 = arith.negf %56 : vector<1x128xf32>
    %58 = math.exp %57 : vector<1x128xf32>
    %cst_19 = arith.constant 1.000000e+00 : f32
    %59 = vector.broadcast %cst_19 : f32 to vector<1x128xf32>
    %60 = arith.addf %59, %58 : vector<1x128xf32>
    %61 = arith.divf %59, %60 : vector<1x128xf32>
    %62 = arith.mulf %53, %35 : vector<1x128xf32>
    %63 = arith.mulf %47, %55 : vector<1x128xf32>
    %64 = arith.addf %62, %63 : vector<1x128xf32>
    %65 = math.tanh %64 : vector<1x128xf32>
    %66 = arith.mulf %61, %65 : vector<1x128xf32>
    %67 = vector.extract_strided_slice %6 {offsets = [2, 0], sizes = [1, 512], strides = [1, 1]} : vector<8x512xf32> to vector<1x512xf32>
    %c0_20 = arith.constant 0 : index
    %c0_21 = arith.constant 0 : index
    %68 = vector.load %arg2[%c0_20, %c0_21] : memref<128x512xf32, #tpu.memory_space<vmem>>, vector<128x512xf32>
    %cst_22 = arith.constant dense<0.000000e+00> : vector<1x512xf32>
    %69 = tpu.matmul %66, %68, %cst_22 {dimension_numbers = #tpu.dot_dimension_numbers<[1], [0], [0], [1], [0, 0, 1, 1], [], []>} : vector<1x128xf32>, vector<128x512xf32>, vector<1x512xf32> -> vector<1x512xf32>
    %70 = arith.addf %67, %69 : vector<1x512xf32>
    %71 = vector.extract_strided_slice %70 {offsets = [0, 0], sizes = [1, 128], strides = [1, 1]} : vector<1x512xf32> to vector<1x128xf32>
    %72 = arith.negf %71 : vector<1x128xf32>
    %73 = math.exp %72 : vector<1x128xf32>
    %cst_23 = arith.constant 1.000000e+00 : f32
    %74 = vector.broadcast %cst_23 : f32 to vector<1x128xf32>
    %75 = arith.addf %74, %73 : vector<1x128xf32>
    %76 = arith.divf %74, %75 : vector<1x128xf32>
    %77 = vector.extract_strided_slice %70 {offsets = [0, 128], sizes = [1, 128], strides = [1, 1]} : vector<1x512xf32> to vector<1x128xf32>
    %78 = arith.negf %77 : vector<1x128xf32>
    %79 = math.exp %78 : vector<1x128xf32>
    %cst_24 = arith.constant 1.000000e+00 : f32
    %80 = vector.broadcast %cst_24 : f32 to vector<1x128xf32>
    %81 = arith.addf %80, %79 : vector<1x128xf32>
    %82 = arith.divf %80, %81 : vector<1x128xf32>
    %83 = vector.extract_strided_slice %70 {offsets = [0, 256], sizes = [1, 128], strides = [1, 1]} : vector<1x512xf32> to vector<1x128xf32>
    %84 = math.tanh %83 : vector<1x128xf32>
    %85 = vector.extract_strided_slice %70 {offsets = [0, 384], sizes = [1, 128], strides = [1, 1]} : vector<1x512xf32> to vector<1x128xf32>
    %86 = arith.negf %85 : vector<1x128xf32>
    %87 = math.exp %86 : vector<1x128xf32>
    %cst_25 = arith.constant 1.000000e+00 : f32
    %88 = vector.broadcast %cst_25 : f32 to vector<1x128xf32>
    %89 = arith.addf %88, %87 : vector<1x128xf32>
    %90 = arith.divf %88, %89 : vector<1x128xf32>
    %91 = arith.mulf %82, %64 : vector<1x128xf32>
    %92 = arith.mulf %76, %84 : vector<1x128xf32>
    %93 = arith.addf %91, %92 : vector<1x128xf32>
    %94 = math.tanh %93 : vector<1x128xf32>
    %95 = arith.mulf %90, %94 : vector<1x128xf32>
    %96 = vector.extract_strided_slice %6 {offsets = [3, 0], sizes = [1, 512], strides = [1, 1]} : vector<8x512xf32> to vector<1x512xf32>
    %c0_26 = arith.constant 0 : index
    %c0_27 = arith.constant 0 : index
    %97 = vector.load %arg2[%c0_26, %c0_27] : memref<128x512xf32, #tpu.memory_space<vmem>>, vector<128x512xf32>
    %cst_28 = arith.constant dense<0.000000e+00> : vector<1x512xf32>
    %98 = tpu.matmul %95, %97, %cst_28 {dimension_numbers = #tpu.dot_dimension_numbers<[1], [0], [0], [1], [0, 0, 1, 1], [], []>} : vector<1x128xf32>, vector<128x512xf32>, vector<1x512xf32> -> vector<1x512xf32>
    %99 = arith.addf %96, %98 : vector<1x512xf32>
    %100 = vector.extract_strided_slice %99 {offsets = [0, 0], sizes = [1, 128], strides = [1, 1]} : vector<1x512xf32> to vector<1x128xf32>
    %101 = arith.negf %100 : vector<1x128xf32>
    %102 = math.exp %101 : vector<1x128xf32>
    %cst_29 = arith.constant 1.000000e+00 : f32
    %103 = vector.broadcast %cst_29 : f32 to vector<1x128xf32>
    %104 = arith.addf %103, %102 : vector<1x128xf32>
    %105 = arith.divf %103, %104 : vector<1x128xf32>
    %106 = vector.extract_strided_slice %99 {offsets = [0, 128], sizes = [1, 128], strides = [1, 1]} : vector<1x512xf32> to vector<1x128xf32>
    %107 = arith.negf %106 : vector<1x128xf32>
    %108 = math.exp %107 : vector<1x128xf32>
    %cst_30 = arith.constant 1.000000e+00 : f32
    %109 = vector.broadcast %cst_30 : f32 to vector<1x128xf32>
    %110 = arith.addf %109, %108 : vector<1x128xf32>
    %111 = arith.divf %109, %110 : vector<1x128xf32>
    %112 = vector.extract_strided_slice %99 {offsets = [0, 256], sizes = [1, 128], strides = [1, 1]} : vector<1x512xf32> to vector<1x128xf32>
    %113 = math.tanh %112 : vector<1x128xf32>
    %114 = vector.extract_strided_slice %99 {offsets = [0, 384], sizes = [1, 128], strides = [1, 1]} : vector<1x512xf32> to vector<1x128xf32>
    %115 = arith.negf %114 : vector<1x128xf32>
    %116 = math.exp %115 : vector<1x128xf32>
    %cst_31 = arith.constant 1.000000e+00 : f32
    %117 = vector.broadcast %cst_31 : f32 to vector<1x128xf32>
    %118 = arith.addf %117, %116 : vector<1x128xf32>
    %119 = arith.divf %117, %118 : vector<1x128xf32>
    %120 = arith.mulf %111, %93 : vector<1x128xf32>
    %121 = arith.mulf %105, %113 : vector<1x128xf32>
    %122 = arith.addf %120, %121 : vector<1x128xf32>
    %123 = math.tanh %122 : vector<1x128xf32>
    %124 = arith.mulf %119, %123 : vector<1x128xf32>
    %125 = vector.extract_strided_slice %6 {offsets = [4, 0], sizes = [1, 512], strides = [1, 1]} : vector<8x512xf32> to vector<1x512xf32>
    %c0_32 = arith.constant 0 : index
    %c0_33 = arith.constant 0 : index
    %126 = vector.load %arg2[%c0_32, %c0_33] : memref<128x512xf32, #tpu.memory_space<vmem>>, vector<128x512xf32>
    %cst_34 = arith.constant dense<0.000000e+00> : vector<1x512xf32>
    %127 = tpu.matmul %124, %126, %cst_34 {dimension_numbers = #tpu.dot_dimension_numbers<[1], [0], [0], [1], [0, 0, 1, 1], [], []>} : vector<1x128xf32>, vector<128x512xf32>, vector<1x512xf32> -> vector<1x512xf32>
    %128 = arith.addf %125, %127 : vector<1x512xf32>
    %129 = vector.extract_strided_slice %128 {offsets = [0, 0], sizes = [1, 128], strides = [1, 1]} : vector<1x512xf32> to vector<1x128xf32>
    %130 = arith.negf %129 : vector<1x128xf32>
    %131 = math.exp %130 : vector<1x128xf32>
    %cst_35 = arith.constant 1.000000e+00 : f32
    %132 = vector.broadcast %cst_35 : f32 to vector<1x128xf32>
    %133 = arith.addf %132, %131 : vector<1x128xf32>
    %134 = arith.divf %132, %133 : vector<1x128xf32>
    %135 = vector.extract_strided_slice %128 {offsets = [0, 128], sizes = [1, 128], strides = [1, 1]} : vector<1x512xf32> to vector<1x128xf32>
    %136 = arith.negf %135 : vector<1x128xf32>
    %137 = math.exp %136 : vector<1x128xf32>
    %cst_36 = arith.constant 1.000000e+00 : f32
    %138 = vector.broadcast %cst_36 : f32 to vector<1x128xf32>
    %139 = arith.addf %138, %137 : vector<1x128xf32>
    %140 = arith.divf %138, %139 : vector<1x128xf32>
    %141 = vector.extract_strided_slice %128 {offsets = [0, 256], sizes = [1, 128], strides = [1, 1]} : vector<1x512xf32> to vector<1x128xf32>
    %142 = math.tanh %141 : vector<1x128xf32>
    %143 = vector.extract_strided_slice %128 {offsets = [0, 384], sizes = [1, 128], strides = [1, 1]} : vector<1x512xf32> to vector<1x128xf32>
    %144 = arith.negf %143 : vector<1x128xf32>
    %145 = math.exp %144 : vector<1x128xf32>
    %cst_37 = arith.constant 1.000000e+00 : f32
    %146 = vector.broadcast %cst_37 : f32 to vector<1x128xf32>
    %147 = arith.addf %146, %145 : vector<1x128xf32>
    %148 = arith.divf %146, %147 : vector<1x128xf32>
    %149 = arith.mulf %140, %122 : vector<1x128xf32>
    %150 = arith.mulf %134, %142 : vector<1x128xf32>
    %151 = arith.addf %149, %150 : vector<1x128xf32>
    %152 = math.tanh %151 : vector<1x128xf32>
    %153 = arith.mulf %148, %152 : vector<1x128xf32>
    %154 = vector.extract_strided_slice %6 {offsets = [5, 0], sizes = [1, 512], strides = [1, 1]} : vector<8x512xf32> to vector<1x512xf32>
    %c0_38 = arith.constant 0 : index
    %c0_39 = arith.constant 0 : index
    %155 = vector.load %arg2[%c0_38, %c0_39] : memref<128x512xf32, #tpu.memory_space<vmem>>, vector<128x512xf32>
    %cst_40 = arith.constant dense<0.000000e+00> : vector<1x512xf32>
    %156 = tpu.matmul %153, %155, %cst_40 {dimension_numbers = #tpu.dot_dimension_numbers<[1], [0], [0], [1], [0, 0, 1, 1], [], []>} : vector<1x128xf32>, vector<128x512xf32>, vector<1x512xf32> -> vector<1x512xf32>
    %157 = arith.addf %154, %156 : vector<1x512xf32>
    %158 = vector.extract_strided_slice %157 {offsets = [0, 0], sizes = [1, 128], strides = [1, 1]} : vector<1x512xf32> to vector<1x128xf32>
    %159 = arith.negf %158 : vector<1x128xf32>
    %160 = math.exp %159 : vector<1x128xf32>
    %cst_41 = arith.constant 1.000000e+00 : f32
    %161 = vector.broadcast %cst_41 : f32 to vector<1x128xf32>
    %162 = arith.addf %161, %160 : vector<1x128xf32>
    %163 = arith.divf %161, %162 : vector<1x128xf32>
    %164 = vector.extract_strided_slice %157 {offsets = [0, 128], sizes = [1, 128], strides = [1, 1]} : vector<1x512xf32> to vector<1x128xf32>
    %165 = arith.negf %164 : vector<1x128xf32>
    %166 = math.exp %165 : vector<1x128xf32>
    %cst_42 = arith.constant 1.000000e+00 : f32
    %167 = vector.broadcast %cst_42 : f32 to vector<1x128xf32>
    %168 = arith.addf %167, %166 : vector<1x128xf32>
    %169 = arith.divf %167, %168 : vector<1x128xf32>
    %170 = vector.extract_strided_slice %157 {offsets = [0, 256], sizes = [1, 128], strides = [1, 1]} : vector<1x512xf32> to vector<1x128xf32>
    %171 = math.tanh %170 : vector<1x128xf32>
    %172 = vector.extract_strided_slice %157 {offsets = [0, 384], sizes = [1, 128], strides = [1, 1]} : vector<1x512xf32> to vector<1x128xf32>
    %173 = arith.negf %172 : vector<1x128xf32>
    %174 = math.exp %173 : vector<1x128xf32>
    %cst_43 = arith.constant 1.000000e+00 : f32
    %175 = vector.broadcast %cst_43 : f32 to vector<1x128xf32>
    %176 = arith.addf %175, %174 : vector<1x128xf32>
    %177 = arith.divf %175, %176 : vector<1x128xf32>
    %178 = arith.mulf %169, %151 : vector<1x128xf32>
    %179 = arith.mulf %163, %171 : vector<1x128xf32>
    %180 = arith.addf %178, %179 : vector<1x128xf32>
    %181 = math.tanh %180 : vector<1x128xf32>
    %182 = arith.mulf %177, %181 : vector<1x128xf32>
    %183 = vector.extract_strided_slice %6 {offsets = [6, 0], sizes = [1, 512], strides = [1, 1]} : vector<8x512xf32> to vector<1x512xf32>
    %c0_44 = arith.constant 0 : index
    %c0_45 = arith.constant 0 : index
    %184 = vector.load %arg2[%c0_44, %c0_45] : memref<128x512xf32, #tpu.memory_space<vmem>>, vector<128x512xf32>
    %cst_46 = arith.constant dense<0.000000e+00> : vector<1x512xf32>
    %185 = tpu.matmul %182, %184, %cst_46 {dimension_numbers = #tpu.dot_dimension_numbers<[1], [0], [0], [1], [0, 0, 1, 1], [], []>} : vector<1x128xf32>, vector<128x512xf32>, vector<1x512xf32> -> vector<1x512xf32>
    %186 = arith.addf %183, %185 : vector<1x512xf32>
    %187 = vector.extract_strided_slice %186 {offsets = [0, 0], sizes = [1, 128], strides = [1, 1]} : vector<1x512xf32> to vector<1x128xf32>
    %188 = arith.negf %187 : vector<1x128xf32>
    %189 = math.exp %188 : vector<1x128xf32>
    %cst_47 = arith.constant 1.000000e+00 : f32
    %190 = vector.broadcast %cst_47 : f32 to vector<1x128xf32>
    %191 = arith.addf %190, %189 : vector<1x128xf32>
    %192 = arith.divf %190, %191 : vector<1x128xf32>
    %193 = vector.extract_strided_slice %186 {offsets = [0, 128], sizes = [1, 128], strides = [1, 1]} : vector<1x512xf32> to vector<1x128xf32>
    %194 = arith.negf %193 : vector<1x128xf32>
    %195 = math.exp %194 : vector<1x128xf32>
    %cst_48 = arith.constant 1.000000e+00 : f32
    %196 = vector.broadcast %cst_48 : f32 to vector<1x128xf32>
    %197 = arith.addf %196, %195 : vector<1x128xf32>
    %198 = arith.divf %196, %197 : vector<1x128xf32>
    %199 = vector.extract_strided_slice %186 {offsets = [0, 256], sizes = [1, 128], strides = [1, 1]} : vector<1x512xf32> to vector<1x128xf32>
    %200 = math.tanh %199 : vector<1x128xf32>
    %201 = vector.extract_strided_slice %186 {offsets = [0, 384], sizes = [1, 128], strides = [1, 1]} : vector<1x512xf32> to vector<1x128xf32>
    %202 = arith.negf %201 : vector<1x128xf32>
    %203 = math.exp %202 : vector<1x128xf32>
    %cst_49 = arith.constant 1.000000e+00 : f32
    %204 = vector.broadcast %cst_49 : f32 to vector<1x128xf32>
    %205 = arith.addf %204, %203 : vector<1x128xf32>
    %206 = arith.divf %204, %205 : vector<1x128xf32>
    %207 = arith.mulf %198, %180 : vector<1x128xf32>
    %208 = arith.mulf %192, %200 : vector<1x128xf32>
    %209 = arith.addf %207, %208 : vector<1x128xf32>
    %210 = math.tanh %209 : vector<1x128xf32>
    %211 = arith.mulf %206, %210 : vector<1x128xf32>
    %212 = vector.extract_strided_slice %6 {offsets = [7, 0], sizes = [1, 512], strides = [1, 1]} : vector<8x512xf32> to vector<1x512xf32>
    %c0_50 = arith.constant 0 : index
    %c0_51 = arith.constant 0 : index
    %213 = vector.load %arg2[%c0_50, %c0_51] : memref<128x512xf32, #tpu.memory_space<vmem>>, vector<128x512xf32>
    %cst_52 = arith.constant dense<0.000000e+00> : vector<1x512xf32>
    %214 = tpu.matmul %211, %213, %cst_52 {dimension_numbers = #tpu.dot_dimension_numbers<[1], [0], [0], [1], [0, 0, 1, 1], [], []>} : vector<1x128xf32>, vector<128x512xf32>, vector<1x512xf32> -> vector<1x512xf32>
    %215 = arith.addf %212, %214 : vector<1x512xf32>
    %216 = vector.extract_strided_slice %215 {offsets = [0, 0], sizes = [1, 128], strides = [1, 1]} : vector<1x512xf32> to vector<1x128xf32>
    %217 = arith.negf %216 : vector<1x128xf32>
    %218 = math.exp %217 : vector<1x128xf32>
    %cst_53 = arith.constant 1.000000e+00 : f32
    %219 = vector.broadcast %cst_53 : f32 to vector<1x128xf32>
    %220 = arith.addf %219, %218 : vector<1x128xf32>
    %221 = arith.divf %219, %220 : vector<1x128xf32>
    %222 = vector.extract_strided_slice %215 {offsets = [0, 128], sizes = [1, 128], strides = [1, 1]} : vector<1x512xf32> to vector<1x128xf32>
    %223 = arith.negf %222 : vector<1x128xf32>
    %224 = math.exp %223 : vector<1x128xf32>
    %cst_54 = arith.constant 1.000000e+00 : f32
    %225 = vector.broadcast %cst_54 : f32 to vector<1x128xf32>
    %226 = arith.addf %225, %224 : vector<1x128xf32>
    %227 = arith.divf %225, %226 : vector<1x128xf32>
    %228 = vector.extract_strided_slice %215 {offsets = [0, 256], sizes = [1, 128], strides = [1, 1]} : vector<1x512xf32> to vector<1x128xf32>
    %229 = math.tanh %228 : vector<1x128xf32>
    %230 = vector.extract_strided_slice %215 {offsets = [0, 384], sizes = [1, 128], strides = [1, 1]} : vector<1x512xf32> to vector<1x128xf32>
    %231 = arith.negf %230 : vector<1x128xf32>
    %232 = math.exp %231 : vector<1x128xf32>
    %cst_55 = arith.constant 1.000000e+00 : f32
    %233 = vector.broadcast %cst_55 : f32 to vector<1x128xf32>
    %234 = arith.addf %233, %232 : vector<1x128xf32>
    %235 = arith.divf %233, %234 : vector<1x128xf32>
    %236 = arith.mulf %227, %209 : vector<1x128xf32>
    %237 = arith.mulf %221, %229 : vector<1x128xf32>
    %238 = arith.addf %236, %237 : vector<1x128xf32>
    %239 = math.tanh %238 : vector<1x128xf32>
    %240 = arith.mulf %235, %239 : vector<1x128xf32>
    %241 = tpu.concatenate %37, %66, %95, %124, %153, %182, %211, %240 in 0 : vector<1x128xf32>, vector<1x128xf32>, vector<1x128xf32>, vector<1x128xf32>, vector<1x128xf32>, vector<1x128xf32>, vector<1x128xf32>, vector<1x128xf32> -> vector<8x128xf32>
    %c0_56 = arith.constant 0 : index
    %c0_57 = arith.constant 0 : index
    %242 = vector.load %arg4[%c0_56, %c0_57] : memref<128x128xf32, #tpu.memory_space<vmem>>, vector<128x128xf32>
    %cst_58 = arith.constant dense<0.000000e+00> : vector<8x128xf32>
    %243 = tpu.matmul %241, %242, %cst_58 {dimension_numbers = #tpu.dot_dimension_numbers<[1], [0], [0], [1], [0, 0, 1, 1], [], []>} : vector<8x128xf32>, vector<128x128xf32>, vector<8x128xf32> -> vector<8x128xf32>
    %c0_59 = arith.constant 0 : index
    %c0_60 = arith.constant 0 : index
    %244 = vector.load %arg5[%c0_59, %c0_60] : memref<1x128xf32, #tpu.memory_space<vmem>>, vector<1x128xf32>
    %245 = vector.broadcast %244 : vector<1x128xf32> to vector<8x128xf32>
    %246 = arith.addf %243, %245 : vector<8x128xf32>
    %c0_61 = arith.constant 0 : index
    %c0_62 = arith.constant 0 : index
    %c0_63 = arith.constant 0 : index
    %247 = vector.load %arg6[%c0_61, %c0_62, %c0_63] : memref<2x8x128xf32, #tpu.memory_space<vmem>>, vector<1x8x128xf32>
    %248 = vector.shape_cast %247 : vector<1x8x128xf32> to vector<8x128xf32>
    %249 = vector.shape_cast %246 : vector<8x128xf32> to vector<1x8x128xf32>
    tpu.vector_store %arg6[%c0_61, %c0_62, %c0_63], %249 {strides = array<i32>} : memref<2x8x128xf32, #tpu.memory_space<vmem>>, vector<1x8x128xf32>,
    %c1 = arith.constant 1 : index
    %c0_64 = arith.constant 0 : index
    %c0_65 = arith.constant 0 : index
    %250 = vector.load %arg0[%c1, %c0_64, %c0_65] : memref<2x8x3xf32, #tpu.memory_space<vmem>>, vector<1x8x3xf32>
    %251 = vector.shape_cast %250 : vector<1x8x3xf32> to vector<8x3xf32>
    %c0_66 = arith.constant 0 : index
    %c0_67 = arith.constant 0 : index
    %252 = vector.load %arg1[%c0_66, %c0_67] : memref<3x512xf32, #tpu.memory_space<vmem>>, vector<3x512xf32>
    %cst_68 = arith.constant dense<0.000000e+00> : vector<8x512xf32>
    %253 = tpu.matmul %251, %252, %cst_68 {dimension_numbers = #tpu.dot_dimension_numbers<[1], [0], [0], [1], [0, 0, 1, 1], [], []>} : vector<8x3xf32>, vector<3x512xf32>, vector<8x512xf32> -> vector<8x512xf32>
    %c0_69 = arith.constant 0 : index
    %c0_70 = arith.constant 0 : index
    %254 = vector.load %arg3[%c0_69, %c0_70] : memref<1x512xf32, #tpu.memory_space<vmem>>, vector<1x512xf32>
    %255 = vector.broadcast %254 : vector<1x512xf32> to vector<8x512xf32>
    %256 = arith.addf %253, %255 : vector<8x512xf32>
    %cst_71 = arith.constant 0.000000e+00 : f32
    %257 = vector.broadcast %cst_71 : f32 to vector<1x128xf32>
    %cst_72 = arith.constant 0.000000e+00 : f32
    %258 = vector.broadcast %cst_72 : f32 to vector<1x128xf32>
    %259 = vector.extract_strided_slice %256 {offsets = [0, 0], sizes = [1, 512], strides = [1, 1]} : vector<8x512xf32> to vector<1x512xf32>
    %c0_73 = arith.constant 0 : index
    %c0_74 = arith.constant 0 : index
    %260 = vector.load %arg2[%c0_73, %c0_74] : memref<128x512xf32, #tpu.memory_space<vmem>>, vector<128x512xf32>
    %cst_75 = arith.constant dense<0.000000e+00> : vector<1x512xf32>
    %261 = tpu.matmul %257, %260, %cst_75 {dimension_numbers = #tpu.dot_dimension_numbers<[1], [0], [0], [1], [0, 0, 1, 1], [], []>} : vector<1x128xf32>, vector<128x512xf32>, vector<1x512xf32> -> vector<1x512xf32>
    %262 = arith.addf %259, %261 : vector<1x512xf32>
    %263 = vector.extract_strided_slice %262 {offsets = [0, 0], sizes = [1, 128], strides = [1, 1]} : vector<1x512xf32> to vector<1x128xf32>
    %264 = arith.negf %263 : vector<1x128xf32>
    %265 = math.exp %264 : vector<1x128xf32>
    %cst_76 = arith.constant 1.000000e+00 : f32
    %266 = vector.broadcast %cst_76 : f32 to vector<1x128xf32>
    %267 = arith.addf %266, %265 : vector<1x128xf32>
    %268 = arith.divf %266, %267 : vector<1x128xf32>
    %269 = vector.extract_strided_slice %262 {offsets = [0, 128], sizes = [1, 128], strides = [1, 1]} : vector<1x512xf32> to vector<1x128xf32>
    %270 = arith.negf %269 : vector<1x128xf32>
    %271 = math.exp %270 : vector<1x128xf32>
    %cst_77 = arith.constant 1.000000e+00 : f32
    %272 = vector.broadcast %cst_77 : f32 to vector<1x128xf32>
    %273 = arith.addf %272, %271 : vector<1x128xf32>
    %274 = arith.divf %272, %273 : vector<1x128xf32>
    %275 = vector.extract_strided_slice %262 {offsets = [0, 256], sizes = [1, 128], strides = [1, 1]} : vector<1x512xf32> to vector<1x128xf32>
    %276 = math.tanh %275 : vector<1x128xf32>
    %277 = vector.extract_strided_slice %262 {offsets = [0, 384], sizes = [1, 128], strides = [1, 1]} : vector<1x512xf32> to vector<1x128xf32>
    %278 = arith.negf %277 : vector<1x128xf32>
    %279 = math.exp %278 : vector<1x128xf32>
    %cst_78 = arith.constant 1.000000e+00 : f32
    %280 = vector.broadcast %cst_78 : f32 to vector<1x128xf32>
    %281 = arith.addf %280, %279 : vector<1x128xf32>
    %282 = arith.divf %280, %281 : vector<1x128xf32>
    %283 = arith.mulf %274, %258 : vector<1x128xf32>
    %284 = arith.mulf %268, %276 : vector<1x128xf32>
    %285 = arith.addf %283, %284 : vector<1x128xf32>
    %286 = math.tanh %285 : vector<1x128xf32>
    %287 = arith.mulf %282, %286 : vector<1x128xf32>
    %288 = vector.extract_strided_slice %256 {offsets = [1, 0], sizes = [1, 512], strides = [1, 1]} : vector<8x512xf32> to vector<1x512xf32>
    %c0_79 = arith.constant 0 : index
    %c0_80 = arith.constant 0 : index
    %289 = vector.load %arg2[%c0_79, %c0_80] : memref<128x512xf32, #tpu.memory_space<vmem>>, vector<128x512xf32>
    %cst_81 = arith.constant dense<0.000000e+00> : vector<1x512xf32>
    %290 = tpu.matmul %287, %289, %cst_81 {dimension_numbers = #tpu.dot_dimension_numbers<[1], [0], [0], [1], [0, 0, 1, 1], [], []>} : vector<1x128xf32>, vector<128x512xf32>, vector<1x512xf32> -> vector<1x512xf32>
    %291 = arith.addf %288, %290 : vector<1x512xf32>
    %292 = vector.extract_strided_slice %291 {offsets = [0, 0], sizes = [1, 128], strides = [1, 1]} : vector<1x512xf32> to vector<1x128xf32>
    %293 = arith.negf %292 : vector<1x128xf32>
    %294 = math.exp %293 : vector<1x128xf32>
    %cst_82 = arith.constant 1.000000e+00 : f32
    %295 = vector.broadcast %cst_82 : f32 to vector<1x128xf32>
    %296 = arith.addf %295, %294 : vector<1x128xf32>
    %297 = arith.divf %295, %296 : vector<1x128xf32>
    %298 = vector.extract_strided_slice %291 {offsets = [0, 128], sizes = [1, 128], strides = [1, 1]} : vector<1x512xf32> to vector<1x128xf32>
    %299 = arith.negf %298 : vector<1x128xf32>
    %300 = math.exp %299 : vector<1x128xf32>
    %cst_83 = arith.constant 1.000000e+00 : f32
    %301 = vector.broadcast %cst_83 : f32 to vector<1x128xf32>
    %302 = arith.addf %301, %300 : vector<1x128xf32>
    %303 = arith.divf %301, %302 : vector<1x128xf32>
    %304 = vector.extract_strided_slice %291 {offsets = [0, 256], sizes = [1, 128], strides = [1, 1]} : vector<1x512xf32> to vector<1x128xf32>
    %305 = math.tanh %304 : vector<1x128xf32>
    %306 = vector.extract_strided_slice %291 {offsets = [0, 384], sizes = [1, 128], strides = [1, 1]} : vector<1x512xf32> to vector<1x128xf32>
    %307 = arith.negf %306 : vector<1x128xf32>
    %308 = math.exp %307 : vector<1x128xf32>
    %cst_84 = arith.constant 1.000000e+00 : f32
    %309 = vector.broadcast %cst_84 : f32 to vector<1x128xf32>
    %310 = arith.addf %309, %308 : vector<1x128xf32>
    %311 = arith.divf %309, %310 : vector<1x128xf32>
    %312 = arith.mulf %303, %285 : vector<1x128xf32>
    %313 = arith.mulf %297, %305 : vector<1x128xf32>
    %314 = arith.addf %312, %313 : vector<1x128xf32>
    %315 = math.tanh %314 : vector<1x128xf32>
    %316 = arith.mulf %311, %315 : vector<1x128xf32>
    %317 = vector.extract_strided_slice %256 {offsets = [2, 0], sizes = [1, 512], strides = [1, 1]} : vector<8x512xf32> to vector<1x512xf32>
    %c0_85 = arith.constant 0 : index
    %c0_86 = arith.constant 0 : index
    %318 = vector.load %arg2[%c0_85, %c0_86] : memref<128x512xf32, #tpu.memory_space<vmem>>, vector<128x512xf32>
    %cst_87 = arith.constant dense<0.000000e+00> : vector<1x512xf32>
    %319 = tpu.matmul %316, %318, %cst_87 {dimension_numbers = #tpu.dot_dimension_numbers<[1], [0], [0], [1], [0, 0, 1, 1], [], []>} : vector<1x128xf32>, vector<128x512xf32>, vector<1x512xf32> -> vector<1x512xf32>
    %320 = arith.addf %317, %319 : vector<1x512xf32>
    %321 = vector.extract_strided_slice %320 {offsets = [0, 0], sizes = [1, 128], strides = [1, 1]} : vector<1x512xf32> to vector<1x128xf32>
    %322 = arith.negf %321 : vector<1x128xf32>
    %323 = math.exp %322 : vector<1x128xf32>
    %cst_88 = arith.constant 1.000000e+00 : f32
    %324 = vector.broadcast %cst_88 : f32 to vector<1x128xf32>
    %325 = arith.addf %324, %323 : vector<1x128xf32>
    %326 = arith.divf %324, %325 : vector<1x128xf32>
    %327 = vector.extract_strided_slice %320 {offsets = [0, 128], sizes = [1, 128], strides = [1, 1]} : vector<1x512xf32> to vector<1x128xf32>
    %328 = arith.negf %327 : vector<1x128xf32>
    %329 = math.exp %328 : vector<1x128xf32>
    %cst_89 = arith.constant 1.000000e+00 : f32
    %330 = vector.broadcast %cst_89 : f32 to vector<1x128xf32>
    %331 = arith.addf %330, %329 : vector<1x128xf32>
    %332 = arith.divf %330, %331 : vector<1x128xf32>
    %333 = vector.extract_strided_slice %320 {offsets = [0, 256], sizes = [1, 128], strides = [1, 1]} : vector<1x512xf32> to vector<1x128xf32>
    %334 = math.tanh %333 : vector<1x128xf32>
    %335 = vector.extract_strided_slice %320 {offsets = [0, 384], sizes = [1, 128], strides = [1, 1]} : vector<1x512xf32> to vector<1x128xf32>
    %336 = arith.negf %335 : vector<1x128xf32>
    %337 = math.exp %336 : vector<1x128xf32>
    %cst_90 = arith.constant 1.000000e+00 : f32
    %338 = vector.broadcast %cst_90 : f32 to vector<1x128xf32>
    %339 = arith.addf %338, %337 : vector<1x128xf32>
    %340 = arith.divf %338, %339 : vector<1x128xf32>
    %341 = arith.mulf %332, %314 : vector<1x128xf32>
    %342 = arith.mulf %326, %334 : vector<1x128xf32>
    %343 = arith.addf %341, %342 : vector<1x128xf32>
    %344 = math.tanh %343 : vector<1x128xf32>
    %345 = arith.mulf %340, %344 : vector<1x128xf32>
    %346 = vector.extract_strided_slice %256 {offsets = [3, 0], sizes = [1, 512], strides = [1, 1]} : vector<8x512xf32> to vector<1x512xf32>
    %c0_91 = arith.constant 0 : index
    %c0_92 = arith.constant 0 : index
    %347 = vector.load %arg2[%c0_91, %c0_92] : memref<128x512xf32, #tpu.memory_space<vmem>>, vector<128x512xf32>
    %cst_93 = arith.constant dense<0.000000e+00> : vector<1x512xf32>
    %348 = tpu.matmul %345, %347, %cst_93 {dimension_numbers = #tpu.dot_dimension_numbers<[1], [0], [0], [1], [0, 0, 1, 1], [], []>} : vector<1x128xf32>, vector<128x512xf32>, vector<1x512xf32> -> vector<1x512xf32>
    %349 = arith.addf %346, %348 : vector<1x512xf32>
    %350 = vector.extract_strided_slice %349 {offsets = [0, 0], sizes = [1, 128], strides = [1, 1]} : vector<1x512xf32> to vector<1x128xf32>
    %351 = arith.negf %350 : vector<1x128xf32>
    %352 = math.exp %351 : vector<1x128xf32>
    %cst_94 = arith.constant 1.000000e+00 : f32
    %353 = vector.broadcast %cst_94 : f32 to vector<1x128xf32>
    %354 = arith.addf %353, %352 : vector<1x128xf32>
    %355 = arith.divf %353, %354 : vector<1x128xf32>
    %356 = vector.extract_strided_slice %349 {offsets = [0, 128], sizes = [1, 128], strides = [1, 1]} : vector<1x512xf32> to vector<1x128xf32>
    %357 = arith.negf %356 : vector<1x128xf32>
    %358 = math.exp %357 : vector<1x128xf32>
    %cst_95 = arith.constant 1.000000e+00 : f32
    %359 = vector.broadcast %cst_95 : f32 to vector<1x128xf32>
    %360 = arith.addf %359, %358 : vector<1x128xf32>
    %361 = arith.divf %359, %360 : vector<1x128xf32>
    %362 = vector.extract_strided_slice %349 {offsets = [0, 256], sizes = [1, 128], strides = [1, 1]} : vector<1x512xf32> to vector<1x128xf32>
    %363 = math.tanh %362 : vector<1x128xf32>
    %364 = vector.extract_strided_slice %349 {offsets = [0, 384], sizes = [1, 128], strides = [1, 1]} : vector<1x512xf32> to vector<1x128xf32>
    %365 = arith.negf %364 : vector<1x128xf32>
    %366 = math.exp %365 : vector<1x128xf32>
    %cst_96 = arith.constant 1.000000e+00 : f32
    %367 = vector.broadcast %cst_96 : f32 to vector<1x128xf32>
    %368 = arith.addf %367, %366 : vector<1x128xf32>
    %369 = arith.divf %367, %368 : vector<1x128xf32>
    %370 = arith.mulf %361, %343 : vector<1x128xf32>
    %371 = arith.mulf %355, %363 : vector<1x128xf32>
    %372 = arith.addf %370, %371 : vector<1x128xf32>
    %373 = math.tanh %372 : vector<1x128xf32>
    %374 = arith.mulf %369, %373 : vector<1x128xf32>
    %375 = vector.extract_strided_slice %256 {offsets = [4, 0], sizes = [1, 512], strides = [1, 1]} : vector<8x512xf32> to vector<1x512xf32>
    %c0_97 = arith.constant 0 : index
    %c0_98 = arith.constant 0 : index
    %376 = vector.load %arg2[%c0_97, %c0_98] : memref<128x512xf32, #tpu.memory_space<vmem>>, vector<128x512xf32>
    %cst_99 = arith.constant dense<0.000000e+00> : vector<1x512xf32>
    %377 = tpu.matmul %374, %376, %cst_99 {dimension_numbers = #tpu.dot_dimension_numbers<[1], [0], [0], [1], [0, 0, 1, 1], [], []>} : vector<1x128xf32>, vector<128x512xf32>, vector<1x512xf32> -> vector<1x512xf32>
    %378 = arith.addf %375, %377 : vector<1x512xf32>
    %379 = vector.extract_strided_slice %378 {offsets = [0, 0], sizes = [1, 128], strides = [1, 1]} : vector<1x512xf32> to vector<1x128xf32>
    %380 = arith.negf %379 : vector<1x128xf32>
    %381 = math.exp %380 : vector<1x128xf32>
    %cst_100 = arith.constant 1.000000e+00 : f32
    %382 = vector.broadcast %cst_100 : f32 to vector<1x128xf32>
    %383 = arith.addf %382, %381 : vector<1x128xf32>
    %384 = arith.divf %382, %383 : vector<1x128xf32>
    %385 = vector.extract_strided_slice %378 {offsets = [0, 128], sizes = [1, 128], strides = [1, 1]} : vector<1x512xf32> to vector<1x128xf32>
    %386 = arith.negf %385 : vector<1x128xf32>
    %387 = math.exp %386 : vector<1x128xf32>
    %cst_101 = arith.constant 1.000000e+00 : f32
    %388 = vector.broadcast %cst_101 : f32 to vector<1x128xf32>
    %389 = arith.addf %388, %387 : vector<1x128xf32>
    %390 = arith.divf %388, %389 : vector<1x128xf32>
    %391 = vector.extract_strided_slice %378 {offsets = [0, 256], sizes = [1, 128], strides = [1, 1]} : vector<1x512xf32> to vector<1x128xf32>
    %392 = math.tanh %391 : vector<1x128xf32>
    %393 = vector.extract_strided_slice %378 {offsets = [0, 384], sizes = [1, 128], strides = [1, 1]} : vector<1x512xf32> to vector<1x128xf32>
    %394 = arith.negf %393 : vector<1x128xf32>
    %395 = math.exp %394 : vector<1x128xf32>
    %cst_102 = arith.constant 1.000000e+00 : f32
    %396 = vector.broadcast %cst_102 : f32 to vector<1x128xf32>
    %397 = arith.addf %396, %395 : vector<1x128xf32>
    %398 = arith.divf %396, %397 : vector<1x128xf32>
    %399 = arith.mulf %390, %372 : vector<1x128xf32>
    %400 = arith.mulf %384, %392 : vector<1x128xf32>
    %401 = arith.addf %399, %400 : vector<1x128xf32>
    %402 = math.tanh %401 : vector<1x128xf32>
    %403 = arith.mulf %398, %402 : vector<1x128xf32>
    %404 = vector.extract_strided_slice %256 {offsets = [5, 0], sizes = [1, 512], strides = [1, 1]} : vector<8x512xf32> to vector<1x512xf32>
    %c0_103 = arith.constant 0 : index
    %c0_104 = arith.constant 0 : index
    %405 = vector.load %arg2[%c0_103, %c0_104] : memref<128x512xf32, #tpu.memory_space<vmem>>, vector<128x512xf32>
    %cst_105 = arith.constant dense<0.000000e+00> : vector<1x512xf32>
    %406 = tpu.matmul %403, %405, %cst_105 {dimension_numbers = #tpu.dot_dimension_numbers<[1], [0], [0], [1], [0, 0, 1, 1], [], []>} : vector<1x128xf32>, vector<128x512xf32>, vector<1x512xf32> -> vector<1x512xf32>
    %407 = arith.addf %404, %406 : vector<1x512xf32>
    %408 = vector.extract_strided_slice %407 {offsets = [0, 0], sizes = [1, 128], strides = [1, 1]} : vector<1x512xf32> to vector<1x128xf32>
    %409 = arith.negf %408 : vector<1x128xf32>
    %410 = math.exp %409 : vector<1x128xf32>
    %cst_106 = arith.constant 1.000000e+00 : f32
    %411 = vector.broadcast %cst_106 : f32 to vector<1x128xf32>
    %412 = arith.addf %411, %410 : vector<1x128xf32>
    %413 = arith.divf %411, %412 : vector<1x128xf32>
    %414 = vector.extract_strided_slice %407 {offsets = [0, 128], sizes = [1, 128], strides = [1, 1]} : vector<1x512xf32> to vector<1x128xf32>
    %415 = arith.negf %414 : vector<1x128xf32>
    %416 = math.exp %415 : vector<1x128xf32>
    %cst_107 = arith.constant 1.000000e+00 : f32
    %417 = vector.broadcast %cst_107 : f32 to vector<1x128xf32>
    %418 = arith.addf %417, %416 : vector<1x128xf32>
    %419 = arith.divf %417, %418 : vector<1x128xf32>
    %420 = vector.extract_strided_slice %407 {offsets = [0, 256], sizes = [1, 128], strides = [1, 1]} : vector<1x512xf32> to vector<1x128xf32>
    %421 = math.tanh %420 : vector<1x128xf32>
    %422 = vector.extract_strided_slice %407 {offsets = [0, 384], sizes = [1, 128], strides = [1, 1]} : vector<1x512xf32> to vector<1x128xf32>
    %423 = arith.negf %422 : vector<1x128xf32>
    %424 = math.exp %423 : vector<1x128xf32>
    %cst_108 = arith.constant 1.000000e+00 : f32
    %425 = vector.broadcast %cst_108 : f32 to vector<1x128xf32>
    %426 = arith.addf %425, %424 : vector<1x128xf32>
    %427 = arith.divf %425, %426 : vector<1x128xf32>
    %428 = arith.mulf %419, %401 : vector<1x128xf32>
    %429 = arith.mulf %413, %421 : vector<1x128xf32>
    %430 = arith.addf %428, %429 : vector<1x128xf32>
    %431 = math.tanh %430 : vector<1x128xf32>
    %432 = arith.mulf %427, %431 : vector<1x128xf32>
    %433 = vector.extract_strided_slice %256 {offsets = [6, 0], sizes = [1, 512], strides = [1, 1]} : vector<8x512xf32> to vector<1x512xf32>
    %c0_109 = arith.constant 0 : index
    %c0_110 = arith.constant 0 : index
    %434 = vector.load %arg2[%c0_109, %c0_110] : memref<128x512xf32, #tpu.memory_space<vmem>>, vector<128x512xf32>
    %cst_111 = arith.constant dense<0.000000e+00> : vector<1x512xf32>
    %435 = tpu.matmul %432, %434, %cst_111 {dimension_numbers = #tpu.dot_dimension_numbers<[1], [0], [0], [1], [0, 0, 1, 1], [], []>} : vector<1x128xf32>, vector<128x512xf32>, vector<1x512xf32> -> vector<1x512xf32>
    %436 = arith.addf %433, %435 : vector<1x512xf32>
    %437 = vector.extract_strided_slice %436 {offsets = [0, 0], sizes = [1, 128], strides = [1, 1]} : vector<1x512xf32> to vector<1x128xf32>
    %438 = arith.negf %437 : vector<1x128xf32>
    %439 = math.exp %438 : vector<1x128xf32>
    %cst_112 = arith.constant 1.000000e+00 : f32
    %440 = vector.broadcast %cst_112 : f32 to vector<1x128xf32>
    %441 = arith.addf %440, %439 : vector<1x128xf32>
    %442 = arith.divf %440, %441 : vector<1x128xf32>
    %443 = vector.extract_strided_slice %436 {offsets = [0, 128], sizes = [1, 128], strides = [1, 1]} : vector<1x512xf32> to vector<1x128xf32>
    %444 = arith.negf %443 : vector<1x128xf32>
    %445 = math.exp %444 : vector<1x128xf32>
    %cst_113 = arith.constant 1.000000e+00 : f32
    %446 = vector.broadcast %cst_113 : f32 to vector<1x128xf32>
    %447 = arith.addf %446, %445 : vector<1x128xf32>
    %448 = arith.divf %446, %447 : vector<1x128xf32>
    %449 = vector.extract_strided_slice %436 {offsets = [0, 256], sizes = [1, 128], strides = [1, 1]} : vector<1x512xf32> to vector<1x128xf32>
    %450 = math.tanh %449 : vector<1x128xf32>
    %451 = vector.extract_strided_slice %436 {offsets = [0, 384], sizes = [1, 128], strides = [1, 1]} : vector<1x512xf32> to vector<1x128xf32>
    %452 = arith.negf %451 : vector<1x128xf32>
    %453 = math.exp %452 : vector<1x128xf32>
    %cst_114 = arith.constant 1.000000e+00 : f32
    %454 = vector.broadcast %cst_114 : f32 to vector<1x128xf32>
    %455 = arith.addf %454, %453 : vector<1x128xf32>
    %456 = arith.divf %454, %455 : vector<1x128xf32>
    %457 = arith.mulf %448, %430 : vector<1x128xf32>
    %458 = arith.mulf %442, %450 : vector<1x128xf32>
    %459 = arith.addf %457, %458 : vector<1x128xf32>
    %460 = math.tanh %459 : vector<1x128xf32>
    %461 = arith.mulf %456, %460 : vector<1x128xf32>
    %462 = vector.extract_strided_slice %256 {offsets = [7, 0], sizes = [1, 512], strides = [1, 1]} : vector<8x512xf32> to vector<1x512xf32>
    %c0_115 = arith.constant 0 : index
    %c0_116 = arith.constant 0 : index
    %463 = vector.load %arg2[%c0_115, %c0_116] : memref<128x512xf32, #tpu.memory_space<vmem>>, vector<128x512xf32>
    %cst_117 = arith.constant dense<0.000000e+00> : vector<1x512xf32>
    %464 = tpu.matmul %461, %463, %cst_117 {dimension_numbers = #tpu.dot_dimension_numbers<[1], [0], [0], [1], [0, 0, 1, 1], [], []>} : vector<1x128xf32>, vector<128x512xf32>, vector<1x512xf32> -> vector<1x512xf32>
    %465 = arith.addf %462, %464 : vector<1x512xf32>
    %466 = vector.extract_strided_slice %465 {offsets = [0, 0], sizes = [1, 128], strides = [1, 1]} : vector<1x512xf32> to vector<1x128xf32>
    %467 = arith.negf %466 : vector<1x128xf32>
    %468 = math.exp %467 : vector<1x128xf32>
    %cst_118 = arith.constant 1.000000e+00 : f32
    %469 = vector.broadcast %cst_118 : f32 to vector<1x128xf32>
    %470 = arith.addf %469, %468 : vector<1x128xf32>
    %471 = arith.divf %469, %470 : vector<1x128xf32>
    %472 = vector.extract_strided_slice %465 {offsets = [0, 128], sizes = [1, 128], strides = [1, 1]} : vector<1x512xf32> to vector<1x128xf32>
    %473 = arith.negf %472 : vector<1x128xf32>
    %474 = math.exp %473 : vector<1x128xf32>
    %cst_119 = arith.constant 1.000000e+00 : f32
    %475 = vector.broadcast %cst_119 : f32 to vector<1x128xf32>
    %476 = arith.addf %475, %474 : vector<1x128xf32>
    %477 = arith.divf %475, %476 : vector<1x128xf32>
    %478 = vector.extract_strided_slice %465 {offsets = [0, 256], sizes = [1, 128], strides = [1, 1]} : vector<1x512xf32> to vector<1x128xf32>
    %479 = math.tanh %478 : vector<1x128xf32>
    %480 = vector.extract_strided_slice %465 {offsets = [0, 384], sizes = [1, 128], strides = [1, 1]} : vector<1x512xf32> to vector<1x128xf32>
    %481 = arith.negf %480 : vector<1x128xf32>
    %482 = math.exp %481 : vector<1x128xf32>
    %cst_120 = arith.constant 1.000000e+00 : f32
    %483 = vector.broadcast %cst_120 : f32 to vector<1x128xf32>
    %484 = arith.addf %483, %482 : vector<1x128xf32>
    %485 = arith.divf %483, %484 : vector<1x128xf32>
    %486 = arith.mulf %477, %459 : vector<1x128xf32>
    %487 = arith.mulf %471, %479 : vector<1x128xf32>
    %488 = arith.addf %486, %487 : vector<1x128xf32>
    %489 = math.tanh %488 : vector<1x128xf32>
    %490 = arith.mulf %485, %489 : vector<1x128xf32>
    %491 = tpu.concatenate %287, %316, %345, %374, %403, %432, %461, %490 in 0 : vector<1x128xf32>, vector<1x128xf32>, vector<1x128xf32>, vector<1x128xf32>, vector<1x128xf32>, vector<1x128xf32>, vector<1x128xf32>, vector<1x128xf32> -> vector<8x128xf32>
    %c0_121 = arith.constant 0 : index
    %c0_122 = arith.constant 0 : index
    %492 = vector.load %arg4[%c0_121, %c0_122] : memref<128x128xf32, #tpu.memory_space<vmem>>, vector<128x128xf32>
    %cst_123 = arith.constant dense<0.000000e+00> : vector<8x128xf32>
    %493 = tpu.matmul %491, %492, %cst_123 {dimension_numbers = #tpu.dot_dimension_numbers<[1], [0], [0], [1], [0, 0, 1, 1], [], []>} : vector<8x128xf32>, vector<128x128xf32>, vector<8x128xf32> -> vector<8x128xf32>
    %c0_124 = arith.constant 0 : index
    %c0_125 = arith.constant 0 : index
    %494 = vector.load %arg5[%c0_124, %c0_125] : memref<1x128xf32, #tpu.memory_space<vmem>>, vector<1x128xf32>
    %495 = vector.broadcast %494 : vector<1x128xf32> to vector<8x128xf32>
    %496 = arith.addf %493, %495 : vector<8x128xf32>
    %c1_126 = arith.constant 1 : index
    %c0_127 = arith.constant 0 : index
    %c0_128 = arith.constant 0 : index
    %497 = vector.load %arg6[%c1_126, %c0_127, %c0_128] : memref<2x8x128xf32, #tpu.memory_space<vmem>>, vector<1x8x128xf32>
    %498 = vector.shape_cast %497 : vector<1x8x128xf32> to vector<8x128xf32>
    %499 = vector.shape_cast %496 : vector<8x128xf32> to vector<1x8x128xf32>
    tpu.vector_store %arg6[%c1_126, %c0_127, %c0_128], %499 {strides = array<i32>} : memref<2x8x128xf32, #tpu.memory_space<vmem>>, vector<1x8x128xf32>,
    return
  }
}

</mosaic_0001>

<llo_original>
// kernel: recurrent_nn_forward.1
$region0: #{recurrent_nn_forward.1}
  #allocation0 [shape = 'u32[]', space=smem, size = 0x4, offset = 0x4, fixed_abs, tag = 'smem constant byte address 0x4 - core index']
  #allocation1 [shape = 'u32[72,128]{1,0:T(1,128)}', space=vmem, size = 0x9000, scoped, tag = 'internal scratch']
  %s0 = inlined_call_operand.vmem [shape: f32[2,8,3], index: 0, kind: input, shape index: {}]
  %s1 = inlined_call_operand.vmem [shape: f32[3,512], index: 1, kind: input, shape index: {}]
  %s2 = inlined_call_operand.vmem [shape: f32[128,512], index: 2, kind: input, shape index: {}]
  %s3 = inlined_call_operand.vmem [shape: f32[1,512], index: 3, kind: input, shape index: {}]
  %s4 = inlined_call_operand.vmem [shape: f32[128,128], index: 4, kind: input, shape index: {}]
  %s5 = inlined_call_operand.vmem [shape: f32[1,128], index: 5, kind: input, shape index: {}]
  %s6 = inlined_call_operand.hbm [shape: f32[2,8,128], index: 6, kind: output, shape index: {}]
  %s7 = sld [smem:[#allocation0]]
  $region34: #{recurrent_nn_forward.1} parent=0
    _
  %s9 = ssub.s32 1, %s7
  %s10 = scalar_select 0, %s9, %s7
  $region1: #{recurrent_nn_forward.1} parent=0
    #allocation2 [shape = 'u8[8192]{0}', space=vmem, size = 0x2000, scoped, tag = 'output window, operand 0, single buffered']
    #allocation3 [shape = 's32[1]{0}', space=sflag, size = 0x4, scoped, tag = 'scoped memory for recurrent_nn_forward.1']
    %11 = vsyncpa [#allocation3], 0
    // Predicated region
    $region2: #{recurrent_nn_forward.1} parent=1 // pred_check
      _
    $region3: #{recurrent_nn_forward.1} parent=1 // pred_check_branch
      %13 = sbr.rel (0) target = $region5
    $region4: #{recurrent_nn_forward.1} parent=1 // pred_region
      _
    $region5: #{recurrent_nn_forward.1} parent=1 // pred_fallthru
      _
    // Predicated region
    $region6: #{recurrent_nn_forward.1} parent=1 // pred_check
      _
    $region7: #{recurrent_nn_forward.1} parent=1 // pred_check_branch
      %15 = sbr.rel (0) target = $region9
    $region8: #{recurrent_nn_forward.1} parent=1 // pred_region
      _
    $region9: #{recurrent_nn_forward.1} parent=1 // pred_fallthru
      _
    // Predicated region
    $region10: #{recurrent_nn_forward.1} parent=1 // pred_check
      _
    $region11: #{recurrent_nn_forward.1} parent=1 // pred_check_branch
      %17 = sbr.rel (0) target = $region13
    $region12: #{recurrent_nn_forward.1} parent=1 // pred_region
      _
    $region13: #{recurrent_nn_forward.1} parent=1 // pred_fallthru
      _
    // Predicated region
    $region14: #{recurrent_nn_forward.1} parent=1 // pred_check
      _
    $region15: #{recurrent_nn_forward.1} parent=1 // pred_check_branch
      %19 = sbr.rel (0) target = $region17
    $region16: #{recurrent_nn_forward.1} parent=1 // pred_region
      _
    $region17: #{recurrent_nn_forward.1} parent=1 // pred_fallthru
      _
    // Predicated region
    $region18: #{recurrent_nn_forward.1} parent=1 // pred_check
      _
    $region19: #{recurrent_nn_forward.1} parent=1 // pred_check_branch
      %21 = sbr.rel (0) target = $region21
    $region20: #{recurrent_nn_forward.1} parent=1 // pred_region
      _
    $region21: #{recurrent_nn_forward.1} parent=1 // pred_fallthru
      _
    // Predicated region
    $region22: #{recurrent_nn_forward.1} parent=1 // pred_check
      _
    $region23: #{recurrent_nn_forward.1} parent=1 // pred_check_branch
      %23 = sbr.rel (0) target = $region25
    $region24: #{recurrent_nn_forward.1} parent=1 // pred_region
      _
    $region25: #{recurrent_nn_forward.1} parent=1 // pred_fallthru
      _
    %v24 = vld [vmem:[%s0] sm:$0xff]
    %v25 = vld [vmem:[%s1] sm:$0x77]
    %v26 = vld [vmem:[%s1 + $0x8] sm:$0x77]
    %v27 = vld [vmem:[%s3] sm:$0xf]
    %v29 = vperm.slane %v27, 0
    %v30 = vperm.slane %v27, 1
    %v31 = vperm.slane %v27, 2
    %v32 = vperm.slane %v27, 3
    %39 = vst [vmem:[#allocation1] ss:$2 sm:$0xff] %v25
    %s40 = scalar_lea.vmem [#allocation1], 16
    %41 = vst [vmem:[%s40] ss:$2 sm:$0xff] %v26
    %v42 = vld.sshfl [vmem:[#allocation1] sm:$0xff pattern:$0x75316420]
    %v43 = vld.sshfl [vmem:[#allocation1 + $0x8] sm:$0xff pattern:$0x75316420]
    %v44 = vld.sshfl [vmem:[#allocation1 + $0x10] sm:$0xff pattern:$0x75316420]
    %v45 = vld.sshfl [vmem:[#allocation1 + $0x18] sm:$0xff pattern:$0x75316420]
    %vm46 = vcmask 23552
    %v48 = vsel %vm46, %v24, 0
    %vm50 = vcmask 1042432
    %v51 = vsel %vm50, %v42, 0
    %v53 = vsel %vm50, %v43, 0
    %v55 = vsel %vm50, %v44, 0
    %v57 = vsel %vm50, %v45, 0
    %59 = vmatpush.msra.mxu0 0.0
    %60 = vmatpush.msra.mxu0 0.0
    %61 = vmatpush.msra.mxu0 0.0
    %62 = vmatpush.msra.mxu0 0.0
    %63 = vmatpush.msra.mxu0 0.0
    %64 = vmatpush.msra.mxu0 0.0
    %65 = vmatpush.msra.mxu0 0.0
    %66 = vmatpush.msra.mxu0 0.0
    %67 = vmatpush.msra.mxu0 0.0
    %68 = vmatpush.msra.mxu0 0.0
    %69 = vmatpush.msra.mxu0 0.0
    %70 = vmatpush.msra.mxu0 0.0
    %71 = vmatpush.msra.mxu0 0.0
    %72 = vmatpush.msra.mxu0 0.0
    %73 = vmatpush.msra.mxu0 0.0
    %74 = vmatpush.msra.mxu0 %v51
    %75 = vmatmul.f32.gmra.mxu0 %v48
    %v76 = vpop.f32.mrf.mxu0
    %v77 = vadd.f32 %v29, %v76
    %78 = vdwg.mxu0
    %79 = vmatpush.msra.mxu0 0.0
    %80 = vmatpush.msra.mxu0 0.0
    %81 = vmatpush.msra.mxu0 0.0
    %82 = vmatpush.msra.mxu0 0.0
    %83 = vmatpush.msra.mxu0 0.0
    %84 = vmatpush.msra.mxu0 0.0
    %85 = vmatpush.msra.mxu0 0.0
    %86 = vmatpush.msra.mxu0 0.0
    %87 = vmatpush.msra.mxu0 0.0
    %88 = vmatpush.msra.mxu0 0.0
    %89 = vmatpush.msra.mxu0 0.0
    %90 = vmatpush.msra.mxu0 0.0
    %91 = vmatpush.msra.mxu0 0.0
    %92 = vmatpush.msra.mxu0 0.0
    %93 = vmatpush.msra.mxu0 0.0
    %94 = vmatpush.msra.mxu0 %v53
    %95 = vmatmul.f32.gmra.mxu0 %v48
    %v96 = vpop.f32.mrf.mxu0
    %v97 = vadd.f32 %v30, %v96
    %98 = vdwg.mxu0
    %99 = vmatpush.msra.mxu0 0.0
    %100 = vmatpush.msra.mxu0 0.0
    %101 = vmatpush.msra.mxu0 0.0
    %102 = vmatpush.msra.mxu0 0.0
    %103 = vmatpush.msra.mxu0 0.0
    %104 = vmatpush.msra.mxu0 0.0
    %105 = vmatpush.msra.mxu0 0.0
    %106 = vmatpush.msra.mxu0 0.0
    %107 = vmatpush.msra.mxu0 0.0
    %108 = vmatpush.msra.mxu0 0.0
    %109 = vmatpush.msra.mxu0 0.0
    %110 = vmatpush.msra.mxu0 0.0
    %111 = vmatpush.msra.mxu0 0.0
    %112 = vmatpush.msra.mxu0 0.0
    %113 = vmatpush.msra.mxu0 0.0
    %114 = vmatpush.msra.mxu0 %v55
    %115 = vmatmul.f32.gmra.mxu0 %v48
    %v116 = vpop.f32.mrf.mxu0
    %v117 = vadd.f32 %v31, %v116
    %118 = vdwg.mxu0
    %119 = vmatpush.msra.mxu0 0.0
    %120 = vmatpush.msra.mxu0 0.0
    %121 = vmatpush.msra.mxu0 0.0
    %122 = vmatpush.msra.mxu0 0.0
    %123 = vmatpush.msra.mxu0 0.0
    %124 = vmatpush.msra.mxu0 0.0
    %125 = vmatpush.msra.mxu0 0.0
    %126 = vmatpush.msra.mxu0 0.0
    %127 = vmatpush.msra.mxu0 0.0
    %128 = vmatpush.msra.mxu0 0.0
    %129 = vmatpush.msra.mxu0 0.0
    %130 = vmatpush.msra.mxu0 0.0
    %131 = vmatpush.msra.mxu0 0.0
    %132 = vmatpush.msra.mxu0 0.0
    %133 = vmatpush.msra.mxu0 0.0
    %134 = vmatpush.msra.mxu0 %v57
    %135 = vmatmul.f32.gmra.mxu0 %v48
    %v136 = vpop.f32.mrf.mxu0
    %v137 = vadd.f32 %v32, %v136
    %138 = vdwg.mxu0
    %v139 = vld [vmem:[%s2] sm:$0xff]
    %v140 = vld [vmem:[%s2 + $0x8] sm:$0xff]
    %v141 = vld [vmem:[%s2 + $0x10] sm:$0xff]
    %v142 = vld [vmem:[%s2 + $0x18] sm:$0xff]
    %v143 = vld [vmem:[%s2 + $0x20] sm:$0xff]
    %v144 = vld [vmem:[%s2 + $0x28] sm:$0xff]
    %v145 = vld [vmem:[%s2 + $0x30] sm:$0xff]
    %v146 = vld [vmem:[%s2 + $0x38] sm:$0xff]
    %v147 = vld [vmem:[%s2 + $0x40] sm:$0xff]
    %v148 = vld [vmem:[%s2 + $0x48] sm:$0xff]
    %v149 = vld [vmem:[%s2 + $0x50] sm:$0xff]
    %v150 = vld [vmem:[%s2 + $0x58] sm:$0xff]
    %v151 = vld [vmem:[%s2 + $0x60] sm:$0xff]
    %v152 = vld [vmem:[%s2 + $0x68] sm:$0xff]
    %v153 = vld [vmem:[%s2 + $0x70] sm:$0xff]
    %v154 = vld [vmem:[%s2 + $0x78] sm:$0xff]
    %v155 = vld [vmem:[%s2 + $0x80] sm:$0xff]
    %v156 = vld [vmem:[%s2 + $0x88] sm:$0xff]
    %v157 = vld [vmem:[%s2 + $0x90] sm:$0xff]
    %v158 = vld [vmem:[%s2 + $0x98] sm:$0xff]
    %v159 = vld [vmem:[%s2 + $0xa0] sm:$0xff]
    %v160 = vld [vmem:[%s2 + $0xa8] sm:$0xff]
    %v161 = vld [vmem:[%s2 + $0xb0] sm:$0xff]
    %v162 = vld [vmem:[%s2 + $0xb8] sm:$0xff]
    %v163 = vld [vmem:[%s2 + $0xc0] sm:$0xff]
    %v164 = vld [vmem:[%s2 + $0xc8] sm:$0xff]
    %v165 = vld [vmem:[%s2 + $0xd0] sm:$0xff]
    %v166 = vld [vmem:[%s2 + $0xd8] sm:$0xff]
    %v167 = vld [vmem:[%s2 + $0xe0] sm:$0xff]
    %v168 = vld [vmem:[%s2 + $0xe8] sm:$0xff]
    %v169 = vld [vmem:[%s2 + $0xf0] sm:$0xff]
    %v170 = vld [vmem:[%s2 + $0xf8] sm:$0xff]
    %v171 = vld [vmem:[%s2 + $0x100] sm:$0xff]
    %v172 = vld [vmem:[%s2 + $0x108] sm:$0xff]
    %v173 = vld [vmem:[%s2 + $0x110] sm:$0xff]
    %v174 = vld [vmem:[%s2 + $0x118] sm:$0xff]
    %v175 = vld [vmem:[%s2 + $0x120] sm:$0xff]
    %v176 = vld [vmem:[%s2 + $0x128] sm:$0xff]
    %v177 = vld [vmem:[%s2 + $0x130] sm:$0xff]
    %v178 = vld [vmem:[%s2 + $0x138] sm:$0xff]
    %v179 = vld [vmem:[%s2 + $0x140] sm:$0xff]
    %v180 = vld [vmem:[%s2 + $0x148] sm:$0xff]
    %v181 = vld [vmem:[%s2 + $0x150] sm:$0xff]
    %v182 = vld [vmem:[%s2 + $0x158] sm:$0xff]
    %v183 = vld [vmem:[%s2 + $0x160] sm:$0xff]
    %v184 = vld [vmem:[%s2 + $0x168] sm:$0xff]
    %v185 = vld [vmem:[%s2 + $0x170] sm:$0xff]
    %v186 = vld [vmem:[%s2 + $0x178] sm:$0xff]
    %v187 = vld [vmem:[%s2 + $0x180] sm:$0xff]
    %v188 = vld [vmem:[%s2 + $0x188] sm:$0xff]
    %v189 = vld [vmem:[%s2 + $0x190] sm:$0xff]
    %v190 = vld [vmem:[%s2 + $0x198] sm:$0xff]
    %v191 = vld [vmem:[%s2 + $0x1a0] sm:$0xff]
    %v192 = vld [vmem:[%s2 + $0x1a8] sm:$0xff]
    %v193 = vld [vmem:[%s2 + $0x1b0] sm:$0xff]
    %v194 = vld [vmem:[%s2 + $0x1b8] sm:$0xff]
    %v195 = vld [vmem:[%s2 + $0x1c0] sm:$0xff]
    %v196 = vld [vmem:[%s2 + $0x1c8] sm:$0xff]
    %v197 = vld [vmem:[%s2 + $0x1d0] sm:$0xff]
    %v198 = vld [vmem:[%s2 + $0x1d8] sm:$0xff]
    %v199 = vld [vmem:[%s2 + $0x1e0] sm:$0xff]
    %v200 = vld [vmem:[%s2 + $0x1e8] sm:$0xff]
    %v201 = vld [vmem:[%s2 + $0x1f0] sm:$0xff]
    %v202 = vld [vmem:[%s2 + $0x1f8] sm:$0xff]
    %203 = vmatpush.msra.mxu0 %v199
    %204 = vmatpush.msra.mxu0 %v195
    %205 = vmatpush.msra.mxu0 %v191
    %206 = vmatpush.msra.mxu0 %v187
    %207 = vmatpush.msra.mxu0 %v183
    %208 = vmatpush.msra.mxu0 %v179
    %209 = vmatpush.msra.mxu0 %v175
    %210 = vmatpush.msra.mxu0 %v171
    %211 = vmatpush.msra.mxu0 %v167
    %212 = vmatpush.msra.mxu0 %v163
    %213 = vmatpush.msra.mxu0 %v159
    %214 = vmatpush.msra.mxu0 %v155
    %215 = vmatpush.msra.mxu0 %v151
    %216 = vmatpush.msra.mxu0 %v147
    %217 = vmatpush.msra.mxu0 %v143
    %218 = vmatpush.msra.mxu0 %v139
    %219 = vmatmul.f32.gmra.mxu0 0.0
    %v220 = vpop.f32.mrf.mxu0
    %v221 = vadd.f32 0.0, %v220
    %222 = vdwg.mxu0
    %223 = vmatpush.msra.mxu0 %v200
    %224 = vmatpush.msra.mxu0 %v196
    %225 = vmatpush.msra.mxu0 %v192
    %226 = vmatpush.msra.mxu0 %v188
    %227 = vmatpush.msra.mxu0 %v184
    %228 = vmatpush.msra.mxu0 %v180
    %229 = vmatpush.msra.mxu0 %v176
    %230 = vmatpush.msra.mxu0 %v172
    %231 = vmatpush.msra.mxu0 %v168
    %232 = vmatpush.msra.mxu0 %v164
    %233 = vmatpush.msra.mxu0 %v160
    %234 = vmatpush.msra.mxu0 %v156
    %235 = vmatpush.msra.mxu0 %v152
    %236 = vmatpush.msra.mxu0 %v148
    %237 = vmatpush.msra.mxu0 %v144
    %238 = vmatpush.msra.mxu0 %v140
    %239 = vmatmul.f32.gmra.mxu0 0.0
    %v240 = vpop.f32.mrf.mxu0
    %v241 = vadd.f32 0.0, %v240
    %242 = vdwg.mxu0
    %243 = vmatpush.msra.mxu0 %v201
    %244 = vmatpush.msra.mxu0 %v197
    %245 = vmatpush.msra.mxu0 %v193
    %246 = vmatpush.msra.mxu0 %v189
    %247 = vmatpush.msra.mxu0 %v185
    %248 = vmatpush.msra.mxu0 %v181
    %249 = vmatpush.msra.mxu0 %v177
    %250 = vmatpush.msra.mxu0 %v173
    %251 = vmatpush.msra.mxu0 %v169
    %252 = vmatpush.msra.mxu0 %v165
    %253 = vmatpush.msra.mxu0 %v161
    %254 = vmatpush.msra.mxu0 %v157
    %255 = vmatpush.msra.mxu0 %v153
    %256 = vmatpush.msra.mxu0 %v149
    %257 = vmatpush.msra.mxu0 %v145
    %258 = vmatpush.msra.mxu0 %v141
    %259 = vmatmul.f32.gmra.mxu0 0.0
    %v260 = vpop.f32.mrf.mxu0
    %v261 = vadd.f32 0.0, %v260
    %262 = vdwg.mxu0
    %263 = vmatpush.msra.mxu0 %v202
    %264 = vmatpush.msra.mxu0 %v198
    %265 = vmatpush.msra.mxu0 %v194
    %266 = vmatpush.msra.mxu0 %v190
    %267 = vmatpush.msra.mxu0 %v186
    %268 = vmatpush.msra.mxu0 %v182
    %269 = vmatpush.msra.mxu0 %v178
    %270 = vmatpush.msra.mxu0 %v174
    %271 = vmatpush.msra.mxu0 %v170
    %272 = vmatpush.msra.mxu0 %v166
    %273 = vmatpush.msra.mxu0 %v162
    %274 = vmatpush.msra.mxu0 %v158
    %275 = vmatpush.msra.mxu0 %v154
    %276 = vmatpush.msra.mxu0 %v150
    %277 = vmatpush.msra.mxu0 %v146
    %278 = vmatpush.msra.mxu0 %v142
    %279 = vmatmul.f32.gmra.mxu0 0.0
    %v280 = vpop.f32.mrf.mxu0
    %v281 = vadd.f32 0.0, %v280
    %282 = vdwg.mxu0
    %v283 = vadd.f32 %v77, %v221
    %v284 = vadd.f32 %v97, %v241
    %v285 = vadd.f32 %v117, %v261
    %v286 = vadd.f32 %v137, %v281
    %v287 = vxor.u32 %v283, 2147483648
    %v288 = vmul.f32 %v287, 1.442695
    %v289 = vpow.pop %v288
    %v290 = vadd.f32 %v289, 1.0
    %v291 = vrcp.pop %v290
    %v292 = vmul.f32 %v290, %v291
    %v293 = vsub.f32 1.0, %v292
    %v294 = vmul.f32 %v291, %v293
    %v295 = vadd.f32 %v291, %v294
    %vm296 = vweird.f32 %v290
    %vm297 = vweird.f32 %v291
    %vm298 = vmor %vm296, %vm297
    %v299 = vsel %vm298, %v291, %v295
    %v300 = vand.u32 2147483647, %v290
    %vm301 = vcmp.eq.f32.partialorder %v300, 8.507059e+37
    %v302 = vand.u32 %v290, 2147483648
    %v303 = vor.u32 1.1754944e-38, %v302
    %v304 = vsel %vm301, %v303, %v299
    %v305 = vmul.f32 1.0, %v304
    %v306 = vxor.u32 %v284, 2147483648
    %v307 = vmul.f32 %v306, 1.442695
    %v308 = vpow.pop %v307
    %v309 = vadd.f32 %v308, 1.0
    %v310 = vrcp.pop %v309
    %v311 = vmul.f32 %v309, %v310
    %v312 = vsub.f32 1.0, %v311
    %v313 = vmul.f32 %v310, %v312
    %v314 = vadd.f32 %v310, %v313
    %vm315 = vweird.f32 %v309
    %vm316 = vweird.f32 %v310
    %vm317 = vmor %vm315, %vm316
    %v318 = vsel %vm317, %v310, %v314
    %v319 = vand.u32 2147483647, %v309
    %vm320 = vcmp.eq.f32.partialorder %v319, 8.507059e+37
    %v321 = vand.u32 %v309, 2147483648
    %v322 = vor.u32 1.1754944e-38, %v321
    %v323 = vsel %vm320, %v322, %v318
    %v324 = vmul.f32 1.0, %v323
    %v325 = vtanh.pop %v285
    %v326 = vxor.u32 %v286, 2147483648
    %v327 = vmul.f32 %v326, 1.442695
    %v328 = vpow.pop %v327
    %v329 = vadd.f32 %v328, 1.0
    %v330 = vrcp.pop %v329
    %v331 = vmul.f32 %v329, %v330
    %v332 = vsub.f32 1.0, %v331
    %v333 = vmul.f32 %v330, %v332
    %v334 = vadd.f32 %v330, %v333
    %vm335 = vweird.f32 %v329
    %vm336 = vweird.f32 %v330
    %vm337 = vmor %vm335, %vm336
    %v338 = vsel %vm337, %v330, %v334
    %v339 = vand.u32 2147483647, %v329
    %vm340 = vcmp.eq.f32.partialorder %v339, 8.507059e+37
    %v341 = vand.u32 %v329, 2147483648
    %v342 = vor.u32 1.1754944e-38, %v341
    %v343 = vsel %vm340, %v342, %v338
    %v344 = vmul.f32 1.0, %v343
    %v345 = vmul.f32 %v324, 0.0
    %v346 = vmul.f32 %v305, %v325
    %v347 = vadd.f32 %v345, %v346
    %v348 = vtanh.pop %v347
    %v349 = vmul.f32 %v344, %v348
    %350 = vmatpush.msra.mxu0 %v199
    %351 = vmatpush.msra.mxu0 %v195
    %352 = vmatpush.msra.mxu0 %v191
    %353 = vmatpush.msra.mxu0 %v187
    %354 = vmatpush.msra.mxu0 %v183
    %355 = vmatpush.msra.mxu0 %v179
    %356 = vmatpush.msra.mxu0 %v175
    %357 = vmatpush.msra.mxu0 %v171
    %358 = vmatpush.msra.mxu0 %v167
    %359 = vmatpush.msra.mxu0 %v163
    %360 = vmatpush.msra.mxu0 %v159
    %361 = vmatpush.msra.mxu0 %v155
    %362 = vmatpush.msra.mxu0 %v151
    %363 = vmatpush.msra.mxu0 %v147
    %364 = vmatpush.msra.mxu0 %v143
    %365 = vmatpush.msra.mxu0 %v139
    %366 = vmatmul.f32.gmra.mxu0 %v349
    %v367 = vpop.f32.mrf.mxu0
    %v368 = vadd.f32 0.0, %v367
    %369 = vdwg.mxu0
    %370 = vmatpush.msra.mxu0 %v200
    %371 = vmatpush.msra.mxu0 %v196
    %372 = vmatpush.msra.mxu0 %v192
    %373 = vmatpush.msra.mxu0 %v188
    %374 = vmatpush.msra.mxu0 %v184
    %375 = vmatpush.msra.mxu0 %v180
    %376 = vmatpush.msra.mxu0 %v176
    %377 = vmatpush.msra.mxu0 %v172
    %378 = vmatpush.msra.mxu0 %v168
    %379 = vmatpush.msra.mxu0 %v164
    %380 = vmatpush.msra.mxu0 %v160
    %381 = vmatpush.msra.mxu0 %v156
    %382 = vmatpush.msra.mxu0 %v152
    %383 = vmatpush.msra.mxu0 %v148
    %384 = vmatpush.msra.mxu0 %v144
    %385 = vmatpush.msra.mxu0 %v140
    %386 = vmatmul.f32.gmra.mxu0 %v349
    %v387 = vpop.f32.mrf.mxu0
    %v388 = vadd.f32 0.0, %v387
    %389 = vdwg.mxu0
    %390 = vmatpush.msra.mxu0 %v201
    %391 = vmatpush.msra.mxu0 %v197
    %392 = vmatpush.msra.mxu0 %v193
    %393 = vmatpush.msra.mxu0 %v189
    %394 = vmatpush.msra.mxu0 %v185
    %395 = vmatpush.msra.mxu0 %v181
    %396 = vmatpush.msra.mxu0 %v177
    %397 = vmatpush.msra.mxu0 %v173
    %398 = vmatpush.msra.mxu0 %v169
    %399 = vmatpush.msra.mxu0 %v165
    %400 = vmatpush.msra.mxu0 %v161
    %401 = vmatpush.msra.mxu0 %v157
    %402 = vmatpush.msra.mxu0 %v153
    %403 = vmatpush.msra.mxu0 %v149
    %404 = vmatpush.msra.mxu0 %v145
    %405 = vmatpush.msra.mxu0 %v141
    %406 = vmatmul.f32.gmra.mxu0 %v349
    %v407 = vpop.f32.mrf.mxu0
    %v408 = vadd.f32 0.0, %v407
    %409 = vdwg.mxu0
    %410 = vmatpush.msra.mxu0 %v202
    %411 = vmatpush.msra.mxu0 %v198
    %412 = vmatpush.msra.mxu0 %v194
    %413 = vmatpush.msra.mxu0 %v190
    %414 = vmatpush.msra.mxu0 %v186
    %415 = vmatpush.msra.mxu0 %v182
    %416 = vmatpush.msra.mxu0 %v178
    %417 = vmatpush.msra.mxu0 %v174
    %418 = vmatpush.msra.mxu0 %v170
    %419 = vmatpush.msra.mxu0 %v166
    %420 = vmatpush.msra.mxu0 %v162
    %421 = vmatpush.msra.mxu0 %v158
    %422 = vmatpush.msra.mxu0 %v154
    %423 = vmatpush.msra.mxu0 %v150
    %424 = vmatpush.msra.mxu0 %v146
    %425 = vmatpush.msra.mxu0 %v142
    %426 = vmatmul.f32.gmra.mxu0 %v349
    %v427 = vpop.f32.mrf.mxu0
    %v428 = vadd.f32 0.0, %v427
    %429 = vdwg.mxu0
    %v434 = vrot.slane %v368, 7
    %v435 = vrot.slane %v388, 7
    %v436 = vrot.slane %v408, 7
    %v437 = vrot.slane %v428, 7
    %v442 = vadd.f32 %v77, %v434
    %v443 = vadd.f32 %v97, %v435
    %v444 = vadd.f32 %v117, %v436
    %v445 = vadd.f32 %v137, %v437
    %v446 = vxor.u32 %v442, 2147483648
    %v447 = vmul.f32 %v446, 1.442695
    %v448 = vpow.pop %v447
    %v449 = vadd.f32 %v448, 1.0
    %v450 = vrcp.pop %v449
    %v451 = vmul.f32 %v449, %v450
    %v452 = vsub.f32 1.0, %v451
    %v453 = vmul.f32 %v450, %v452
    %v454 = vadd.f32 %v450, %v453
    %vm455 = vweird.f32 %v449
    %vm456 = vweird.f32 %v450
    %vm457 = vmor %vm455, %vm456
    %v458 = vsel %vm457, %v450, %v454
    %v459 = vand.u32 2147483647, %v449
    %vm460 = vcmp.eq.f32.partialorder %v459, 8.507059e+37
    %v461 = vand.u32 %v449, 2147483648
    %v462 = vor.u32 1.1754944e-38, %v461
    %v463 = vsel %vm460, %v462, %v458
    %v464 = vmul.f32 1.0, %v463
    %v465 = vxor.u32 %v443, 2147483648
    %v466 = vmul.f32 %v465, 1.442695
    %v467 = vpow.pop %v466
    %v468 = vadd.f32 %v467, 1.0
    %v469 = vrcp.pop %v468
    %v470 = vmul.f32 %v468, %v469
    %v471 = vsub.f32 1.0, %v470
    %v472 = vmul.f32 %v469, %v471
    %v473 = vadd.f32 %v469, %v472
    %vm474 = vweird.f32 %v468
    %vm475 = vweird.f32 %v469
    %vm476 = vmor %vm474, %vm475
    %v477 = vsel %vm476, %v469, %v473
    %v478 = vand.u32 2147483647, %v468
    %vm479 = vcmp.eq.f32.partialorder %v478, 8.507059e+37
    %v480 = vand.u32 %v468, 2147483648
    %v481 = vor.u32 1.1754944e-38, %v480
    %v482 = vsel %vm479, %v481, %v477
    %v483 = vmul.f32 1.0, %v482
    %v484 = vtanh.pop %v444
    %v485 = vxor.u32 %v445, 2147483648
    %v486 = vmul.f32 %v485, 1.442695
    %v487 = vpow.pop %v486
    %v488 = vadd.f32 %v487, 1.0
    %v489 = vrcp.pop %v488
    %v490 = vmul.f32 %v488, %v489
    %v491 = vsub.f32 1.0, %v490
    %v492 = vmul.f32 %v489, %v491
    %v493 = vadd.f32 %v489, %v492
    %vm494 = vweird.f32 %v488
    %vm495 = vweird.f32 %v489
    %vm496 = vmor %vm494, %vm495
    %v497 = vsel %vm496, %v489, %v493
    %v498 = vand.u32 2147483647, %v488
    %vm499 = vcmp.eq.f32.partialorder %v498, 8.507059e+37
    %v500 = vand.u32 %v488, 2147483648
    %v501 = vor.u32 1.1754944e-38, %v500
    %v502 = vsel %vm499, %v501, %v497
    %v503 = vmul.f32 1.0, %v502
    %v505 = vrot.slane %v347, 7
    %v507 = vmul.f32 %v483, %v505
    %v508 = vmul.f32 %v464, %v484
    %v509 = vadd.f32 %v507, %v508
    %v510 = vtanh.pop %v509
    %v511 = vmul.f32 %v503, %v510
    %v513 = vrot.slane %v511, 1
    %515 = vmatpush.msra.mxu0 %v199
    %516 = vmatpush.msra.mxu0 %v195
    %517 = vmatpush.msra.mxu0 %v191
    %518 = vmatpush.msra.mxu0 %v187
    %519 = vmatpush.msra.mxu0 %v183
    %520 = vmatpush.msra.mxu0 %v179
    %521 = vmatpush.msra.mxu0 %v175
    %522 = vmatpush.msra.mxu0 %v171
    %523 = vmatpush.msra.mxu0 %v167
    %524 = vmatpush.msra.mxu0 %v163
    %525 = vmatpush.msra.mxu0 %v159
    %526 = vmatpush.msra.mxu0 %v155
    %527 = vmatpush.msra.mxu0 %v151
    %528 = vmatpush.msra.mxu0 %v147
    %529 = vmatpush.msra.mxu0 %v143
    %530 = vmatpush.msra.mxu0 %v139
    %531 = vmatmul.f32.gmra.mxu0 %v513
    %v532 = vpop.f32.mrf.mxu0
    %v533 = vadd.f32 0.0, %v532
    %534 = vdwg.mxu0
    %535 = vmatpush.msra.mxu0 %v200
    %536 = vmatpush.msra.mxu0 %v196
    %537 = vmatpush.msra.mxu0 %v192
    %538 = vmatpush.msra.mxu0 %v188
    %539 = vmatpush.msra.mxu0 %v184
    %540 = vmatpush.msra.mxu0 %v180
    %541 = vmatpush.msra.mxu0 %v176
    %542 = vmatpush.msra.mxu0 %v172
    %543 = vmatpush.msra.mxu0 %v168
    %544 = vmatpush.msra.mxu0 %v164
    %545 = vmatpush.msra.mxu0 %v160
    %546 = vmatpush.msra.mxu0 %v156
    %547 = vmatpush.msra.mxu0 %v152
    %548 = vmatpush.msra.mxu0 %v148
    %549 = vmatpush.msra.mxu0 %v144
    %550 = vmatpush.msra.mxu0 %v140
    %551 = vmatmul.f32.gmra.mxu0 %v513
    %v552 = vpop.f32.mrf.mxu0
    %v553 = vadd.f32 0.0, %v552
    %554 = vdwg.mxu0
    %555 = vmatpush.msra.mxu0 %v201
    %556 = vmatpush.msra.mxu0 %v197
    %557 = vmatpush.msra.mxu0 %v193
    %558 = vmatpush.msra.mxu0 %v189
    %559 = vmatpush.msra.mxu0 %v185
    %560 = vmatpush.msra.mxu0 %v181
    %561 = vmatpush.msra.mxu0 %v177
    %562 = vmatpush.msra.mxu0 %v173
    %563 = vmatpush.msra.mxu0 %v169
    %564 = vmatpush.msra.mxu0 %v165
    %565 = vmatpush.msra.mxu0 %v161
    %566 = vmatpush.msra.mxu0 %v157
    %567 = vmatpush.msra.mxu0 %v153
    %568 = vmatpush.msra.mxu0 %v149
    %569 = vmatpush.msra.mxu0 %v145
    %570 = vmatpush.msra.mxu0 %v141
    %571 = vmatmul.f32.gmra.mxu0 %v513
    %v572 = vpop.f32.mrf.mxu0
    %v573 = vadd.f32 0.0, %v572
    %574 = vdwg.mxu0
    %575 = vmatpush.msra.mxu0 %v202
    %576 = vmatpush.msra.mxu0 %v198
    %577 = vmatpush.msra.mxu0 %v194
    %578 = vmatpush.msra.mxu0 %v190
    %579 = vmatpush.msra.mxu0 %v186
    %580 = vmatpush.msra.mxu0 %v182
    %581 = vmatpush.msra.mxu0 %v178
    %582 = vmatpush.msra.mxu0 %v174
    %583 = vmatpush.msra.mxu0 %v170
    %584 = vmatpush.msra.mxu0 %v166
    %585 = vmatpush.msra.mxu0 %v162
    %586 = vmatpush.msra.mxu0 %v158
    %587 = vmatpush.msra.mxu0 %v154
    %588 = vmatpush.msra.mxu0 %v150
    %589 = vmatpush.msra.mxu0 %v146
    %590 = vmatpush.msra.mxu0 %v142
    %591 = vmatmul.f32.gmra.mxu0 %v513
    %v592 = vpop.f32.mrf.mxu0
    %v593 = vadd.f32 0.0, %v592
    %594 = vdwg.mxu0
    %v599 = vrot.slane %v533, 6
    %v600 = vrot.slane %v553, 6
    %v601 = vrot.slane %v573, 6
    %v602 = vrot.slane %v593, 6
    %v607 = vadd.f32 %v77, %v599
    %v608 = vadd.f32 %v97, %v600
    %v609 = vadd.f32 %v117, %v601
    %v610 = vadd.f32 %v137, %v602
    %v611 = vxor.u32 %v607, 2147483648
    %v612 = vmul.f32 %v611, 1.442695
    %v613 = vpow.pop %v612
    %v614 = vadd.f32 %v613, 1.0
    %v615 = vrcp.pop %v614
    %v616 = vmul.f32 %v614, %v615
    %v617 = vsub.f32 1.0, %v616
    %v618 = vmul.f32 %v615, %v617
    %v619 = vadd.f32 %v615, %v618
    %vm620 = vweird.f32 %v614
    %vm621 = vweird.f32 %v615
    %vm622 = vmor %vm620, %vm621
    %v623 = vsel %vm622, %v615, %v619
    %v624 = vand.u32 2147483647, %v614
    %vm625 = vcmp.eq.f32.partialorder %v624, 8.507059e+37
    %v626 = vand.u32 %v614, 2147483648
    %v627 = vor.u32 1.1754944e-38, %v626
    %v628 = vsel %vm625, %v627, %v623
    %v629 = vmul.f32 1.0, %v628
    %v630 = vxor.u32 %v608, 2147483648
    %v631 = vmul.f32 %v630, 1.442695
    %v632 = vpow.pop %v631
    %v633 = vadd.f32 %v632, 1.0
    %v634 = vrcp.pop %v633
    %v635 = vmul.f32 %v633, %v634
    %v636 = vsub.f32 1.0, %v635
    %v637 = vmul.f32 %v634, %v636
    %v638 = vadd.f32 %v634, %v637
    %vm639 = vweird.f32 %v633
    %vm640 = vweird.f32 %v634
    %vm641 = vmor %vm639, %vm640
    %v642 = vsel %vm641, %v634, %v638
    %v643 = vand.u32 2147483647, %v633
    %vm644 = vcmp.eq.f32.partialorder %v643, 8.507059e+37
    %v645 = vand.u32 %v633, 2147483648
    %v646 = vor.u32 1.1754944e-38, %v645
    %v647 = vsel %vm644, %v646, %v642
    %v648 = vmul.f32 1.0, %v647
    %v649 = vtanh.pop %v609
    %v650 = vxor.u32 %v610, 2147483648
    %v651 = vmul.f32 %v650, 1.442695
    %v652 = vpow.pop %v651
    %v653 = vadd.f32 %v652, 1.0
    %v654 = vrcp.pop %v653
    %v655 = vmul.f32 %v653, %v654
    %v656 = vsub.f32 1.0, %v655
    %v657 = vmul.f32 %v654, %v656
    %v658 = vadd.f32 %v654, %v657
    %vm659 = vweird.f32 %v653
    %vm660 = vweird.f32 %v654
    %vm661 = vmor %vm659, %vm660
    %v662 = vsel %vm661, %v654, %v658
    %v663 = vand.u32 2147483647, %v653
    %vm664 = vcmp.eq.f32.partialorder %v663, 8.507059e+37
    %v665 = vand.u32 %v653, 2147483648
    %v666 = vor.u32 1.1754944e-38, %v665
    %v667 = vsel %vm664, %v666, %v662
    %v668 = vmul.f32 1.0, %v667
    %v670 = vrot.slane %v509, 7
    %v672 = vmul.f32 %v648, %v670
    %v673 = vmul.f32 %v629, %v649
    %v674 = vadd.f32 %v672, %v673
    %v675 = vtanh.pop %v674
    %v676 = vmul.f32 %v668, %v675
    %v678 = vrot.slane %v676, 2
    %680 = vmatpush.msra.mxu0 %v199
    %681 = vmatpush.msra.mxu0 %v195
    %682 = vmatpush.msra.mxu0 %v191
    %683 = vmatpush.msra.mxu0 %v187
    %684 = vmatpush.msra.mxu0 %v183
    %685 = vmatpush.msra.mxu0 %v179
    %686 = vmatpush.msra.mxu0 %v175
    %687 = vmatpush.msra.mxu0 %v171
    %688 = vmatpush.msra.mxu0 %v167
    %689 = vmatpush.msra.mxu0 %v163
    %690 = vmatpush.msra.mxu0 %v159
    %691 = vmatpush.msra.mxu0 %v155
    %692 = vmatpush.msra.mxu0 %v151
    %693 = vmatpush.msra.mxu0 %v147
    %694 = vmatpush.msra.mxu0 %v143
    %695 = vmatpush.msra.mxu0 %v139
    %696 = vmatmul.f32.gmra.mxu0 %v678
    %v697 = vpop.f32.mrf.mxu0
    %v698 = vadd.f32 0.0, %v697
    %699 = vdwg.mxu0
    %700 = vmatpush.msra.mxu0 %v200
    %701 = vmatpush.msra.mxu0 %v196
    %702 = vmatpush.msra.mxu0 %v192
    %703 = vmatpush.msra.mxu0 %v188
    %704 = vmatpush.msra.mxu0 %v184
    %705 = vmatpush.msra.mxu0 %v180
    %706 = vmatpush.msra.mxu0 %v176
    %707 = vmatpush.msra.mxu0 %v172
    %708 = vmatpush.msra.mxu0 %v168
    %709 = vmatpush.msra.mxu0 %v164
    %710 = vmatpush.msra.mxu0 %v160
    %711 = vmatpush.msra.mxu0 %v156
    %712 = vmatpush.msra.mxu0 %v152
    %713 = vmatpush.msra.mxu0 %v148
    %714 = vmatpush.msra.mxu0 %v144
    %715 = vmatpush.msra.mxu0 %v140
    %716 = vmatmul.f32.gmra.mxu0 %v678
    %v717 = vpop.f32.mrf.mxu0
    %v718 = vadd.f32 0.0, %v717
    %719 = vdwg.mxu0
    %720 = vmatpush.msra.mxu0 %v201
    %721 = vmatpush.msra.mxu0 %v197
    %722 = vmatpush.msra.mxu0 %v193
    %723 = vmatpush.msra.mxu0 %v189
    %724 = vmatpush.msra.mxu0 %v185
    %725 = vmatpush.msra.mxu0 %v181
    %726 = vmatpush.msra.mxu0 %v177
    %727 = vmatpush.msra.mxu0 %v173
    %728 = vmatpush.msra.mxu0 %v169
    %729 = vmatpush.msra.mxu0 %v165
    %730 = vmatpush.msra.mxu0 %v161
    %731 = vmatpush.msra.mxu0 %v157
    %732 = vmatpush.msra.mxu0 %v153
    %733 = vmatpush.msra.mxu0 %v149
    %734 = vmatpush.msra.mxu0 %v145
    %735 = vmatpush.msra.mxu0 %v141
    %736 = vmatmul.f32.gmra.mxu0 %v678
    %v737 = vpop.f32.mrf.mxu0
    %v738 = vadd.f32 0.0, %v737
    %739 = vdwg.mxu0
    %740 = vmatpush.msra.mxu0 %v202
    %741 = vmatpush.msra.mxu0 %v198
    %742 = vmatpush.msra.mxu0 %v194
    %743 = vmatpush.msra.mxu0 %v190
    %744 = vmatpush.msra.mxu0 %v186
    %745 = vmatpush.msra.mxu0 %v182
    %746 = vmatpush.msra.mxu0 %v178
    %747 = vmatpush.msra.mxu0 %v174
    %748 = vmatpush.msra.mxu0 %v170
    %749 = vmatpush.msra.mxu0 %v166
    %750 = vmatpush.msra.mxu0 %v162
    %751 = vmatpush.msra.mxu0 %v158
    %752 = vmatpush.msra.mxu0 %v154
    %753 = vmatpush.msra.mxu0 %v150
    %754 = vmatpush.msra.mxu0 %v146
    %755 = vmatpush.msra.mxu0 %v142
    %756 = vmatmul.f32.gmra.mxu0 %v678
    %v757 = vpop.f32.mrf.mxu0
    %v758 = vadd.f32 0.0, %v757
    %759 = vdwg.mxu0
    %v764 = vrot.slane %v698, 5
    %v765 = vrot.slane %v718, 5
    %v766 = vrot.slane %v738, 5
    %v767 = vrot.slane %v758, 5
    %v772 = vadd.f32 %v77, %v764
    %v773 = vadd.f32 %v97, %v765
    %v774 = vadd.f32 %v117, %v766
    %v775 = vadd.f32 %v137, %v767
    %v776 = vxor.u32 %v772, 2147483648
    %v777 = vmul.f32 %v776, 1.442695
    %v778 = vpow.pop %v777
    %v779 = vadd.f32 %v778, 1.0
    %v780 = vrcp.pop %v779
    %v781 = vmul.f32 %v779, %v780
    %v782 = vsub.f32 1.0, %v781
    %v783 = vmul.f32 %v780, %v782
    %v784 = vadd.f32 %v780, %v783
    %vm785 = vweird.f32 %v779
    %vm786 = vweird.f32 %v780
    %vm787 = vmor %vm785, %vm786
    %v788 = vsel %vm787, %v780, %v784
    %v789 = vand.u32 2147483647, %v779
    %vm790 = vcmp.eq.f32.partialorder %v789, 8.507059e+37
    %v791 = vand.u32 %v779, 2147483648
    %v792 = vor.u32 1.1754944e-38, %v791
    %v793 = vsel %vm790, %v792, %v788
    %v794 = vmul.f32 1.0, %v793
    %v795 = vxor.u32 %v773, 2147483648
    %v796 = vmul.f32 %v795, 1.442695
    %v797 = vpow.pop %v796
    %v798 = vadd.f32 %v797, 1.0
    %v799 = vrcp.pop %v798
    %v800 = vmul.f32 %v798, %v799
    %v801 = vsub.f32 1.0, %v800
    %v802 = vmul.f32 %v799, %v801
    %v803 = vadd.f32 %v799, %v802
    %vm804 = vweird.f32 %v798
    %vm805 = vweird.f32 %v799
    %vm806 = vmor %vm804, %vm805
    %v807 = vsel %vm806, %v799, %v803
    %v808 = vand.u32 2147483647, %v798
    %vm809 = vcmp.eq.f32.partialorder %v808, 8.507059e+37
    %v810 = vand.u32 %v798, 2147483648
    %v811 = vor.u32 1.1754944e-38, %v810
    %v812 = vsel %vm809, %v811, %v807
    %v813 = vmul.f32 1.0, %v812
    %v814 = vtanh.pop %v774
    %v815 = vxor.u32 %v775, 2147483648
    %v816 = vmul.f32 %v815, 1.442695
    %v817 = vpow.pop %v816
    %v818 = vadd.f32 %v817, 1.0
    %v819 = vrcp.pop %v818
    %v820 = vmul.f32 %v818, %v819
    %v821 = vsub.f32 1.0, %v820
    %v822 = vmul.f32 %v819, %v821
    %v823 = vadd.f32 %v819, %v822
    %vm824 = vweird.f32 %v818
    %vm825 = vweird.f32 %v819
    %vm826 = vmor %vm824, %vm825
    %v827 = vsel %vm826, %v819, %v823
    %v828 = vand.u32 2147483647, %v818
    %vm829 = vcmp.eq.f32.partialorder %v828, 8.507059e+37
    %v830 = vand.u32 %v818, 2147483648
    %v831 = vor.u32 1.1754944e-38, %v830
    %v832 = vsel %vm829, %v831, %v827
    %v833 = vmul.f32 1.0, %v832
    %v835 = vrot.slane %v674, 7
    %v837 = vmul.f32 %v813, %v835
    %v838 = vmul.f32 %v794, %v814
    %v839 = vadd.f32 %v837, %v838
    %v840 = vtanh.pop %v839
    %v841 = vmul.f32 %v833, %v840
    %v843 = vrot.slane %v841, 3
    %845 = vmatpush.msra.mxu0 %v199
    %846 = vmatpush.msra.mxu0 %v195
    %847 = vmatpush.msra.mxu0 %v191
    %848 = vmatpush.msra.mxu0 %v187
    %849 = vmatpush.msra.mxu0 %v183
    %850 = vmatpush.msra.mxu0 %v179
    %851 = vmatpush.msra.mxu0 %v175
    %852 = vmatpush.msra.mxu0 %v171
    %853 = vmatpush.msra.mxu0 %v167
    %854 = vmatpush.msra.mxu0 %v163
    %855 = vmatpush.msra.mxu0 %v159
    %856 = vmatpush.msra.mxu0 %v155
    %857 = vmatpush.msra.mxu0 %v151
    %858 = vmatpush.msra.mxu0 %v147
    %859 = vmatpush.msra.mxu0 %v143
    %860 = vmatpush.msra.mxu0 %v139
    %861 = vmatmul.f32.gmra.mxu0 %v843
    %v862 = vpop.f32.mrf.mxu0
    %v863 = vadd.f32 0.0, %v862
    %864 = vdwg.mxu0
    %865 = vmatpush.msra.mxu0 %v200
    %866 = vmatpush.msra.mxu0 %v196
    %867 = vmatpush.msra.mxu0 %v192
    %868 = vmatpush.msra.mxu0 %v188
    %869 = vmatpush.msra.mxu0 %v184
    %870 = vmatpush.msra.mxu0 %v180
    %871 = vmatpush.msra.mxu0 %v176
    %872 = vmatpush.msra.mxu0 %v172
    %873 = vmatpush.msra.mxu0 %v168
    %874 = vmatpush.msra.mxu0 %v164
    %875 = vmatpush.msra.mxu0 %v160
    %876 = vmatpush.msra.mxu0 %v156
    %877 = vmatpush.msra.mxu0 %v152
    %878 = vmatpush.msra.mxu0 %v148
    %879 = vmatpush.msra.mxu0 %v144
    %880 = vmatpush.msra.mxu0 %v140
    %881 = vmatmul.f32.gmra.mxu0 %v843
    %v882 = vpop.f32.mrf.mxu0
    %v883 = vadd.f32 0.0, %v882
    %884 = vdwg.mxu0
    %885 = vmatpush.msra.mxu0 %v201
    %886 = vmatpush.msra.mxu0 %v197
    %887 = vmatpush.msra.mxu0 %v193
    %888 = vmatpush.msra.mxu0 %v189
    %889 = vmatpush.msra.mxu0 %v185
    %890 = vmatpush.msra.mxu0 %v181
    %891 = vmatpush.msra.mxu0 %v177
    %892 = vmatpush.msra.mxu0 %v173
    %893 = vmatpush.msra.mxu0 %v169
    %894 = vmatpush.msra.mxu0 %v165
    %895 = vmatpush.msra.mxu0 %v161
    %896 = vmatpush.msra.mxu0 %v157
    %897 = vmatpush.msra.mxu0 %v153
    %898 = vmatpush.msra.mxu0 %v149
    %899 = vmatpush.msra.mxu0 %v145
    %900 = vmatpush.msra.mxu0 %v141
    %901 = vmatmul.f32.gmra.mxu0 %v843
    %v902 = vpop.f32.mrf.mxu0
    %v903 = vadd.f32 0.0, %v902
    %904 = vdwg.mxu0
    %905 = vmatpush.msra.mxu0 %v202
    %906 = vmatpush.msra.mxu0 %v198
    %907 = vmatpush.msra.mxu0 %v194
    %908 = vmatpush.msra.mxu0 %v190
    %909 = vmatpush.msra.mxu0 %v186
    %910 = vmatpush.msra.mxu0 %v182
    %911 = vmatpush.msra.mxu0 %v178
    %912 = vmatpush.msra.mxu0 %v174
    %913 = vmatpush.msra.mxu0 %v170
    %914 = vmatpush.msra.mxu0 %v166
    %915 = vmatpush.msra.mxu0 %v162
    %916 = vmatpush.msra.mxu0 %v158
    %917 = vmatpush.msra.mxu0 %v154
    %918 = vmatpush.msra.mxu0 %v150
    %919 = vmatpush.msra.mxu0 %v146
    %920 = vmatpush.msra.mxu0 %v142
    %921 = vmatmul.f32.gmra.mxu0 %v843
    %v922 = vpop.f32.mrf.mxu0
    %v923 = vadd.f32 0.0, %v922
    %924 = vdwg.mxu0
    %v929 = vrot.slane %v863, 4
    %v930 = vrot.slane %v883, 4
    %v931 = vrot.slane %v903, 4
    %v932 = vrot.slane %v923, 4
    %v937 = vadd.f32 %v77, %v929
    %v938 = vadd.f32 %v97, %v930
    %v939 = vadd.f32 %v117, %v931
    %v940 = vadd.f32 %v137, %v932
    %v941 = vxor.u32 %v937, 2147483648
    %v942 = vmul.f32 %v941, 1.442695
    %v943 = vpow.pop %v942
    %v944 = vadd.f32 %v943, 1.0
    %v945 = vrcp.pop %v944
    %v946 = vmul.f32 %v944, %v945
    %v947 = vsub.f32 1.0, %v946
    %v948 = vmul.f32 %v945, %v947
    %v949 = vadd.f32 %v945, %v948
    %vm950 = vweird.f32 %v944
    %vm951 = vweird.f32 %v945
    %vm952 = vmor %vm950, %vm951
    %v953 = vsel %vm952, %v945, %v949
    %v954 = vand.u32 2147483647, %v944
    %vm955 = vcmp.eq.f32.partialorder %v954, 8.507059e+37
    %v956 = vand.u32 %v944, 2147483648
    %v957 = vor.u32 1.1754944e-38, %v956
    %v958 = vsel %vm955, %v957, %v953
    %v959 = vmul.f32 1.0, %v958
    %v960 = vxor.u32 %v938, 2147483648
    %v961 = vmul.f32 %v960, 1.442695
    %v962 = vpow.pop %v961
    %v963 = vadd.f32 %v962, 1.0
    %v964 = vrcp.pop %v963
    %v965 = vmul.f32 %v963, %v964
    %v966 = vsub.f32 1.0, %v965
    %v967 = vmul.f32 %v964, %v966
    %v968 = vadd.f32 %v964, %v967
    %vm969 = vweird.f32 %v963
    %vm970 = vweird.f32 %v964
    %vm971 = vmor %vm969, %vm970
    %v972 = vsel %vm971, %v964, %v968
    %v973 = vand.u32 2147483647, %v963
    %vm974 = vcmp.eq.f32.partialorder %v973, 8.507059e+37
    %v975 = vand.u32 %v963, 2147483648
    %v976 = vor.u32 1.1754944e-38, %v975
    %v977 = vsel %vm974, %v976, %v972
    %v978 = vmul.f32 1.0, %v977
    %v979 = vtanh.pop %v939
    %v980 = vxor.u32 %v940, 2147483648
    %v981 = vmul.f32 %v980, 1.442695
    %v982 = vpow.pop %v981
    %v983 = vadd.f32 %v982, 1.0
    %v984 = vrcp.pop %v983
    %v985 = vmul.f32 %v983, %v984
    %v986 = vsub.f32 1.0, %v985
    %v987 = vmul.f32 %v984, %v986
    %v988 = vadd.f32 %v984, %v987
    %vm989 = vweird.f32 %v983
    %vm990 = vweird.f32 %v984
    %vm991 = vmor %vm989, %vm990
    %v992 = vsel %vm991, %v984, %v988
    %v993 = vand.u32 2147483647, %v983
    %vm994 = vcmp.eq.f32.partialorder %v993, 8.507059e+37
    %v995 = vand.u32 %v983, 2147483648
    %v996 = vor.u32 1.1754944e-38, %v995
    %v997 = vsel %vm994, %v996, %v992
    %v998 = vmul.f32 1.0, %v997
    %v1000 = vrot.slane %v839, 7
    %v1002 = vmul.f32 %v978, %v1000
    %v1003 = vmul.f32 %v959, %v979
    %v1004 = vadd.f32 %v1002, %v1003
    %v1005 = vtanh.pop %v1004
    %v1006 = vmul.f32 %v998, %v1005
    %v1008 = vrot.slane %v1006, 4
    %1010 = vmatpush.msra.mxu0 %v199
    %1011 = vmatpush.msra.mxu0 %v195
    %1012 = vmatpush.msra.mxu0 %v191
    %1013 = vmatpush.msra.mxu0 %v187
    %1014 = vmatpush.msra.mxu0 %v183
    %1015 = vmatpush.msra.mxu0 %v179
    %1016 = vmatpush.msra.mxu0 %v175
    %1017 = vmatpush.msra.mxu0 %v171
    %1018 = vmatpush.msra.mxu0 %v167
    %1019 = vmatpush.msra.mxu0 %v163
    %1020 = vmatpush.msra.mxu0 %v159
    %1021 = vmatpush.msra.mxu0 %v155
    %1022 = vmatpush.msra.mxu0 %v151
    %1023 = vmatpush.msra.mxu0 %v147
    %1024 = vmatpush.msra.mxu0 %v143
    %1025 = vmatpush.msra.mxu0 %v139
    %1026 = vmatmul.f32.gmra.mxu0 %v1008
    %v1027 = vpop.f32.mrf.mxu0
    %v1028 = vadd.f32 0.0, %v1027
    %1029 = vdwg.mxu0
    %1030 = vmatpush.msra.mxu0 %v200
    %1031 = vmatpush.msra.mxu0 %v196
    %1032 = vmatpush.msra.mxu0 %v192
    %1033 = vmatpush.msra.mxu0 %v188
    %1034 = vmatpush.msra.mxu0 %v184
    %1035 = vmatpush.msra.mxu0 %v180
    %1036 = vmatpush.msra.mxu0 %v176
    %1037 = vmatpush.msra.mxu0 %v172
    %1038 = vmatpush.msra.mxu0 %v168
    %1039 = vmatpush.msra.mxu0 %v164
    %1040 = vmatpush.msra.mxu0 %v160
    %1041 = vmatpush.msra.mxu0 %v156
    %1042 = vmatpush.msra.mxu0 %v152
    %1043 = vmatpush.msra.mxu0 %v148
    %1044 = vmatpush.msra.mxu0 %v144
    %1045 = vmatpush.msra.mxu0 %v140
    %1046 = vmatmul.f32.gmra.mxu0 %v1008
    %v1047 = vpop.f32.mrf.mxu0
    %v1048 = vadd.f32 0.0, %v1047
    %1049 = vdwg.mxu0
    %1050 = vmatpush.msra.mxu0 %v201
    %1051 = vmatpush.msra.mxu0 %v197
    %1052 = vmatpush.msra.mxu0 %v193
    %1053 = vmatpush.msra.mxu0 %v189
    %1054 = vmatpush.msra.mxu0 %v185
    %1055 = vmatpush.msra.mxu0 %v181
    %1056 = vmatpush.msra.mxu0 %v177
    %1057 = vmatpush.msra.mxu0 %v173
    %1058 = vmatpush.msra.mxu0 %v169
    %1059 = vmatpush.msra.mxu0 %v165
    %1060 = vmatpush.msra.mxu0 %v161
    %1061 = vmatpush.msra.mxu0 %v157
    %1062 = vmatpush.msra.mxu0 %v153
    %1063 = vmatpush.msra.mxu0 %v149
    %1064 = vmatpush.msra.mxu0 %v145
    %1065 = vmatpush.msra.mxu0 %v141
    %1066 = vmatmul.f32.gmra.mxu0 %v1008
    %v1067 = vpop.f32.mrf.mxu0
    %v1068 = vadd.f32 0.0, %v1067
    %1069 = vdwg.mxu0
    %1070 = vmatpush.msra.mxu0 %v202
    %1071 = vmatpush.msra.mxu0 %v198
    %1072 = vmatpush.msra.mxu0 %v194
    %1073 = vmatpush.msra.mxu0 %v190
    %1074 = vmatpush.msra.mxu0 %v186
    %1075 = vmatpush.msra.mxu0 %v182
    %1076 = vmatpush.msra.mxu0 %v178
    %1077 = vmatpush.msra.mxu0 %v174
    %1078 = vmatpush.msra.mxu0 %v170
    %1079 = vmatpush.msra.mxu0 %v166
    %1080 = vmatpush.msra.mxu0 %v162
    %1081 = vmatpush.msra.mxu0 %v158
    %1082 = vmatpush.msra.mxu0 %v154
    %1083 = vmatpush.msra.mxu0 %v150
    %1084 = vmatpush.msra.mxu0 %v146
    %1085 = vmatpush.msra.mxu0 %v142
    %1086 = vmatmul.f32.gmra.mxu0 %v1008
    %v1087 = vpop.f32.mrf.mxu0
    %v1088 = vadd.f32 0.0, %v1087
    %1089 = vdwg.mxu0
    %v1094 = vrot.slane %v1028, 3
    %v1095 = vrot.slane %v1048, 3
    %v1096 = vrot.slane %v1068, 3
    %v1097 = vrot.slane %v1088, 3
    %v1102 = vadd.f32 %v77, %v1094
    %v1103 = vadd.f32 %v97, %v1095
    %v1104 = vadd.f32 %v117, %v1096
    %v1105 = vadd.f32 %v137, %v1097
    %v1106 = vxor.u32 %v1102, 2147483648
    %v1107 = vmul.f32 %v1106, 1.442695
    %v1108 = vpow.pop %v1107
    %v1109 = vadd.f32 %v1108, 1.0
    %v1110 = vrcp.pop %v1109
    %v1111 = vmul.f32 %v1109, %v1110
    %v1112 = vsub.f32 1.0, %v1111
    %v1113 = vmul.f32 %v1110, %v1112
    %v1114 = vadd.f32 %v1110, %v1113
    %vm1115 = vweird.f32 %v1109
    %vm1116 = vweird.f32 %v1110
    %vm1117 = vmor %vm1115, %vm1116
    %v1118 = vsel %vm1117, %v1110, %v1114
    %v1119 = vand.u32 2147483647, %v1109
    %vm1120 = vcmp.eq.f32.partialorder %v1119, 8.507059e+37
    %v1121 = vand.u32 %v1109, 2147483648
    %v1122 = vor.u32 1.1754944e-38, %v1121
    %v1123 = vsel %vm1120, %v1122, %v1118
    %v1124 = vmul.f32 1.0, %v1123
    %v1125 = vxor.u32 %v1103, 2147483648
    %v1126 = vmul.f32 %v1125, 1.442695
    %v1127 = vpow.pop %v1126
    %v1128 = vadd.f32 %v1127, 1.0
    %v1129 = vrcp.pop %v1128
    %v1130 = vmul.f32 %v1128, %v1129
    %v1131 = vsub.f32 1.0, %v1130
    %v1132 = vmul.f32 %v1129, %v1131
    %v1133 = vadd.f32 %v1129, %v1132
    %vm1134 = vweird.f32 %v1128
    %vm1135 = vweird.f32 %v1129
    %vm1136 = vmor %vm1134, %vm1135
    %v1137 = vsel %vm1136, %v1129, %v1133
    %v1138 = vand.u32 2147483647, %v1128
    %vm1139 = vcmp.eq.f32.partialorder %v1138, 8.507059e+37
    %v1140 = vand.u32 %v1128, 2147483648
    %v1141 = vor.u32 1.1754944e-38, %v1140
    %v1142 = vsel %vm1139, %v1141, %v1137
    %v1143 = vmul.f32 1.0, %v1142
    %v1144 = vtanh.pop %v1104
    %v1145 = vxor.u32 %v1105, 2147483648
    %v1146 = vmul.f32 %v1145, 1.442695
    %v1147 = vpow.pop %v1146
    %v1148 = vadd.f32 %v1147, 1.0
    %v1149 = vrcp.pop %v1148
    %v1150 = vmul.f32 %v1148, %v1149
    %v1151 = vsub.f32 1.0, %v1150
    %v1152 = vmul.f32 %v1149, %v1151
    %v1153 = vadd.f32 %v1149, %v1152
    %vm1154 = vweird.f32 %v1148
    %vm1155 = vweird.f32 %v1149
    %vm1156 = vmor %vm1154, %vm1155
    %v1157 = vsel %vm1156, %v1149, %v1153
    %v1158 = vand.u32 2147483647, %v1148
    %vm1159 = vcmp.eq.f32.partialorder %v1158, 8.507059e+37
    %v1160 = vand.u32 %v1148, 2147483648
    %v1161 = vor.u32 1.1754944e-38, %v1160
    %v1162 = vsel %vm1159, %v1161, %v1157
    %v1163 = vmul.f32 1.0, %v1162
    %v1165 = vrot.slane %v1004, 7
    %v1167 = vmul.f32 %v1143, %v1165
    %v1168 = vmul.f32 %v1124, %v1144
    %v1169 = vadd.f32 %v1167, %v1168
    %v1170 = vtanh.pop %v1169
    %v1171 = vmul.f32 %v1163, %v1170
    %v1173 = vrot.slane %v1171, 5
    %1175 = vmatpush.msra.mxu0 %v199
    %1176 = vmatpush.msra.mxu0 %v195
    %1177 = vmatpush.msra.mxu0 %v191
    %1178 = vmatpush.msra.mxu0 %v187
    %1179 = vmatpush.msra.mxu0 %v183
    %1180 = vmatpush.msra.mxu0 %v179
    %1181 = vmatpush.msra.mxu0 %v175
    %1182 = vmatpush.msra.mxu0 %v171
    %1183 = vmatpush.msra.mxu0 %v167
    %1184 = vmatpush.msra.mxu0 %v163
    %1185 = vmatpush.msra.mxu0 %v159
    %1186 = vmatpush.msra.mxu0 %v155
    %1187 = vmatpush.msra.mxu0 %v151
    %1188 = vmatpush.msra.mxu0 %v147
    %1189 = vmatpush.msra.mxu0 %v143
    %1190 = vmatpush.msra.mxu0 %v139
    %1191 = vmatmul.f32.gmra.mxu0 %v1173
    %v1192 = vpop.f32.mrf.mxu0
    %v1193 = vadd.f32 0.0, %v1192
    %1194 = vdwg.mxu0
    %1195 = vmatpush.msra.mxu0 %v200
    %1196 = vmatpush.msra.mxu0 %v196
    %1197 = vmatpush.msra.mxu0 %v192
    %1198 = vmatpush.msra.mxu0 %v188
    %1199 = vmatpush.msra.mxu0 %v184
    %1200 = vmatpush.msra.mxu0 %v180
    %1201 = vmatpush.msra.mxu0 %v176
    %1202 = vmatpush.msra.mxu0 %v172
    %1203 = vmatpush.msra.mxu0 %v168
    %1204 = vmatpush.msra.mxu0 %v164
    %1205 = vmatpush.msra.mxu0 %v160
    %1206 = vmatpush.msra.mxu0 %v156
    %1207 = vmatpush.msra.mxu0 %v152
    %1208 = vmatpush.msra.mxu0 %v148
    %1209 = vmatpush.msra.mxu0 %v144
    %1210 = vmatpush.msra.mxu0 %v140
    %1211 = vmatmul.f32.gmra.mxu0 %v1173
    %v1212 = vpop.f32.mrf.mxu0
    %v1213 = vadd.f32 0.0, %v1212
    %1214 = vdwg.mxu0
    %1215 = vmatpush.msra.mxu0 %v201
    %1216 = vmatpush.msra.mxu0 %v197
    %1217 = vmatpush.msra.mxu0 %v193
    %1218 = vmatpush.msra.mxu0 %v189
    %1219 = vmatpush.msra.mxu0 %v185
    %1220 = vmatpush.msra.mxu0 %v181
    %1221 = vmatpush.msra.mxu0 %v177
    %1222 = vmatpush.msra.mxu0 %v173
    %1223 = vmatpush.msra.mxu0 %v169
    %1224 = vmatpush.msra.mxu0 %v165
    %1225 = vmatpush.msra.mxu0 %v161
    %1226 = vmatpush.msra.mxu0 %v157
    %1227 = vmatpush.msra.mxu0 %v153
    %1228 = vmatpush.msra.mxu0 %v149
    %1229 = vmatpush.msra.mxu0 %v145
    %1230 = vmatpush.msra.mxu0 %v141
    %1231 = vmatmul.f32.gmra.mxu0 %v1173
    %v1232 = vpop.f32.mrf.mxu0
    %v1233 = vadd.f32 0.0, %v1232
    %1234 = vdwg.mxu0
    %1235 = vmatpush.msra.mxu0 %v202
    %1236 = vmatpush.msra.mxu0 %v198
    %1237 = vmatpush.msra.mxu0 %v194
    %1238 = vmatpush.msra.mxu0 %v190
    %1239 = vmatpush.msra.mxu0 %v186
    %1240 = vmatpush.msra.mxu0 %v182
    %1241 = vmatpush.msra.mxu0 %v178
    %1242 = vmatpush.msra.mxu0 %v174
    %1243 = vmatpush.msra.mxu0 %v170
    %1244 = vmatpush.msra.mxu0 %v166
    %1245 = vmatpush.msra.mxu0 %v162
    %1246 = vmatpush.msra.mxu0 %v158
    %1247 = vmatpush.msra.mxu0 %v154
    %1248 = vmatpush.msra.mxu0 %v150
    %1249 = vmatpush.msra.mxu0 %v146
    %1250 = vmatpush.msra.mxu0 %v142
    %1251 = vmatmul.f32.gmra.mxu0 %v1173
    %v1252 = vpop.f32.mrf.mxu0
    %v1253 = vadd.f32 0.0, %v1252
    %1254 = vdwg.mxu0
    %v1259 = vrot.slane %v1193, 2
    %v1260 = vrot.slane %v1213, 2
    %v1261 = vrot.slane %v1233, 2
    %v1262 = vrot.slane %v1253, 2
    %v1267 = vadd.f32 %v77, %v1259
    %v1268 = vadd.f32 %v97, %v1260
    %v1269 = vadd.f32 %v117, %v1261
    %v1270 = vadd.f32 %v137, %v1262
    %v1271 = vxor.u32 %v1267, 2147483648
    %v1272 = vmul.f32 %v1271, 1.442695
    %v1273 = vpow.pop %v1272
    %v1274 = vadd.f32 %v1273, 1.0
    %v1275 = vrcp.pop %v1274
    %v1276 = vmul.f32 %v1274, %v1275
    %v1277 = vsub.f32 1.0, %v1276
    %v1278 = vmul.f32 %v1275, %v1277
    %v1279 = vadd.f32 %v1275, %v1278
    %vm1280 = vweird.f32 %v1274
    %vm1281 = vweird.f32 %v1275
    %vm1282 = vmor %vm1280, %vm1281
    %v1283 = vsel %vm1282, %v1275, %v1279
    %v1284 = vand.u32 2147483647, %v1274
    %vm1285 = vcmp.eq.f32.partialorder %v1284, 8.507059e+37
    %v1286 = vand.u32 %v1274, 2147483648
    %v1287 = vor.u32 1.1754944e-38, %v1286
    %v1288 = vsel %vm1285, %v1287, %v1283
    %v1289 = vmul.f32 1.0, %v1288
    %v1290 = vxor.u32 %v1268, 2147483648
    %v1291 = vmul.f32 %v1290, 1.442695
    %v1292 = vpow.pop %v1291
    %v1293 = vadd.f32 %v1292, 1.0
    %v1294 = vrcp.pop %v1293
    %v1295 = vmul.f32 %v1293, %v1294
    %v1296 = vsub.f32 1.0, %v1295
    %v1297 = vmul.f32 %v1294, %v1296
    %v1298 = vadd.f32 %v1294, %v1297
    %vm1299 = vweird.f32 %v1293
    %vm1300 = vweird.f32 %v1294
    %vm1301 = vmor %vm1299, %vm1300
    %v1302 = vsel %vm1301, %v1294, %v1298
    %v1303 = vand.u32 2147483647, %v1293
    %vm1304 = vcmp.eq.f32.partialorder %v1303, 8.507059e+37
    %v1305 = vand.u32 %v1293, 2147483648
    %v1306 = vor.u32 1.1754944e-38, %v1305
    %v1307 = vsel %vm1304, %v1306, %v1302
    %v1308 = vmul.f32 1.0, %v1307
    %v1309 = vtanh.pop %v1269
    %v1310 = vxor.u32 %v1270, 2147483648
    %v1311 = vmul.f32 %v1310, 1.442695
    %v1312 = vpow.pop %v1311
    %v1313 = vadd.f32 %v1312, 1.0
    %v1314 = vrcp.pop %v1313
    %v1315 = vmul.f32 %v1313, %v1314
    %v1316 = vsub.f32 1.0, %v1315
    %v1317 = vmul.f32 %v1314, %v1316
    %v1318 = vadd.f32 %v1314, %v1317
    %vm1319 = vweird.f32 %v1313
    %vm1320 = vweird.f32 %v1314
    %vm1321 = vmor %vm1319, %vm1320
    %v1322 = vsel %vm1321, %v1314, %v1318
    %v1323 = vand.u32 2147483647, %v1313
    %vm1324 = vcmp.eq.f32.partialorder %v1323, 8.507059e+37
    %v1325 = vand.u32 %v1313, 2147483648
    %v1326 = vor.u32 1.1754944e-38, %v1325
    %v1327 = vsel %vm1324, %v1326, %v1322
    %v1328 = vmul.f32 1.0, %v1327
    %v1330 = vrot.slane %v1169, 7
    %v1332 = vmul.f32 %v1308, %v1330
    %v1333 = vmul.f32 %v1289, %v1309
    %v1334 = vadd.f32 %v1332, %v1333
    %v1335 = vtanh.pop %v1334
    %v1336 = vmul.f32 %v1328, %v1335
    %v1338 = vrot.slane %v1336, 6
    %1340 = vmatpush.msra.mxu0 %v199
    %1341 = vmatpush.msra.mxu0 %v195
    %1342 = vmatpush.msra.mxu0 %v191
    %1343 = vmatpush.msra.mxu0 %v187
    %1344 = vmatpush.msra.mxu0 %v183
    %1345 = vmatpush.msra.mxu0 %v179
    %1346 = vmatpush.msra.mxu0 %v175
    %1347 = vmatpush.msra.mxu0 %v171
    %1348 = vmatpush.msra.mxu0 %v167
    %1349 = vmatpush.msra.mxu0 %v163
    %1350 = vmatpush.msra.mxu0 %v159
    %1351 = vmatpush.msra.mxu0 %v155
    %1352 = vmatpush.msra.mxu0 %v151
    %1353 = vmatpush.msra.mxu0 %v147
    %1354 = vmatpush.msra.mxu0 %v143
    %1355 = vmatpush.msra.mxu0 %v139
    %1356 = vmatmul.f32.gmra.mxu0 %v1338
    %v1357 = vpop.f32.mrf.mxu0
    %v1358 = vadd.f32 0.0, %v1357
    %1359 = vdwg.mxu0
    %1360 = vmatpush.msra.mxu0 %v200
    %1361 = vmatpush.msra.mxu0 %v196
    %1362 = vmatpush.msra.mxu0 %v192
    %1363 = vmatpush.msra.mxu0 %v188
    %1364 = vmatpush.msra.mxu0 %v184
    %1365 = vmatpush.msra.mxu0 %v180
    %1366 = vmatpush.msra.mxu0 %v176
    %1367 = vmatpush.msra.mxu0 %v172
    %1368 = vmatpush.msra.mxu0 %v168
    %1369 = vmatpush.msra.mxu0 %v164
    %1370 = vmatpush.msra.mxu0 %v160
    %1371 = vmatpush.msra.mxu0 %v156
    %1372 = vmatpush.msra.mxu0 %v152
    %1373 = vmatpush.msra.mxu0 %v148
    %1374 = vmatpush.msra.mxu0 %v144
    %1375 = vmatpush.msra.mxu0 %v140
    %1376 = vmatmul.f32.gmra.mxu0 %v1338
    %v1377 = vpop.f32.mrf.mxu0
    %v1378 = vadd.f32 0.0, %v1377
    %1379 = vdwg.mxu0
    %1380 = vmatpush.msra.mxu0 %v201
    %1381 = vmatpush.msra.mxu0 %v197
    %1382 = vmatpush.msra.mxu0 %v193
    %1383 = vmatpush.msra.mxu0 %v189
    %1384 = vmatpush.msra.mxu0 %v185
    %1385 = vmatpush.msra.mxu0 %v181
    %1386 = vmatpush.msra.mxu0 %v177
    %1387 = vmatpush.msra.mxu0 %v173
    %1388 = vmatpush.msra.mxu0 %v169
    %1389 = vmatpush.msra.mxu0 %v165
    %1390 = vmatpush.msra.mxu0 %v161
    %1391 = vmatpush.msra.mxu0 %v157
    %1392 = vmatpush.msra.mxu0 %v153
    %1393 = vmatpush.msra.mxu0 %v149
    %1394 = vmatpush.msra.mxu0 %v145
    %1395 = vmatpush.msra.mxu0 %v141
    %1396 = vmatmul.f32.gmra.mxu0 %v1338
    %v1397 = vpop.f32.mrf.mxu0
    %v1398 = vadd.f32 0.0, %v1397
    %1399 = vdwg.mxu0
    %1400 = vmatpush.msra.mxu0 %v202
    %1401 = vmatpush.msra.mxu0 %v198
    %1402 = vmatpush.msra.mxu0 %v194
    %1403 = vmatpush.msra.mxu0 %v190
    %1404 = vmatpush.msra.mxu0 %v186
    %1405 = vmatpush.msra.mxu0 %v182
    %1406 = vmatpush.msra.mxu0 %v178
    %1407 = vmatpush.msra.mxu0 %v174
    %1408 = vmatpush.msra.mxu0 %v170
    %1409 = vmatpush.msra.mxu0 %v166
    %1410 = vmatpush.msra.mxu0 %v162
    %1411 = vmatpush.msra.mxu0 %v158
    %1412 = vmatpush.msra.mxu0 %v154
    %1413 = vmatpush.msra.mxu0 %v150
    %1414 = vmatpush.msra.mxu0 %v146
    %1415 = vmatpush.msra.mxu0 %v142
    %1416 = vmatmul.f32.gmra.mxu0 %v1338
    %v1417 = vpop.f32.mrf.mxu0
    %v1418 = vadd.f32 0.0, %v1417
    %1419 = vdwg.mxu0
    %v1424 = vrot.slane %v1358, 1
    %v1425 = vrot.slane %v1378, 1
    %v1426 = vrot.slane %v1398, 1
    %v1427 = vrot.slane %v1418, 1
    %v1432 = vadd.f32 %v77, %v1424
    %v1433 = vadd.f32 %v97, %v1425
    %v1434 = vadd.f32 %v117, %v1426
    %v1435 = vadd.f32 %v137, %v1427
    %v1436 = vxor.u32 %v1432, 2147483648
    %v1437 = vmul.f32 %v1436, 1.442695
    %v1438 = vpow.pop %v1437
    %v1439 = vadd.f32 %v1438, 1.0
    %v1440 = vrcp.pop %v1439
    %v1441 = vmul.f32 %v1439, %v1440
    %v1442 = vsub.f32 1.0, %v1441
    %v1443 = vmul.f32 %v1440, %v1442
    %v1444 = vadd.f32 %v1440, %v1443
    %vm1445 = vweird.f32 %v1439
    %vm1446 = vweird.f32 %v1440
    %vm1447 = vmor %vm1445, %vm1446
    %v1448 = vsel %vm1447, %v1440, %v1444
    %v1449 = vand.u32 2147483647, %v1439
    %vm1450 = vcmp.eq.f32.partialorder %v1449, 8.507059e+37
    %v1451 = vand.u32 %v1439, 2147483648
    %v1452 = vor.u32 1.1754944e-38, %v1451
    %v1453 = vsel %vm1450, %v1452, %v1448
    %v1454 = vmul.f32 1.0, %v1453
    %v1455 = vxor.u32 %v1433, 2147483648
    %v1456 = vmul.f32 %v1455, 1.442695
    %v1457 = vpow.pop %v1456
    %v1458 = vadd.f32 %v1457, 1.0
    %v1459 = vrcp.pop %v1458
    %v1460 = vmul.f32 %v1458, %v1459
    %v1461 = vsub.f32 1.0, %v1460
    %v1462 = vmul.f32 %v1459, %v1461
    %v1463 = vadd.f32 %v1459, %v1462
    %vm1464 = vweird.f32 %v1458
    %vm1465 = vweird.f32 %v1459
    %vm1466 = vmor %vm1464, %vm1465
    %v1467 = vsel %vm1466, %v1459, %v1463
    %v1468 = vand.u32 2147483647, %v1458
    %vm1469 = vcmp.eq.f32.partialorder %v1468, 8.507059e+37
    %v1470 = vand.u32 %v1458, 2147483648
    %v1471 = vor.u32 1.1754944e-38, %v1470
    %v1472 = vsel %vm1469, %v1471, %v1467
    %v1473 = vmul.f32 1.0, %v1472
    %v1474 = vtanh.pop %v1434
    %v1475 = vxor.u32 %v1435, 2147483648
    %v1476 = vmul.f32 %v1475, 1.442695
    %v1477 = vpow.pop %v1476
    %v1478 = vadd.f32 %v1477, 1.0
    %v1479 = vrcp.pop %v1478
    %v1480 = vmul.f32 %v1478, %v1479
    %v1481 = vsub.f32 1.0, %v1480
    %v1482 = vmul.f32 %v1479, %v1481
    %v1483 = vadd.f32 %v1479, %v1482
    %vm1484 = vweird.f32 %v1478
    %vm1485 = vweird.f32 %v1479
    %vm1486 = vmor %vm1484, %vm1485
    %v1487 = vsel %vm1486, %v1479, %v1483
    %v1488 = vand.u32 2147483647, %v1478
    %vm1489 = vcmp.eq.f32.partialorder %v1488, 8.507059e+37
    %v1490 = vand.u32 %v1478, 2147483648
    %v1491 = vor.u32 1.1754944e-38, %v1490
    %v1492 = vsel %vm1489, %v1491, %v1487
    %v1493 = vmul.f32 1.0, %v1492
    %v1495 = vrot.slane %v1334, 7
    %v1497 = vmul.f32 %v1473, %v1495
    %v1498 = vmul.f32 %v1454, %v1474
    %v1499 = vadd.f32 %v1497, %v1498
    %v1500 = vtanh.pop %v1499
    %v1501 = vmul.f32 %v1493, %v1500
    %vm1502 = vcmask 1040384
    %v1503 = vsel %vm1502, %v349, %v511
    %vm1504 = vcmask 1041408
    %v1505 = vsel %vm1504, %v1503, %v676
    %v1506 = vsel %vm50, %v1505, %v841
    %vm1507 = vcmask 1043456
    %v1508 = vsel %vm1507, %v1506, %v1006
    %vm1509 = vcmask 1044480
    %v1510 = vsel %vm1509, %v1508, %v1171
    %vm1511 = vcmask 1045504
    %v1512 = vsel %vm1511, %v1510, %v1336
    %vm1513 = vcmask 1046528
    %v1514 = vsel %vm1513, %v1512, %v1501
    %v1515 = vld [vmem:[%s4] sm:$0xff]
    %v1516 = vld [vmem:[%s4 + $0x8] sm:$0xff]
    %v1517 = vld [vmem:[%s4 + $0x10] sm:$0xff]
    %v1518 = vld [vmem:[%s4 + $0x18] sm:$0xff]
    %v1519 = vld [vmem:[%s4 + $0x20] sm:$0xff]
    %v1520 = vld [vmem:[%s4 + $0x28] sm:$0xff]
    %v1521 = vld [vmem:[%s4 + $0x30] sm:$0xff]
    %v1522 = vld [vmem:[%s4 + $0x38] sm:$0xff]
    %v1523 = vld [vmem:[%s4 + $0x40] sm:$0xff]
    %v1524 = vld [vmem:[%s4 + $0x48] sm:$0xff]
    %v1525 = vld [vmem:[%s4 + $0x50] sm:$0xff]
    %v1526 = vld [vmem:[%s4 + $0x58] sm:$0xff]
    %v1527 = vld [vmem:[%s4 + $0x60] sm:$0xff]
    %v1528 = vld [vmem:[%s4 + $0x68] sm:$0xff]
    %v1529 = vld [vmem:[%s4 + $0x70] sm:$0xff]
    %v1530 = vld [vmem:[%s4 + $0x78] sm:$0xff]
    %v1531 = vld [vmem:[%s5] sm:$0x1]
    %v1533 = vperm.slane %v1531, 0
    %1535 = vmatpush.msra.mxu0 %v1530
    %1536 = vmatpush.msra.mxu0 %v1529
    %1537 = vmatpush.msra.mxu0 %v1528
    %1538 = vmatpush.msra.mxu0 %v1527
    %1539 = vmatpush.msra.mxu0 %v1526
    %1540 = vmatpush.msra.mxu0 %v1525
    %1541 = vmatpush.msra.mxu0 %v1524
    %1542 = vmatpush.msra.mxu0 %v1523
    %1543 = vmatpush.msra.mxu0 %v1522
    %1544 = vmatpush.msra.mxu0 %v1521
    %1545 = vmatpush.msra.mxu0 %v1520
    %1546 = vmatpush.msra.mxu0 %v1519
    %1547 = vmatpush.msra.mxu0 %v1518
    %1548 = vmatpush.msra.mxu0 %v1517
    %1549 = vmatpush.msra.mxu0 %v1516
    %1550 = vmatpush.msra.mxu0 %v1515
    %1551 = vmatmul.f32.gmra.mxu0 %v1514
    %v1552 = vpop.f32.mrf.mxu0
    %v1553 = vadd.f32 %v1533, %v1552
    %1554 = vdwg.mxu0
    %1555 = vst [vmem:[#allocation2] sm:$0xff] %v1553
    %s1556 = scalar_lea.vmem %s0, 8
    %v1557 = vld [vmem:[%s1556] sm:$0xff]
    %v1558 = vld [vmem:[%s1] sm:$0x77]
    %v1559 = vld [vmem:[%s1 + $0x8] sm:$0x77]
    %v1560 = vld [vmem:[%s3] sm:$0xf]
    %v1562 = vperm.slane %v1560, 0
    %v1563 = vperm.slane %v1560, 1
    %v1564 = vperm.slane %v1560, 2
    %v1565 = vperm.slane %v1560, 3
    %1572 = vst [vmem:[#allocation1] ss:$2 sm:$0xff] %v1558
    %s1573 = scalar_lea.vmem [#allocation1], 16
    %1574 = vst [vmem:[%s1573] ss:$2 sm:$0xff] %v1559
    %v1575 = vld.sshfl [vmem:[#allocation1] sm:$0xff pattern:$0x75316420]
    %v1576 = vld.sshfl [vmem:[#allocation1 + $0x8] sm:$0xff pattern:$0x75316420]
    %v1577 = vld.sshfl [vmem:[#allocation1 + $0x10] sm:$0xff pattern:$0x75316420]
    %v1578 = vld.sshfl [vmem:[#allocation1 + $0x18] sm:$0xff pattern:$0x75316420]
    %v1580 = vsel %vm46, %v1557, 0
    %v1582 = vsel %vm50, %v1575, 0
    %v1584 = vsel %vm50, %v1576, 0
    %v1586 = vsel %vm50, %v1577, 0
    %v1588 = vsel %vm50, %v1578, 0
    %1590 = vmatpush.msra.mxu0 0.0
    %1591 = vmatpush.msra.mxu0 0.0
    %1592 = vmatpush.msra.mxu0 0.0
    %1593 = vmatpush.msra.mxu0 0.0
    %1594 = vmatpush.msra.mxu0 0.0
    %1595 = vmatpush.msra.mxu0 0.0
    %1596 = vmatpush.msra.mxu0 0.0
    %1597 = vmatpush.msra.mxu0 0.0
    %1598 = vmatpush.msra.mxu0 0.0
    %1599 = vmatpush.msra.mxu0 0.0
    %1600 = vmatpush.msra.mxu0 0.0
    %1601 = vmatpush.msra.mxu0 0.0
    %1602 = vmatpush.msra.mxu0 0.0
    %1603 = vmatpush.msra.mxu0 0.0
    %1604 = vmatpush.msra.mxu0 0.0
    %1605 = vmatpush.msra.mxu0 %v1582
    %1606 = vmatmul.f32.gmra.mxu0 %v1580
    %v1607 = vpop.f32.mrf.mxu0
    %v1608 = vadd.f32 %v1562, %v1607
    %1609 = vdwg.mxu0
    %1610 = vmatpush.msra.mxu0 0.0
    %1611 = vmatpush.msra.mxu0 0.0
    %1612 = vmatpush.msra.mxu0 0.0
    %1613 = vmatpush.msra.mxu0 0.0
    %1614 = vmatpush.msra.mxu0 0.0
    %1615 = vmatpush.msra.mxu0 0.0
    %1616 = vmatpush.msra.mxu0 0.0
    %1617 = vmatpush.msra.mxu0 0.0
    %1618 = vmatpush.msra.mxu0 0.0
    %1619 = vmatpush.msra.mxu0 0.0
    %1620 = vmatpush.msra.mxu0 0.0
    %1621 = vmatpush.msra.mxu0 0.0
    %1622 = vmatpush.msra.mxu0 0.0
    %1623 = vmatpush.msra.mxu0 0.0
    %1624 = vmatpush.msra.mxu0 0.0
    %1625 = vmatpush.msra.mxu0 %v1584
    %1626 = vmatmul.f32.gmra.mxu0 %v1580
    %v1627 = vpop.f32.mrf.mxu0
    %v1628 = vadd.f32 %v1563, %v1627
    %1629 = vdwg.mxu0
    %1630 = vmatpush.msra.mxu0 0.0
    %1631 = vmatpush.msra.mxu0 0.0
    %1632 = vmatpush.msra.mxu0 0.0
    %1633 = vmatpush.msra.mxu0 0.0
    %1634 = vmatpush.msra.mxu0 0.0
    %1635 = vmatpush.msra.mxu0 0.0
    %1636 = vmatpush.msra.mxu0 0.0
    %1637 = vmatpush.msra.mxu0 0.0
    %1638 = vmatpush.msra.mxu0 0.0
    %1639 = vmatpush.msra.mxu0 0.0
    %1640 = vmatpush.msra.mxu0 0.0
    %1641 = vmatpush.msra.mxu0 0.0
    %1642 = vmatpush.msra.mxu0 0.0
    %1643 = vmatpush.msra.mxu0 0.0
    %1644 = vmatpush.msra.mxu0 0.0
    %1645 = vmatpush.msra.mxu0 %v1586
    %1646 = vmatmul.f32.gmra.mxu0 %v1580
    %v1647 = vpop.f32.mrf.mxu0
    %v1648 = vadd.f32 %v1564, %v1647
    %1649 = vdwg.mxu0
    %1650 = vmatpush.msra.mxu0 0.0
    %1651 = vmatpush.msra.mxu0 0.0
    %1652 = vmatpush.msra.mxu0 0.0
    %1653 = vmatpush.msra.mxu0 0.0
    %1654 = vmatpush.msra.mxu0 0.0
    %1655 = vmatpush.msra.mxu0 0.0
    %1656 = vmatpush.msra.mxu0 0.0
    %1657 = vmatpush.msra.mxu0 0.0
    %1658 = vmatpush.msra.mxu0 0.0
    %1659 = vmatpush.msra.mxu0 0.0
    %1660 = vmatpush.msra.mxu0 0.0
    %1661 = vmatpush.msra.mxu0 0.0
    %1662 = vmatpush.msra.mxu0 0.0
    %1663 = vmatpush.msra.mxu0 0.0
    %1664 = vmatpush.msra.mxu0 0.0
    %1665 = vmatpush.msra.mxu0 %v1588
    %1666 = vmatmul.f32.gmra.mxu0 %v1580
    %v1667 = vpop.f32.mrf.mxu0
    %v1668 = vadd.f32 %v1565, %v1667
    %1669 = vdwg.mxu0
    %v1670 = vld [vmem:[%s2] sm:$0xff]
    %v1671 = vld [vmem:[%s2 + $0x8] sm:$0xff]
    %v1672 = vld [vmem:[%s2 + $0x10] sm:$0xff]
    %v1673 = vld [vmem:[%s2 + $0x18] sm:$0xff]
    %v1674 = vld [vmem:[%s2 + $0x20] sm:$0xff]
    %v1675 = vld [vmem:[%s2 + $0x28] sm:$0xff]
    %v1676 = vld [vmem:[%s2 + $0x30] sm:$0xff]
    %v1677 = vld [vmem:[%s2 + $0x38] sm:$0xff]
    %v1678 = vld [vmem:[%s2 + $0x40] sm:$0xff]
    %v1679 = vld [vmem:[%s2 + $0x48] sm:$0xff]
    %v1680 = vld [vmem:[%s2 + $0x50] sm:$0xff]
    %v1681 = vld [vmem:[%s2 + $0x58] sm:$0xff]
    %v1682 = vld [vmem:[%s2 + $0x60] sm:$0xff]
    %v1683 = vld [vmem:[%s2 + $0x68] sm:$0xff]
    %v1684 = vld [vmem:[%s2 + $0x70] sm:$0xff]
    %v1685 = vld [vmem:[%s2 + $0x78] sm:$0xff]
    %v1686 = vld [vmem:[%s2 + $0x80] sm:$0xff]
    %v1687 = vld [vmem:[%s2 + $0x88] sm:$0xff]
    %v1688 = vld [vmem:[%s2 + $0x90] sm:$0xff]
    %v1689 = vld [vmem:[%s2 + $0x98] sm:$0xff]
    %v1690 = vld [vmem:[%s2 + $0xa0] sm:$0xff]
    %v1691 = vld [vmem:[%s2 + $0xa8] sm:$0xff]
    %v1692 = vld [vmem:[%s2 + $0xb0] sm:$0xff]
    %v1693 = vld [vmem:[%s2 + $0xb8] sm:$0xff]
    %v1694 = vld [vmem:[%s2 + $0xc0] sm:$0xff]
    %v1695 = vld [vmem:[%s2 + $0xc8] sm:$0xff]
    %v1696 = vld [vmem:[%s2 + $0xd0] sm:$0xff]
    %v1697 = vld [vmem:[%s2 + $0xd8] sm:$0xff]
    %v1698 = vld [vmem:[%s2 + $0xe0] sm:$0xff]
    %v1699 = vld [vmem:[%s2 + $0xe8] sm:$0xff]
    %v1700 = vld [vmem:[%s2 + $0xf0] sm:$0xff]
    %v1701 = vld [vmem:[%s2 + $0xf8] sm:$0xff]
    %v1702 = vld [vmem:[%s2 + $0x100] sm:$0xff]
    %v1703 = vld [vmem:[%s2 + $0x108] sm:$0xff]
    %v1704 = vld [vmem:[%s2 + $0x110] sm:$0xff]
    %v1705 = vld [vmem:[%s2 + $0x118] sm:$0xff]
    %v1706 = vld [vmem:[%s2 + $0x120] sm:$0xff]
    %v1707 = vld [vmem:[%s2 + $0x128] sm:$0xff]
    %v1708 = vld [vmem:[%s2 + $0x130] sm:$0xff]
    %v1709 = vld [vmem:[%s2 + $0x138] sm:$0xff]
    %v1710 = vld [vmem:[%s2 + $0x140] sm:$0xff]
    %v1711 = vld [vmem:[%s2 + $0x148] sm:$0xff]
    %v1712 = vld [vmem:[%s2 + $0x150] sm:$0xff]
    %v1713 = vld [vmem:[%s2 + $0x158] sm:$0xff]
    %v1714 = vld [vmem:[%s2 + $0x160] sm:$0xff]
    %v1715 = vld [vmem:[%s2 + $0x168] sm:$0xff]
    %v1716 = vld [vmem:[%s2 + $0x170] sm:$0xff]
    %v1717 = vld [vmem:[%s2 + $0x178] sm:$0xff]
    %v1718 = vld [vmem:[%s2 + $0x180] sm:$0xff]
    %v1719 = vld [vmem:[%s2 + $0x188] sm:$0xff]
    %v1720 = vld [vmem:[%s2 + $0x190] sm:$0xff]
    %v1721 = vld [vmem:[%s2 + $0x198] sm:$0xff]
    %v1722 = vld [vmem:[%s2 + $0x1a0] sm:$0xff]
    %v1723 = vld [vmem:[%s2 + $0x1a8] sm:$0xff]
    %v1724 = vld [vmem:[%s2 + $0x1b0] sm:$0xff]
    %v1725 = vld [vmem:[%s2 + $0x1b8] sm:$0xff]
    %v1726 = vld [vmem:[%s2 + $0x1c0] sm:$0xff]
    %v1727 = vld [vmem:[%s2 + $0x1c8] sm:$0xff]
    %v1728 = vld [vmem:[%s2 + $0x1d0] sm:$0xff]
    %v1729 = vld [vmem:[%s2 + $0x1d8] sm:$0xff]
    %v1730 = vld [vmem:[%s2 + $0x1e0] sm:$0xff]
    %v1731 = vld [vmem:[%s2 + $0x1e8] sm:$0xff]
    %v1732 = vld [vmem:[%s2 + $0x1f0] sm:$0xff]
    %v1733 = vld [vmem:[%s2 + $0x1f8] sm:$0xff]
    %1734 = vmatpush.msra.mxu0 %v1730
    %1735 = vmatpush.msra.mxu0 %v1726
    %1736 = vmatpush.msra.mxu0 %v1722
    %1737 = vmatpush.msra.mxu0 %v1718
    %1738 = vmatpush.msra.mxu0 %v1714
    %1739 = vmatpush.msra.mxu0 %v1710
    %1740 = vmatpush.msra.mxu0 %v1706
    %1741 = vmatpush.msra.mxu0 %v1702
    %1742 = vmatpush.msra.mxu0 %v1698
    %1743 = vmatpush.msra.mxu0 %v1694
    %1744 = vmatpush.msra.mxu0 %v1690
    %1745 = vmatpush.msra.mxu0 %v1686
    %1746 = vmatpush.msra.mxu0 %v1682
    %1747 = vmatpush.msra.mxu0 %v1678
    %1748 = vmatpush.msra.mxu0 %v1674
    %1749 = vmatpush.msra.mxu0 %v1670
    %1750 = vmatmul.f32.gmra.mxu0 0.0
    %v1751 = vpop.f32.mrf.mxu0
    %v1752 = vadd.f32 0.0, %v1751
    %1753 = vdwg.mxu0
    %1754 = vmatpush.msra.mxu0 %v1731
    %1755 = vmatpush.msra.mxu0 %v1727
    %1756 = vmatpush.msra.mxu0 %v1723
    %1757 = vmatpush.msra.mxu0 %v1719
    %1758 = vmatpush.msra.mxu0 %v1715
    %1759 = vmatpush.msra.mxu0 %v1711
    %1760 = vmatpush.msra.mxu0 %v1707
    %1761 = vmatpush.msra.mxu0 %v1703
    %1762 = vmatpush.msra.mxu0 %v1699
    %1763 = vmatpush.msra.mxu0 %v1695
    %1764 = vmatpush.msra.mxu0 %v1691
    %1765 = vmatpush.msra.mxu0 %v1687
    %1766 = vmatpush.msra.mxu0 %v1683
    %1767 = vmatpush.msra.mxu0 %v1679
    %1768 = vmatpush.msra.mxu0 %v1675
    %1769 = vmatpush.msra.mxu0 %v1671
    %1770 = vmatmul.f32.gmra.mxu0 0.0
    %v1771 = vpop.f32.mrf.mxu0
    %v1772 = vadd.f32 0.0, %v1771
    %1773 = vdwg.mxu0
    %1774 = vmatpush.msra.mxu0 %v1732
    %1775 = vmatpush.msra.mxu0 %v1728
    %1776 = vmatpush.msra.mxu0 %v1724
    %1777 = vmatpush.msra.mxu0 %v1720
    %1778 = vmatpush.msra.mxu0 %v1716
    %1779 = vmatpush.msra.mxu0 %v1712
    %1780 = vmatpush.msra.mxu0 %v1708
    %1781 = vmatpush.msra.mxu0 %v1704
    %1782 = vmatpush.msra.mxu0 %v1700
    %1783 = vmatpush.msra.mxu0 %v1696
    %1784 = vmatpush.msra.mxu0 %v1692
    %1785 = vmatpush.msra.mxu0 %v1688
    %1786 = vmatpush.msra.mxu0 %v1684
    %1787 = vmatpush.msra.mxu0 %v1680
    %1788 = vmatpush.msra.mxu0 %v1676
    %1789 = vmatpush.msra.mxu0 %v1672
    %1790 = vmatmul.f32.gmra.mxu0 0.0
    %v1791 = vpop.f32.mrf.mxu0
    %v1792 = vadd.f32 0.0, %v1791
    %1793 = vdwg.mxu0
    %1794 = vmatpush.msra.mxu0 %v1733
    %1795 = vmatpush.msra.mxu0 %v1729
    %1796 = vmatpush.msra.mxu0 %v1725
    %1797 = vmatpush.msra.mxu0 %v1721
    %1798 = vmatpush.msra.mxu0 %v1717
    %1799 = vmatpush.msra.mxu0 %v1713
    %1800 = vmatpush.msra.mxu0 %v1709
    %1801 = vmatpush.msra.mxu0 %v1705
    %1802 = vmatpush.msra.mxu0 %v1701
    %1803 = vmatpush.msra.mxu0 %v1697
    %1804 = vmatpush.msra.mxu0 %v1693
    %1805 = vmatpush.msra.mxu0 %v1689
    %1806 = vmatpush.msra.mxu0 %v1685
    %1807 = vmatpush.msra.mxu0 %v1681
    %1808 = vmatpush.msra.mxu0 %v1677
    %1809 = vmatpush.msra.mxu0 %v1673
    %1810 = vmatmul.f32.gmra.mxu0 0.0
    %v1811 = vpop.f32.mrf.mxu0
    %v1812 = vadd.f32 0.0, %v1811
    %1813 = vdwg.mxu0
    %v1814 = vadd.f32 %v1608, %v1752
    %v1815 = vadd.f32 %v1628, %v1772
    %v1816 = vadd.f32 %v1648, %v1792
    %v1817 = vadd.f32 %v1668, %v1812
    %v1818 = vxor.u32 %v1814, 2147483648
    %v1819 = vmul.f32 %v1818, 1.442695
    %v1820 = vpow.pop %v1819
    %v1821 = vadd.f32 %v1820, 1.0
    %v1822 = vrcp.pop %v1821
    %v1823 = vmul.f32 %v1821, %v1822
    %v1824 = vsub.f32 1.0, %v1823
    %v1825 = vmul.f32 %v1822, %v1824
    %v1826 = vadd.f32 %v1822, %v1825
    %vm1827 = vweird.f32 %v1821
    %vm1828 = vweird.f32 %v1822
    %vm1829 = vmor %vm1827, %vm1828
    %v1830 = vsel %vm1829, %v1822, %v1826
    %v1831 = vand.u32 2147483647, %v1821
    %vm1832 = vcmp.eq.f32.partialorder %v1831, 8.507059e+37
    %v1833 = vand.u32 %v1821, 2147483648
    %v1834 = vor.u32 1.1754944e-38, %v1833
    %v1835 = vsel %vm1832, %v1834, %v1830
    %v1836 = vmul.f32 1.0, %v1835
    %v1837 = vxor.u32 %v1815, 2147483648
    %v1838 = vmul.f32 %v1837, 1.442695
    %v1839 = vpow.pop %v1838
    %v1840 = vadd.f32 %v1839, 1.0
    %v1841 = vrcp.pop %v1840
    %v1842 = vmul.f32 %v1840, %v1841
    %v1843 = vsub.f32 1.0, %v1842
    %v1844 = vmul.f32 %v1841, %v1843
    %v1845 = vadd.f32 %v1841, %v1844
    %vm1846 = vweird.f32 %v1840
    %vm1847 = vweird.f32 %v1841
    %vm1848 = vmor %vm1846, %vm1847
    %v1849 = vsel %vm1848, %v1841, %v1845
    %v1850 = vand.u32 2147483647, %v1840
    %vm1851 = vcmp.eq.f32.partialorder %v1850, 8.507059e+37
    %v1852 = vand.u32 %v1840, 2147483648
    %v1853 = vor.u32 1.1754944e-38, %v1852
    %v1854 = vsel %vm1851, %v1853, %v1849
    %v1855 = vmul.f32 1.0, %v1854
    %v1856 = vtanh.pop %v1816
    %v1857 = vxor.u32 %v1817, 2147483648
    %v1858 = vmul.f32 %v1857, 1.442695
    %v1859 = vpow.pop %v1858
    %v1860 = vadd.f32 %v1859, 1.0
    %v1861 = vrcp.pop %v1860
    %v1862 = vmul.f32 %v1860, %v1861
    %v1863 = vsub.f32 1.0, %v1862
    %v1864 = vmul.f32 %v1861, %v1863
    %v1865 = vadd.f32 %v1861, %v1864
    %vm1866 = vweird.f32 %v1860
    %vm1867 = vweird.f32 %v1861
    %vm1868 = vmor %vm1866, %vm1867
    %v1869 = vsel %vm1868, %v1861, %v1865
    %v1870 = vand.u32 2147483647, %v1860
    %vm1871 = vcmp.eq.f32.partialorder %v1870, 8.507059e+37
    %v1872 = vand.u32 %v1860, 2147483648
    %v1873 = vor.u32 1.1754944e-38, %v1872
    %v1874 = vsel %vm1871, %v1873, %v1869
    %v1875 = vmul.f32 1.0, %v1874
    %v1876 = vmul.f32 %v1855, 0.0
    %v1877 = vmul.f32 %v1836, %v1856
    %v1878 = vadd.f32 %v1876, %v1877
    %v1879 = vtanh.pop %v1878
    %v1880 = vmul.f32 %v1875, %v1879
    %1881 = vmatpush.msra.mxu0 %v1730
    %1882 = vmatpush.msra.mxu0 %v1726
    %1883 = vmatpush.msra.mxu0 %v1722
    %1884 = vmatpush.msra.mxu0 %v1718
    %1885 = vmatpush.msra.mxu0 %v1714
    %1886 = vmatpush.msra.mxu0 %v1710
    %1887 = vmatpush.msra.mxu0 %v1706
    %1888 = vmatpush.msra.mxu0 %v1702
    %1889 = vmatpush.msra.mxu0 %v1698
    %1890 = vmatpush.msra.mxu0 %v1694
    %1891 = vmatpush.msra.mxu0 %v1690
    %1892 = vmatpush.msra.mxu0 %v1686
    %1893 = vmatpush.msra.mxu0 %v1682
    %1894 = vmatpush.msra.mxu0 %v1678
    %1895 = vmatpush.msra.mxu0 %v1674
    %1896 = vmatpush.msra.mxu0 %v1670
    %1897 = vmatmul.f32.gmra.mxu0 %v1880
    %v1898 = vpop.f32.mrf.mxu0
    %v1899 = vadd.f32 0.0, %v1898
    %1900 = vdwg.mxu0
    %1901 = vmatpush.msra.mxu0 %v1731
    %1902 = vmatpush.msra.mxu0 %v1727
    %1903 = vmatpush.msra.mxu0 %v1723
    %1904 = vmatpush.msra.mxu0 %v1719
    %1905 = vmatpush.msra.mxu0 %v1715
    %1906 = vmatpush.msra.mxu0 %v1711
    %1907 = vmatpush.msra.mxu0 %v1707
    %1908 = vmatpush.msra.mxu0 %v1703
    %1909 = vmatpush.msra.mxu0 %v1699
    %1910 = vmatpush.msra.mxu0 %v1695
    %1911 = vmatpush.msra.mxu0 %v1691
    %1912 = vmatpush.msra.mxu0 %v1687
    %1913 = vmatpush.msra.mxu0 %v1683
    %1914 = vmatpush.msra.mxu0 %v1679
    %1915 = vmatpush.msra.mxu0 %v1675
    %1916 = vmatpush.msra.mxu0 %v1671
    %1917 = vmatmul.f32.gmra.mxu0 %v1880
    %v1918 = vpop.f32.mrf.mxu0
    %v1919 = vadd.f32 0.0, %v1918
    %1920 = vdwg.mxu0
    %1921 = vmatpush.msra.mxu0 %v1732
    %1922 = vmatpush.msra.mxu0 %v1728
    %1923 = vmatpush.msra.mxu0 %v1724
    %1924 = vmatpush.msra.mxu0 %v1720
    %1925 = vmatpush.msra.mxu0 %v1716
    %1926 = vmatpush.msra.mxu0 %v1712
    %1927 = vmatpush.msra.mxu0 %v1708
    %1928 = vmatpush.msra.mxu0 %v1704
    %1929 = vmatpush.msra.mxu0 %v1700
    %1930 = vmatpush.msra.mxu0 %v1696
    %1931 = vmatpush.msra.mxu0 %v1692
    %1932 = vmatpush.msra.mxu0 %v1688
    %1933 = vmatpush.msra.mxu0 %v1684
    %1934 = vmatpush.msra.mxu0 %v1680
    %1935 = vmatpush.msra.mxu0 %v1676
    %1936 = vmatpush.msra.mxu0 %v1672
    %1937 = vmatmul.f32.gmra.mxu0 %v1880
    %v1938 = vpop.f32.mrf.mxu0
    %v1939 = vadd.f32 0.0, %v1938
    %1940 = vdwg.mxu0
    %1941 = vmatpush.msra.mxu0 %v1733
    %1942 = vmatpush.msra.mxu0 %v1729
    %1943 = vmatpush.msra.mxu0 %v1725
    %1944 = vmatpush.msra.mxu0 %v1721
    %1945 = vmatpush.msra.mxu0 %v1717
    %1946 = vmatpush.msra.mxu0 %v1713
    %1947 = vmatpush.msra.mxu0 %v1709
    %1948 = vmatpush.msra.mxu0 %v1705
    %1949 = vmatpush.msra.mxu0 %v1701
    %1950 = vmatpush.msra.mxu0 %v1697
    %1951 = vmatpush.msra.mxu0 %v1693
    %1952 = vmatpush.msra.mxu0 %v1689
    %1953 = vmatpush.msra.mxu0 %v1685
    %1954 = vmatpush.msra.mxu0 %v1681
    %1955 = vmatpush.msra.mxu0 %v1677
    %1956 = vmatpush.msra.mxu0 %v1673
    %1957 = vmatmul.f32.gmra.mxu0 %v1880
    %v1958 = vpop.f32.mrf.mxu0
    %v1959 = vadd.f32 0.0, %v1958
    %1960 = vdwg.mxu0
    %v1965 = vrot.slane %v1899, 7
    %v1966 = vrot.slane %v1919, 7
    %v1967 = vrot.slane %v1939, 7
    %v1968 = vrot.slane %v1959, 7
    %v1973 = vadd.f32 %v1608, %v1965
    %v1974 = vadd.f32 %v1628, %v1966
    %v1975 = vadd.f32 %v1648, %v1967
    %v1976 = vadd.f32 %v1668, %v1968
    %v1977 = vxor.u32 %v1973, 2147483648
    %v1978 = vmul.f32 %v1977, 1.442695
    %v1979 = vpow.pop %v1978
    %v1980 = vadd.f32 %v1979, 1.0
    %v1981 = vrcp.pop %v1980
    %v1982 = vmul.f32 %v1980, %v1981
    %v1983 = vsub.f32 1.0, %v1982
    %v1984 = vmul.f32 %v1981, %v1983
    %v1985 = vadd.f32 %v1981, %v1984
    %vm1986 = vweird.f32 %v1980
    %vm1987 = vweird.f32 %v1981
    %vm1988 = vmor %vm1986, %vm1987
    %v1989 = vsel %vm1988, %v1981, %v1985
    %v1990 = vand.u32 2147483647, %v1980
    %vm1991 = vcmp.eq.f32.partialorder %v1990, 8.507059e+37
    %v1992 = vand.u32 %v1980, 2147483648
    %v1993 = vor.u32 1.1754944e-38, %v1992
    %v1994 = vsel %vm1991, %v1993, %v1989
    %v1995 = vmul.f32 1.0, %v1994
    %v1996 = vxor.u32 %v1974, 2147483648
    %v1997 = vmul.f32 %v1996, 1.442695
    %v1998 = vpow.pop %v1997
    %v1999 = vadd.f32 %v1998, 1.0
    %v2000 = vrcp.pop %v1999
    %v2001 = vmul.f32 %v1999, %v2000
    %v2002 = vsub.f32 1.0, %v2001
    %v2003 = vmul.f32 %v2000, %v2002
    %v2004 = vadd.f32 %v2000, %v2003
    %vm2005 = vweird.f32 %v1999
    %vm2006 = vweird.f32 %v2000
    %vm2007 = vmor %vm2005, %vm2006
    %v2008 = vsel %vm2007, %v2000, %v2004
    %v2009 = vand.u32 2147483647, %v1999
    %vm2010 = vcmp.eq.f32.partialorder %v2009, 8.507059e+37
    %v2011 = vand.u32 %v1999, 2147483648
    %v2012 = vor.u32 1.1754944e-38, %v2011
    %v2013 = vsel %vm2010, %v2012, %v2008
    %v2014 = vmul.f32 1.0, %v2013
    %v2015 = vtanh.pop %v1975
    %v2016 = vxor.u32 %v1976, 2147483648
    %v2017 = vmul.f32 %v2016, 1.442695
    %v2018 = vpow.pop %v2017
    %v2019 = vadd.f32 %v2018, 1.0
    %v2020 = vrcp.pop %v2019
    %v2021 = vmul.f32 %v2019, %v2020
    %v2022 = vsub.f32 1.0, %v2021
    %v2023 = vmul.f32 %v2020, %v2022
    %v2024 = vadd.f32 %v2020, %v2023
    %vm2025 = vweird.f32 %v2019
    %vm2026 = vweird.f32 %v2020
    %vm2027 = vmor %vm2025, %vm2026
    %v2028 = vsel %vm2027, %v2020, %v2024
    %v2029 = vand.u32 2147483647, %v2019
    %vm2030 = vcmp.eq.f32.partialorder %v2029, 8.507059e+37
    %v2031 = vand.u32 %v2019, 2147483648
    %v2032 = vor.u32 1.1754944e-38, %v2031
    %v2033 = vsel %vm2030, %v2032, %v2028
    %v2034 = vmul.f32 1.0, %v2033
    %v2036 = vrot.slane %v1878, 7
    %v2038 = vmul.f32 %v2014, %v2036
    %v2039 = vmul.f32 %v1995, %v2015
    %v2040 = vadd.f32 %v2038, %v2039
    %v2041 = vtanh.pop %v2040
    %v2042 = vmul.f32 %v2034, %v2041
    %v2044 = vrot.slane %v2042, 1
    %2046 = vmatpush.msra.mxu0 %v1730
    %2047 = vmatpush.msra.mxu0 %v1726
    %2048 = vmatpush.msra.mxu0 %v1722
    %2049 = vmatpush.msra.mxu0 %v1718
    %2050 = vmatpush.msra.mxu0 %v1714
    %2051 = vmatpush.msra.mxu0 %v1710
    %2052 = vmatpush.msra.mxu0 %v1706
    %2053 = vmatpush.msra.mxu0 %v1702
    %2054 = vmatpush.msra.mxu0 %v1698
    %2055 = vmatpush.msra.mxu0 %v1694
    %2056 = vmatpush.msra.mxu0 %v1690
    %2057 = vmatpush.msra.mxu0 %v1686
    %2058 = vmatpush.msra.mxu0 %v1682
    %2059 = vmatpush.msra.mxu0 %v1678
    %2060 = vmatpush.msra.mxu0 %v1674
    %2061 = vmatpush.msra.mxu0 %v1670
    %2062 = vmatmul.f32.gmra.mxu0 %v2044
    %v2063 = vpop.f32.mrf.mxu0
    %v2064 = vadd.f32 0.0, %v2063
    %2065 = vdwg.mxu0
    %2066 = vmatpush.msra.mxu0 %v1731
    %2067 = vmatpush.msra.mxu0 %v1727
    %2068 = vmatpush.msra.mxu0 %v1723
    %2069 = vmatpush.msra.mxu0 %v1719
    %2070 = vmatpush.msra.mxu0 %v1715
    %2071 = vmatpush.msra.mxu0 %v1711
    %2072 = vmatpush.msra.mxu0 %v1707
    %2073 = vmatpush.msra.mxu0 %v1703
    %2074 = vmatpush.msra.mxu0 %v1699
    %2075 = vmatpush.msra.mxu0 %v1695
    %2076 = vmatpush.msra.mxu0 %v1691
    %2077 = vmatpush.msra.mxu0 %v1687
    %2078 = vmatpush.msra.mxu0 %v1683
    %2079 = vmatpush.msra.mxu0 %v1679
    %2080 = vmatpush.msra.mxu0 %v1675
    %2081 = vmatpush.msra.mxu0 %v1671
    %2082 = vmatmul.f32.gmra.mxu0 %v2044
    %v2083 = vpop.f32.mrf.mxu0
    %v2084 = vadd.f32 0.0, %v2083
    %2085 = vdwg.mxu0
    %2086 = vmatpush.msra.mxu0 %v1732
    %2087 = vmatpush.msra.mxu0 %v1728
    %2088 = vmatpush.msra.mxu0 %v1724
    %2089 = vmatpush.msra.mxu0 %v1720
    %2090 = vmatpush.msra.mxu0 %v1716
    %2091 = vmatpush.msra.mxu0 %v1712
    %2092 = vmatpush.msra.mxu0 %v1708
    %2093 = vmatpush.msra.mxu0 %v1704
    %2094 = vmatpush.msra.mxu0 %v1700
    %2095 = vmatpush.msra.mxu0 %v1696
    %2096 = vmatpush.msra.mxu0 %v1692
    %2097 = vmatpush.msra.mxu0 %v1688
    %2098 = vmatpush.msra.mxu0 %v1684
    %2099 = vmatpush.msra.mxu0 %v1680
    %2100 = vmatpush.msra.mxu0 %v1676
    %2101 = vmatpush.msra.mxu0 %v1672
    %2102 = vmatmul.f32.gmra.mxu0 %v2044
    %v2103 = vpop.f32.mrf.mxu0
    %v2104 = vadd.f32 0.0, %v2103
    %2105 = vdwg.mxu0
    %2106 = vmatpush.msra.mxu0 %v1733
    %2107 = vmatpush.msra.mxu0 %v1729
    %2108 = vmatpush.msra.mxu0 %v1725
    %2109 = vmatpush.msra.mxu0 %v1721
    %2110 = vmatpush.msra.mxu0 %v1717
    %2111 = vmatpush.msra.mxu0 %v1713
    %2112 = vmatpush.msra.mxu0 %v1709
    %2113 = vmatpush.msra.mxu0 %v1705
    %2114 = vmatpush.msra.mxu0 %v1701
    %2115 = vmatpush.msra.mxu0 %v1697
    %2116 = vmatpush.msra.mxu0 %v1693
    %2117 = vmatpush.msra.mxu0 %v1689
    %2118 = vmatpush.msra.mxu0 %v1685
    %2119 = vmatpush.msra.mxu0 %v1681
    %2120 = vmatpush.msra.mxu0 %v1677
    %2121 = vmatpush.msra.mxu0 %v1673
    %2122 = vmatmul.f32.gmra.mxu0 %v2044
    %v2123 = vpop.f32.mrf.mxu0
    %v2124 = vadd.f32 0.0, %v2123
    %2125 = vdwg.mxu0
    %v2130 = vrot.slane %v2064, 6
    %v2131 = vrot.slane %v2084, 6
    %v2132 = vrot.slane %v2104, 6
    %v2133 = vrot.slane %v2124, 6
    %v2138 = vadd.f32 %v1608, %v2130
    %v2139 = vadd.f32 %v1628, %v2131
    %v2140 = vadd.f32 %v1648, %v2132
    %v2141 = vadd.f32 %v1668, %v2133
    %v2142 = vxor.u32 %v2138, 2147483648
    %v2143 = vmul.f32 %v2142, 1.442695
    %v2144 = vpow.pop %v2143
    %v2145 = vadd.f32 %v2144, 1.0
    %v2146 = vrcp.pop %v2145
    %v2147 = vmul.f32 %v2145, %v2146
    %v2148 = vsub.f32 1.0, %v2147
    %v2149 = vmul.f32 %v2146, %v2148
    %v2150 = vadd.f32 %v2146, %v2149
    %vm2151 = vweird.f32 %v2145
    %vm2152 = vweird.f32 %v2146
    %vm2153 = vmor %vm2151, %vm2152
    %v2154 = vsel %vm2153, %v2146, %v2150
    %v2155 = vand.u32 2147483647, %v2145
    %vm2156 = vcmp.eq.f32.partialorder %v2155, 8.507059e+37
    %v2157 = vand.u32 %v2145, 2147483648
    %v2158 = vor.u32 1.1754944e-38, %v2157
    %v2159 = vsel %vm2156, %v2158, %v2154
    %v2160 = vmul.f32 1.0, %v2159
    %v2161 = vxor.u32 %v2139, 2147483648
    %v2162 = vmul.f32 %v2161, 1.442695
    %v2163 = vpow.pop %v2162
    %v2164 = vadd.f32 %v2163, 1.0
    %v2165 = vrcp.pop %v2164
    %v2166 = vmul.f32 %v2164, %v2165
    %v2167 = vsub.f32 1.0, %v2166
    %v2168 = vmul.f32 %v2165, %v2167
    %v2169 = vadd.f32 %v2165, %v2168
    %vm2170 = vweird.f32 %v2164
    %vm2171 = vweird.f32 %v2165
    %vm2172 = vmor %vm2170, %vm2171
    %v2173 = vsel %vm2172, %v2165, %v2169
    %v2174 = vand.u32 2147483647, %v2164
    %vm2175 = vcmp.eq.f32.partialorder %v2174, 8.507059e+37
    %v2176 = vand.u32 %v2164, 2147483648
    %v2177 = vor.u32 1.1754944e-38, %v2176
    %v2178 = vsel %vm2175, %v2177, %v2173
    %v2179 = vmul.f32 1.0, %v2178
    %v2180 = vtanh.pop %v2140
    %v2181 = vxor.u32 %v2141, 2147483648
    %v2182 = vmul.f32 %v2181, 1.442695
    %v2183 = vpow.pop %v2182
    %v2184 = vadd.f32 %v2183, 1.0
    %v2185 = vrcp.pop %v2184
    %v2186 = vmul.f32 %v2184, %v2185
    %v2187 = vsub.f32 1.0, %v2186
    %v2188 = vmul.f32 %v2185, %v2187
    %v2189 = vadd.f32 %v2185, %v2188
    %vm2190 = vweird.f32 %v2184
    %vm2191 = vweird.f32 %v2185
    %vm2192 = vmor %vm2190, %vm2191
    %v2193 = vsel %vm2192, %v2185, %v2189
    %v2194 = vand.u32 2147483647, %v2184
    %vm2195 = vcmp.eq.f32.partialorder %v2194, 8.507059e+37
    %v2196 = vand.u32 %v2184, 2147483648
    %v2197 = vor.u32 1.1754944e-38, %v2196
    %v2198 = vsel %vm2195, %v2197, %v2193
    %v2199 = vmul.f32 1.0, %v2198
    %v2201 = vrot.slane %v2040, 7
    %v2203 = vmul.f32 %v2179, %v2201
    %v2204 = vmul.f32 %v2160, %v2180
    %v2205 = vadd.f32 %v2203, %v2204
    %v2206 = vtanh.pop %v2205
    %v2207 = vmul.f32 %v2199, %v2206
    %v2209 = vrot.slane %v2207, 2
    %2211 = vmatpush.msra.mxu0 %v1730
    %2212 = vmatpush.msra.mxu0 %v1726
    %2213 = vmatpush.msra.mxu0 %v1722
    %2214 = vmatpush.msra.mxu0 %v1718
    %2215 = vmatpush.msra.mxu0 %v1714
    %2216 = vmatpush.msra.mxu0 %v1710
    %2217 = vmatpush.msra.mxu0 %v1706
    %2218 = vmatpush.msra.mxu0 %v1702
    %2219 = vmatpush.msra.mxu0 %v1698
    %2220 = vmatpush.msra.mxu0 %v1694
    %2221 = vmatpush.msra.mxu0 %v1690
    %2222 = vmatpush.msra.mxu0 %v1686
    %2223 = vmatpush.msra.mxu0 %v1682
    %2224 = vmatpush.msra.mxu0 %v1678
    %2225 = vmatpush.msra.mxu0 %v1674
    %2226 = vmatpush.msra.mxu0 %v1670
    %2227 = vmatmul.f32.gmra.mxu0 %v2209
    %v2228 = vpop.f32.mrf.mxu0
    %v2229 = vadd.f32 0.0, %v2228
    %2230 = vdwg.mxu0
    %2231 = vmatpush.msra.mxu0 %v1731
    %2232 = vmatpush.msra.mxu0 %v1727
    %2233 = vmatpush.msra.mxu0 %v1723
    %2234 = vmatpush.msra.mxu0 %v1719
    %2235 = vmatpush.msra.mxu0 %v1715
    %2236 = vmatpush.msra.mxu0 %v1711
    %2237 = vmatpush.msra.mxu0 %v1707
    %2238 = vmatpush.msra.mxu0 %v1703
    %2239 = vmatpush.msra.mxu0 %v1699
    %2240 = vmatpush.msra.mxu0 %v1695
    %2241 = vmatpush.msra.mxu0 %v1691
    %2242 = vmatpush.msra.mxu0 %v1687
    %2243 = vmatpush.msra.mxu0 %v1683
    %2244 = vmatpush.msra.mxu0 %v1679
    %2245 = vmatpush.msra.mxu0 %v1675
    %2246 = vmatpush.msra.mxu0 %v1671
    %2247 = vmatmul.f32.gmra.mxu0 %v2209
    %v2248 = vpop.f32.mrf.mxu0
    %v2249 = vadd.f32 0.0, %v2248
    %2250 = vdwg.mxu0
    %2251 = vmatpush.msra.mxu0 %v1732
    %2252 = vmatpush.msra.mxu0 %v1728
    %2253 = vmatpush.msra.mxu0 %v1724
    %2254 = vmatpush.msra.mxu0 %v1720
    %2255 = vmatpush.msra.mxu0 %v1716
    %2256 = vmatpush.msra.mxu0 %v1712
    %2257 = vmatpush.msra.mxu0 %v1708
    %2258 = vmatpush.msra.mxu0 %v1704
    %2259 = vmatpush.msra.mxu0 %v1700
    %2260 = vmatpush.msra.mxu0 %v1696
    %2261 = vmatpush.msra.mxu0 %v1692
    %2262 = vmatpush.msra.mxu0 %v1688
    %2263 = vmatpush.msra.mxu0 %v1684
    %2264 = vmatpush.msra.mxu0 %v1680
    %2265 = vmatpush.msra.mxu0 %v1676
    %2266 = vmatpush.msra.mxu0 %v1672
    %2267 = vmatmul.f32.gmra.mxu0 %v2209
    %v2268 = vpop.f32.mrf.mxu0
    %v2269 = vadd.f32 0.0, %v2268
    %2270 = vdwg.mxu0
    %2271 = vmatpush.msra.mxu0 %v1733
    %2272 = vmatpush.msra.mxu0 %v1729
    %2273 = vmatpush.msra.mxu0 %v1725
    %2274 = vmatpush.msra.mxu0 %v1721
    %2275 = vmatpush.msra.mxu0 %v1717
    %2276 = vmatpush.msra.mxu0 %v1713
    %2277 = vmatpush.msra.mxu0 %v1709
    %2278 = vmatpush.msra.mxu0 %v1705
    %2279 = vmatpush.msra.mxu0 %v1701
    %2280 = vmatpush.msra.mxu0 %v1697
    %2281 = vmatpush.msra.mxu0 %v1693
    %2282 = vmatpush.msra.mxu0 %v1689
    %2283 = vmatpush.msra.mxu0 %v1685
    %2284 = vmatpush.msra.mxu0 %v1681
    %2285 = vmatpush.msra.mxu0 %v1677
    %2286 = vmatpush.msra.mxu0 %v1673
    %2287 = vmatmul.f32.gmra.mxu0 %v2209
    %v2288 = vpop.f32.mrf.mxu0
    %v2289 = vadd.f32 0.0, %v2288
    %2290 = vdwg.mxu0
    %v2295 = vrot.slane %v2229, 5
    %v2296 = vrot.slane %v2249, 5
    %v2297 = vrot.slane %v2269, 5
    %v2298 = vrot.slane %v2289, 5
    %v2303 = vadd.f32 %v1608, %v2295
    %v2304 = vadd.f32 %v1628, %v2296
    %v2305 = vadd.f32 %v1648, %v2297
    %v2306 = vadd.f32 %v1668, %v2298
    %v2307 = vxor.u32 %v2303, 2147483648
    %v2308 = vmul.f32 %v2307, 1.442695
    %v2309 = vpow.pop %v2308
    %v2310 = vadd.f32 %v2309, 1.0
    %v2311 = vrcp.pop %v2310
    %v2312 = vmul.f32 %v2310, %v2311
    %v2313 = vsub.f32 1.0, %v2312
    %v2314 = vmul.f32 %v2311, %v2313
    %v2315 = vadd.f32 %v2311, %v2314
    %vm2316 = vweird.f32 %v2310
    %vm2317 = vweird.f32 %v2311
    %vm2318 = vmor %vm2316, %vm2317
    %v2319 = vsel %vm2318, %v2311, %v2315
    %v2320 = vand.u32 2147483647, %v2310
    %vm2321 = vcmp.eq.f32.partialorder %v2320, 8.507059e+37
    %v2322 = vand.u32 %v2310, 2147483648
    %v2323 = vor.u32 1.1754944e-38, %v2322
    %v2324 = vsel %vm2321, %v2323, %v2319
    %v2325 = vmul.f32 1.0, %v2324
    %v2326 = vxor.u32 %v2304, 2147483648
    %v2327 = vmul.f32 %v2326, 1.442695
    %v2328 = vpow.pop %v2327
    %v2329 = vadd.f32 %v2328, 1.0
    %v2330 = vrcp.pop %v2329
    %v2331 = vmul.f32 %v2329, %v2330
    %v2332 = vsub.f32 1.0, %v2331
    %v2333 = vmul.f32 %v2330, %v2332
    %v2334 = vadd.f32 %v2330, %v2333
    %vm2335 = vweird.f32 %v2329
    %vm2336 = vweird.f32 %v2330
    %vm2337 = vmor %vm2335, %vm2336
    %v2338 = vsel %vm2337, %v2330, %v2334
    %v2339 = vand.u32 2147483647, %v2329
    %vm2340 = vcmp.eq.f32.partialorder %v2339, 8.507059e+37
    %v2341 = vand.u32 %v2329, 2147483648
    %v2342 = vor.u32 1.1754944e-38, %v2341
    %v2343 = vsel %vm2340, %v2342, %v2338
    %v2344 = vmul.f32 1.0, %v2343
    %v2345 = vtanh.pop %v2305
    %v2346 = vxor.u32 %v2306, 2147483648
    %v2347 = vmul.f32 %v2346, 1.442695
    %v2348 = vpow.pop %v2347
    %v2349 = vadd.f32 %v2348, 1.0
    %v2350 = vrcp.pop %v2349
    %v2351 = vmul.f32 %v2349, %v2350
    %v2352 = vsub.f32 1.0, %v2351
    %v2353 = vmul.f32 %v2350, %v2352
    %v2354 = vadd.f32 %v2350, %v2353
    %vm2355 = vweird.f32 %v2349
    %vm2356 = vweird.f32 %v2350
    %vm2357 = vmor %vm2355, %vm2356
    %v2358 = vsel %vm2357, %v2350, %v2354
    %v2359 = vand.u32 2147483647, %v2349
    %vm2360 = vcmp.eq.f32.partialorder %v2359, 8.507059e+37
    %v2361 = vand.u32 %v2349, 2147483648
    %v2362 = vor.u32 1.1754944e-38, %v2361
    %v2363 = vsel %vm2360, %v2362, %v2358
    %v2364 = vmul.f32 1.0, %v2363
    %v2366 = vrot.slane %v2205, 7
    %v2368 = vmul.f32 %v2344, %v2366
    %v2369 = vmul.f32 %v2325, %v2345
    %v2370 = vadd.f32 %v2368, %v2369
    %v2371 = vtanh.pop %v2370
    %v2372 = vmul.f32 %v2364, %v2371
    %v2374 = vrot.slane %v2372, 3
    %2376 = vmatpush.msra.mxu0 %v1730
    %2377 = vmatpush.msra.mxu0 %v1726
    %2378 = vmatpush.msra.mxu0 %v1722
    %2379 = vmatpush.msra.mxu0 %v1718
    %2380 = vmatpush.msra.mxu0 %v1714
    %2381 = vmatpush.msra.mxu0 %v1710
    %2382 = vmatpush.msra.mxu0 %v1706
    %2383 = vmatpush.msra.mxu0 %v1702
    %2384 = vmatpush.msra.mxu0 %v1698
    %2385 = vmatpush.msra.mxu0 %v1694
    %2386 = vmatpush.msra.mxu0 %v1690
    %2387 = vmatpush.msra.mxu0 %v1686
    %2388 = vmatpush.msra.mxu0 %v1682
    %2389 = vmatpush.msra.mxu0 %v1678
    %2390 = vmatpush.msra.mxu0 %v1674
    %2391 = vmatpush.msra.mxu0 %v1670
    %2392 = vmatmul.f32.gmra.mxu0 %v2374
    %v2393 = vpop.f32.mrf.mxu0
    %v2394 = vadd.f32 0.0, %v2393
    %2395 = vdwg.mxu0
    %2396 = vmatpush.msra.mxu0 %v1731
    %2397 = vmatpush.msra.mxu0 %v1727
    %2398 = vmatpush.msra.mxu0 %v1723
    %2399 = vmatpush.msra.mxu0 %v1719
    %2400 = vmatpush.msra.mxu0 %v1715
    %2401 = vmatpush.msra.mxu0 %v1711
    %2402 = vmatpush.msra.mxu0 %v1707
    %2403 = vmatpush.msra.mxu0 %v1703
    %2404 = vmatpush.msra.mxu0 %v1699
    %2405 = vmatpush.msra.mxu0 %v1695
    %2406 = vmatpush.msra.mxu0 %v1691
    %2407 = vmatpush.msra.mxu0 %v1687
    %2408 = vmatpush.msra.mxu0 %v1683
    %2409 = vmatpush.msra.mxu0 %v1679
    %2410 = vmatpush.msra.mxu0 %v1675
    %2411 = vmatpush.msra.mxu0 %v1671
    %2412 = vmatmul.f32.gmra.mxu0 %v2374
    %v2413 = vpop.f32.mrf.mxu0
    %v2414 = vadd.f32 0.0, %v2413
    %2415 = vdwg.mxu0
    %2416 = vmatpush.msra.mxu0 %v1732
    %2417 = vmatpush.msra.mxu0 %v1728
    %2418 = vmatpush.msra.mxu0 %v1724
    %2419 = vmatpush.msra.mxu0 %v1720
    %2420 = vmatpush.msra.mxu0 %v1716
    %2421 = vmatpush.msra.mxu0 %v1712
    %2422 = vmatpush.msra.mxu0 %v1708
    %2423 = vmatpush.msra.mxu0 %v1704
    %2424 = vmatpush.msra.mxu0 %v1700
    %2425 = vmatpush.msra.mxu0 %v1696
    %2426 = vmatpush.msra.mxu0 %v1692
    %2427 = vmatpush.msra.mxu0 %v1688
    %2428 = vmatpush.msra.mxu0 %v1684
    %2429 = vmatpush.msra.mxu0 %v1680
    %2430 = vmatpush.msra.mxu0 %v1676
    %2431 = vmatpush.msra.mxu0 %v1672
    %2432 = vmatmul.f32.gmra.mxu0 %v2374
    %v2433 = vpop.f32.mrf.mxu0
    %v2434 = vadd.f32 0.0, %v2433
    %2435 = vdwg.mxu0
    %2436 = vmatpush.msra.mxu0 %v1733
    %2437 = vmatpush.msra.mxu0 %v1729
    %2438 = vmatpush.msra.mxu0 %v1725
    %2439 = vmatpush.msra.mxu0 %v1721
    %2440 = vmatpush.msra.mxu0 %v1717
    %2441 = vmatpush.msra.mxu0 %v1713
    %2442 = vmatpush.msra.mxu0 %v1709
    %2443 = vmatpush.msra.mxu0 %v1705
    %2444 = vmatpush.msra.mxu0 %v1701
    %2445 = vmatpush.msra.mxu0 %v1697
    %2446 = vmatpush.msra.mxu0 %v1693
    %2447 = vmatpush.msra.mxu0 %v1689
    %2448 = vmatpush.msra.mxu0 %v1685
    %2449 = vmatpush.msra.mxu0 %v1681
    %2450 = vmatpush.msra.mxu0 %v1677
    %2451 = vmatpush.msra.mxu0 %v1673
    %2452 = vmatmul.f32.gmra.mxu0 %v2374
    %v2453 = vpop.f32.mrf.mxu0
    %v2454 = vadd.f32 0.0, %v2453
    %2455 = vdwg.mxu0
    %v2460 = vrot.slane %v2394, 4
    %v2461 = vrot.slane %v2414, 4
    %v2462 = vrot.slane %v2434, 4
    %v2463 = vrot.slane %v2454, 4
    %v2468 = vadd.f32 %v1608, %v2460
    %v2469 = vadd.f32 %v1628, %v2461
    %v2470 = vadd.f32 %v1648, %v2462
    %v2471 = vadd.f32 %v1668, %v2463
    %v2472 = vxor.u32 %v2468, 2147483648
    %v2473 = vmul.f32 %v2472, 1.442695
    %v2474 = vpow.pop %v2473
    %v2475 = vadd.f32 %v2474, 1.0
    %v2476 = vrcp.pop %v2475
    %v2477 = vmul.f32 %v2475, %v2476
    %v2478 = vsub.f32 1.0, %v2477
    %v2479 = vmul.f32 %v2476, %v2478
    %v2480 = vadd.f32 %v2476, %v2479
    %vm2481 = vweird.f32 %v2475
    %vm2482 = vweird.f32 %v2476
    %vm2483 = vmor %vm2481, %vm2482
    %v2484 = vsel %vm2483, %v2476, %v2480
    %v2485 = vand.u32 2147483647, %v2475
    %vm2486 = vcmp.eq.f32.partialorder %v2485, 8.507059e+37
    %v2487 = vand.u32 %v2475, 2147483648
    %v2488 = vor.u32 1.1754944e-38, %v2487
    %v2489 = vsel %vm2486, %v2488, %v2484
    %v2490 = vmul.f32 1.0, %v2489
    %v2491 = vxor.u32 %v2469, 2147483648
    %v2492 = vmul.f32 %v2491, 1.442695
    %v2493 = vpow.pop %v2492
    %v2494 = vadd.f32 %v2493, 1.0
    %v2495 = vrcp.pop %v2494
    %v2496 = vmul.f32 %v2494, %v2495
    %v2497 = vsub.f32 1.0, %v2496
    %v2498 = vmul.f32 %v2495, %v2497
    %v2499 = vadd.f32 %v2495, %v2498
    %vm2500 = vweird.f32 %v2494
    %vm2501 = vweird.f32 %v2495
    %vm2502 = vmor %vm2500, %vm2501
    %v2503 = vsel %vm2502, %v2495, %v2499
    %v2504 = vand.u32 2147483647, %v2494
    %vm2505 = vcmp.eq.f32.partialorder %v2504, 8.507059e+37
    %v2506 = vand.u32 %v2494, 2147483648
    %v2507 = vor.u32 1.1754944e-38, %v2506
    %v2508 = vsel %vm2505, %v2507, %v2503
    %v2509 = vmul.f32 1.0, %v2508
    %v2510 = vtanh.pop %v2470
    %v2511 = vxor.u32 %v2471, 2147483648
    %v2512 = vmul.f32 %v2511, 1.442695
    %v2513 = vpow.pop %v2512
    %v2514 = vadd.f32 %v2513, 1.0
    %v2515 = vrcp.pop %v2514
    %v2516 = vmul.f32 %v2514, %v2515
    %v2517 = vsub.f32 1.0, %v2516
    %v2518 = vmul.f32 %v2515, %v2517
    %v2519 = vadd.f32 %v2515, %v2518
    %vm2520 = vweird.f32 %v2514
    %vm2521 = vweird.f32 %v2515
    %vm2522 = vmor %vm2520, %vm2521
    %v2523 = vsel %vm2522, %v2515, %v2519
    %v2524 = vand.u32 2147483647, %v2514
    %vm2525 = vcmp.eq.f32.partialorder %v2524, 8.507059e+37
    %v2526 = vand.u32 %v2514, 2147483648
    %v2527 = vor.u32 1.1754944e-38, %v2526
    %v2528 = vsel %vm2525, %v2527, %v2523
    %v2529 = vmul.f32 1.0, %v2528
    %v2531 = vrot.slane %v2370, 7
    %v2533 = vmul.f32 %v2509, %v2531
    %v2534 = vmul.f32 %v2490, %v2510
    %v2535 = vadd.f32 %v2533, %v2534
    %v2536 = vtanh.pop %v2535
    %v2537 = vmul.f32 %v2529, %v2536
    %v2539 = vrot.slane %v2537, 4
    %2541 = vmatpush.msra.mxu0 %v1730
    %2542 = vmatpush.msra.mxu0 %v1726
    %2543 = vmatpush.msra.mxu0 %v1722
    %2544 = vmatpush.msra.mxu0 %v1718
    %2545 = vmatpush.msra.mxu0 %v1714
    %2546 = vmatpush.msra.mxu0 %v1710
    %2547 = vmatpush.msra.mxu0 %v1706
    %2548 = vmatpush.msra.mxu0 %v1702
    %2549 = vmatpush.msra.mxu0 %v1698
    %2550 = vmatpush.msra.mxu0 %v1694
    %2551 = vmatpush.msra.mxu0 %v1690
    %2552 = vmatpush.msra.mxu0 %v1686
    %2553 = vmatpush.msra.mxu0 %v1682
    %2554 = vmatpush.msra.mxu0 %v1678
    %2555 = vmatpush.msra.mxu0 %v1674
    %2556 = vmatpush.msra.mxu0 %v1670
    %2557 = vmatmul.f32.gmra.mxu0 %v2539
    %v2558 = vpop.f32.mrf.mxu0
    %v2559 = vadd.f32 0.0, %v2558
    %2560 = vdwg.mxu0
    %2561 = vmatpush.msra.mxu0 %v1731
    %2562 = vmatpush.msra.mxu0 %v1727
    %2563 = vmatpush.msra.mxu0 %v1723
    %2564 = vmatpush.msra.mxu0 %v1719
    %2565 = vmatpush.msra.mxu0 %v1715
    %2566 = vmatpush.msra.mxu0 %v1711
    %2567 = vmatpush.msra.mxu0 %v1707
    %2568 = vmatpush.msra.mxu0 %v1703
    %2569 = vmatpush.msra.mxu0 %v1699
    %2570 = vmatpush.msra.mxu0 %v1695
    %2571 = vmatpush.msra.mxu0 %v1691
    %2572 = vmatpush.msra.mxu0 %v1687
    %2573 = vmatpush.msra.mxu0 %v1683
    %2574 = vmatpush.msra.mxu0 %v1679
    %2575 = vmatpush.msra.mxu0 %v1675
    %2576 = vmatpush.msra.mxu0 %v1671
    %2577 = vmatmul.f32.gmra.mxu0 %v2539
    %v2578 = vpop.f32.mrf.mxu0
    %v2579 = vadd.f32 0.0, %v2578
    %2580 = vdwg.mxu0
    %2581 = vmatpush.msra.mxu0 %v1732
    %2582 = vmatpush.msra.mxu0 %v1728
    %2583 = vmatpush.msra.mxu0 %v1724
    %2584 = vmatpush.msra.mxu0 %v1720
    %2585 = vmatpush.msra.mxu0 %v1716
    %2586 = vmatpush.msra.mxu0 %v1712
    %2587 = vmatpush.msra.mxu0 %v1708
    %2588 = vmatpush.msra.mxu0 %v1704
    %2589 = vmatpush.msra.mxu0 %v1700
    %2590 = vmatpush.msra.mxu0 %v1696
    %2591 = vmatpush.msra.mxu0 %v1692
    %2592 = vmatpush.msra.mxu0 %v1688
    %2593 = vmatpush.msra.mxu0 %v1684
    %2594 = vmatpush.msra.mxu0 %v1680
    %2595 = vmatpush.msra.mxu0 %v1676
    %2596 = vmatpush.msra.mxu0 %v1672
    %2597 = vmatmul.f32.gmra.mxu0 %v2539
    %v2598 = vpop.f32.mrf.mxu0
    %v2599 = vadd.f32 0.0, %v2598
    %2600 = vdwg.mxu0
    %2601 = vmatpush.msra.mxu0 %v1733
    %2602 = vmatpush.msra.mxu0 %v1729
    %2603 = vmatpush.msra.mxu0 %v1725
    %2604 = vmatpush.msra.mxu0 %v1721
    %2605 = vmatpush.msra.mxu0 %v1717
    %2606 = vmatpush.msra.mxu0 %v1713
    %2607 = vmatpush.msra.mxu0 %v1709
    %2608 = vmatpush.msra.mxu0 %v1705
    %2609 = vmatpush.msra.mxu0 %v1701
    %2610 = vmatpush.msra.mxu0 %v1697
    %2611 = vmatpush.msra.mxu0 %v1693
    %2612 = vmatpush.msra.mxu0 %v1689
    %2613 = vmatpush.msra.mxu0 %v1685
    %2614 = vmatpush.msra.mxu0 %v1681
    %2615 = vmatpush.msra.mxu0 %v1677
    %2616 = vmatpush.msra.mxu0 %v1673
    %2617 = vmatmul.f32.gmra.mxu0 %v2539
    %v2618 = vpop.f32.mrf.mxu0
    %v2619 = vadd.f32 0.0, %v2618
    %2620 = vdwg.mxu0
    %v2625 = vrot.slane %v2559, 3
    %v2626 = vrot.slane %v2579, 3
    %v2627 = vrot.slane %v2599, 3
    %v2628 = vrot.slane %v2619, 3
    %v2633 = vadd.f32 %v1608, %v2625
    %v2634 = vadd.f32 %v1628, %v2626
    %v2635 = vadd.f32 %v1648, %v2627
    %v2636 = vadd.f32 %v1668, %v2628
    %v2637 = vxor.u32 %v2633, 2147483648
    %v2638 = vmul.f32 %v2637, 1.442695
    %v2639 = vpow.pop %v2638
    %v2640 = vadd.f32 %v2639, 1.0
    %v2641 = vrcp.pop %v2640
    %v2642 = vmul.f32 %v2640, %v2641
    %v2643 = vsub.f32 1.0, %v2642
    %v2644 = vmul.f32 %v2641, %v2643
    %v2645 = vadd.f32 %v2641, %v2644
    %vm2646 = vweird.f32 %v2640
    %vm2647 = vweird.f32 %v2641
    %vm2648 = vmor %vm2646, %vm2647
    %v2649 = vsel %vm2648, %v2641, %v2645
    %v2650 = vand.u32 2147483647, %v2640
    %vm2651 = vcmp.eq.f32.partialorder %v2650, 8.507059e+37
    %v2652 = vand.u32 %v2640, 2147483648
    %v2653 = vor.u32 1.1754944e-38, %v2652
    %v2654 = vsel %vm2651, %v2653, %v2649
    %v2655 = vmul.f32 1.0, %v2654
    %v2656 = vxor.u32 %v2634, 2147483648
    %v2657 = vmul.f32 %v2656, 1.442695
    %v2658 = vpow.pop %v2657
    %v2659 = vadd.f32 %v2658, 1.0
    %v2660 = vrcp.pop %v2659
    %v2661 = vmul.f32 %v2659, %v2660
    %v2662 = vsub.f32 1.0, %v2661
    %v2663 = vmul.f32 %v2660, %v2662
    %v2664 = vadd.f32 %v2660, %v2663
    %vm2665 = vweird.f32 %v2659
    %vm2666 = vweird.f32 %v2660
    %vm2667 = vmor %vm2665, %vm2666
    %v2668 = vsel %vm2667, %v2660, %v2664
    %v2669 = vand.u32 2147483647, %v2659
    %vm2670 = vcmp.eq.f32.partialorder %v2669, 8.507059e+37
    %v2671 = vand.u32 %v2659, 2147483648
    %v2672 = vor.u32 1.1754944e-38, %v2671
    %v2673 = vsel %vm2670, %v2672, %v2668
    %v2674 = vmul.f32 1.0, %v2673
    %v2675 = vtanh.pop %v2635
    %v2676 = vxor.u32 %v2636, 2147483648
    %v2677 = vmul.f32 %v2676, 1.442695
    %v2678 = vpow.pop %v2677
    %v2679 = vadd.f32 %v2678, 1.0
    %v2680 = vrcp.pop %v2679
    %v2681 = vmul.f32 %v2679, %v2680
    %v2682 = vsub.f32 1.0, %v2681
    %v2683 = vmul.f32 %v2680, %v2682
    %v2684 = vadd.f32 %v2680, %v2683
    %vm2685 = vweird.f32 %v2679
    %vm2686 = vweird.f32 %v2680
    %vm2687 = vmor %vm2685, %vm2686
    %v2688 = vsel %vm2687, %v2680, %v2684
    %v2689 = vand.u32 2147483647, %v2679
    %vm2690 = vcmp.eq.f32.partialorder %v2689, 8.507059e+37
    %v2691 = vand.u32 %v2679, 2147483648
    %v2692 = vor.u32 1.1754944e-38, %v2691
    %v2693 = vsel %vm2690, %v2692, %v2688
    %v2694 = vmul.f32 1.0, %v2693
    %v2696 = vrot.slane %v2535, 7
    %v2698 = vmul.f32 %v2674, %v2696
    %v2699 = vmul.f32 %v2655, %v2675
    %v2700 = vadd.f32 %v2698, %v2699
    %v2701 = vtanh.pop %v2700
    %v2702 = vmul.f32 %v2694, %v2701
    %v2704 = vrot.slane %v2702, 5
    %2706 = vmatpush.msra.mxu0 %v1730
    %2707 = vmatpush.msra.mxu0 %v1726
    %2708 = vmatpush.msra.mxu0 %v1722
    %2709 = vmatpush.msra.mxu0 %v1718
    %2710 = vmatpush.msra.mxu0 %v1714
    %2711 = vmatpush.msra.mxu0 %v1710
    %2712 = vmatpush.msra.mxu0 %v1706
    %2713 = vmatpush.msra.mxu0 %v1702
    %2714 = vmatpush.msra.mxu0 %v1698
    %2715 = vmatpush.msra.mxu0 %v1694
    %2716 = vmatpush.msra.mxu0 %v1690
    %2717 = vmatpush.msra.mxu0 %v1686
    %2718 = vmatpush.msra.mxu0 %v1682
    %2719 = vmatpush.msra.mxu0 %v1678
    %2720 = vmatpush.msra.mxu0 %v1674
    %2721 = vmatpush.msra.mxu0 %v1670
    %2722 = vmatmul.f32.gmra.mxu0 %v2704
    %v2723 = vpop.f32.mrf.mxu0
    %v2724 = vadd.f32 0.0, %v2723
    %2725 = vdwg.mxu0
    %2726 = vmatpush.msra.mxu0 %v1731
    %2727 = vmatpush.msra.mxu0 %v1727
    %2728 = vmatpush.msra.mxu0 %v1723
    %2729 = vmatpush.msra.mxu0 %v1719
    %2730 = vmatpush.msra.mxu0 %v1715
    %2731 = vmatpush.msra.mxu0 %v1711
    %2732 = vmatpush.msra.mxu0 %v1707
    %2733 = vmatpush.msra.mxu0 %v1703
    %2734 = vmatpush.msra.mxu0 %v1699
    %2735 = vmatpush.msra.mxu0 %v1695
    %2736 = vmatpush.msra.mxu0 %v1691
    %2737 = vmatpush.msra.mxu0 %v1687
    %2738 = vmatpush.msra.mxu0 %v1683
    %2739 = vmatpush.msra.mxu0 %v1679
    %2740 = vmatpush.msra.mxu0 %v1675
    %2741 = vmatpush.msra.mxu0 %v1671
    %2742 = vmatmul.f32.gmra.mxu0 %v2704
    %v2743 = vpop.f32.mrf.mxu0
    %v2744 = vadd.f32 0.0, %v2743
    %2745 = vdwg.mxu0
    %2746 = vmatpush.msra.mxu0 %v1732
    %2747 = vmatpush.msra.mxu0 %v1728
    %2748 = vmatpush.msra.mxu0 %v1724
    %2749 = vmatpush.msra.mxu0 %v1720
    %2750 = vmatpush.msra.mxu0 %v1716
    %2751 = vmatpush.msra.mxu0 %v1712
    %2752 = vmatpush.msra.mxu0 %v1708
    %2753 = vmatpush.msra.mxu0 %v1704
    %2754 = vmatpush.msra.mxu0 %v1700
    %2755 = vmatpush.msra.mxu0 %v1696
    %2756 = vmatpush.msra.mxu0 %v1692
    %2757 = vmatpush.msra.mxu0 %v1688
    %2758 = vmatpush.msra.mxu0 %v1684
    %2759 = vmatpush.msra.mxu0 %v1680
    %2760 = vmatpush.msra.mxu0 %v1676
    %2761 = vmatpush.msra.mxu0 %v1672
    %2762 = vmatmul.f32.gmra.mxu0 %v2704
    %v2763 = vpop.f32.mrf.mxu0
    %v2764 = vadd.f32 0.0, %v2763
    %2765 = vdwg.mxu0
    %2766 = vmatpush.msra.mxu0 %v1733
    %2767 = vmatpush.msra.mxu0 %v1729
    %2768 = vmatpush.msra.mxu0 %v1725
    %2769 = vmatpush.msra.mxu0 %v1721
    %2770 = vmatpush.msra.mxu0 %v1717
    %2771 = vmatpush.msra.mxu0 %v1713
    %2772 = vmatpush.msra.mxu0 %v1709
    %2773 = vmatpush.msra.mxu0 %v1705
    %2774 = vmatpush.msra.mxu0 %v1701
    %2775 = vmatpush.msra.mxu0 %v1697
    %2776 = vmatpush.msra.mxu0 %v1693
    %2777 = vmatpush.msra.mxu0 %v1689
    %2778 = vmatpush.msra.mxu0 %v1685
    %2779 = vmatpush.msra.mxu0 %v1681
    %2780 = vmatpush.msra.mxu0 %v1677
    %2781 = vmatpush.msra.mxu0 %v1673
    %2782 = vmatmul.f32.gmra.mxu0 %v2704
    %v2783 = vpop.f32.mrf.mxu0
    %v2784 = vadd.f32 0.0, %v2783
    %2785 = vdwg.mxu0
    %v2790 = vrot.slane %v2724, 2
    %v2791 = vrot.slane %v2744, 2
    %v2792 = vrot.slane %v2764, 2
    %v2793 = vrot.slane %v2784, 2
    %v2798 = vadd.f32 %v1608, %v2790
    %v2799 = vadd.f32 %v1628, %v2791
    %v2800 = vadd.f32 %v1648, %v2792
    %v2801 = vadd.f32 %v1668, %v2793
    %v2802 = vxor.u32 %v2798, 2147483648
    %v2803 = vmul.f32 %v2802, 1.442695
    %v2804 = vpow.pop %v2803
    %v2805 = vadd.f32 %v2804, 1.0
    %v2806 = vrcp.pop %v2805
    %v2807 = vmul.f32 %v2805, %v2806
    %v2808 = vsub.f32 1.0, %v2807
    %v2809 = vmul.f32 %v2806, %v2808
    %v2810 = vadd.f32 %v2806, %v2809
    %vm2811 = vweird.f32 %v2805
    %vm2812 = vweird.f32 %v2806
    %vm2813 = vmor %vm2811, %vm2812
    %v2814 = vsel %vm2813, %v2806, %v2810
    %v2815 = vand.u32 2147483647, %v2805
    %vm2816 = vcmp.eq.f32.partialorder %v2815, 8.507059e+37
    %v2817 = vand.u32 %v2805, 2147483648
    %v2818 = vor.u32 1.1754944e-38, %v2817
    %v2819 = vsel %vm2816, %v2818, %v2814
    %v2820 = vmul.f32 1.0, %v2819
    %v2821 = vxor.u32 %v2799, 2147483648
    %v2822 = vmul.f32 %v2821, 1.442695
    %v2823 = vpow.pop %v2822
    %v2824 = vadd.f32 %v2823, 1.0
    %v2825 = vrcp.pop %v2824
    %v2826 = vmul.f32 %v2824, %v2825
    %v2827 = vsub.f32 1.0, %v2826
    %v2828 = vmul.f32 %v2825, %v2827
    %v2829 = vadd.f32 %v2825, %v2828
    %vm2830 = vweird.f32 %v2824
    %vm2831 = vweird.f32 %v2825
    %vm2832 = vmor %vm2830, %vm2831
    %v2833 = vsel %vm2832, %v2825, %v2829
    %v2834 = vand.u32 2147483647, %v2824
    %vm2835 = vcmp.eq.f32.partialorder %v2834, 8.507059e+37
    %v2836 = vand.u32 %v2824, 2147483648
    %v2837 = vor.u32 1.1754944e-38, %v2836
    %v2838 = vsel %vm2835, %v2837, %v2833
    %v2839 = vmul.f32 1.0, %v2838
    %v2840 = vtanh.pop %v2800
    %v2841 = vxor.u32 %v2801, 2147483648
    %v2842 = vmul.f32 %v2841, 1.442695
    %v2843 = vpow.pop %v2842
    %v2844 = vadd.f32 %v2843, 1.0
    %v2845 = vrcp.pop %v2844
    %v2846 = vmul.f32 %v2844, %v2845
    %v2847 = vsub.f32 1.0, %v2846
    %v2848 = vmul.f32 %v2845, %v2847
    %v2849 = vadd.f32 %v2845, %v2848
    %vm2850 = vweird.f32 %v2844
    %vm2851 = vweird.f32 %v2845
    %vm2852 = vmor %vm2850, %vm2851
    %v2853 = vsel %vm2852, %v2845, %v2849
    %v2854 = vand.u32 2147483647, %v2844
    %vm2855 = vcmp.eq.f32.partialorder %v2854, 8.507059e+37
    %v2856 = vand.u32 %v2844, 2147483648
    %v2857 = vor.u32 1.1754944e-38, %v2856
    %v2858 = vsel %vm2855, %v2857, %v2853
    %v2859 = vmul.f32 1.0, %v2858
    %v2861 = vrot.slane %v2700, 7
    %v2863 = vmul.f32 %v2839, %v2861
    %v2864 = vmul.f32 %v2820, %v2840
    %v2865 = vadd.f32 %v2863, %v2864
    %v2866 = vtanh.pop %v2865
    %v2867 = vmul.f32 %v2859, %v2866
    %v2869 = vrot.slane %v2867, 6
    %2871 = vmatpush.msra.mxu0 %v1730
    %2872 = vmatpush.msra.mxu0 %v1726
    %2873 = vmatpush.msra.mxu0 %v1722
    %2874 = vmatpush.msra.mxu0 %v1718
    %2875 = vmatpush.msra.mxu0 %v1714
    %2876 = vmatpush.msra.mxu0 %v1710
    %2877 = vmatpush.msra.mxu0 %v1706
    %2878 = vmatpush.msra.mxu0 %v1702
    %2879 = vmatpush.msra.mxu0 %v1698
    %2880 = vmatpush.msra.mxu0 %v1694
    %2881 = vmatpush.msra.mxu0 %v1690
    %2882 = vmatpush.msra.mxu0 %v1686
    %2883 = vmatpush.msra.mxu0 %v1682
    %2884 = vmatpush.msra.mxu0 %v1678
    %2885 = vmatpush.msra.mxu0 %v1674
    %2886 = vmatpush.msra.mxu0 %v1670
    %2887 = vmatmul.f32.gmra.mxu0 %v2869
    %v2888 = vpop.f32.mrf.mxu0
    %v2889 = vadd.f32 0.0, %v2888
    %2890 = vdwg.mxu0
    %2891 = vmatpush.msra.mxu0 %v1731
    %2892 = vmatpush.msra.mxu0 %v1727
    %2893 = vmatpush.msra.mxu0 %v1723
    %2894 = vmatpush.msra.mxu0 %v1719
    %2895 = vmatpush.msra.mxu0 %v1715
    %2896 = vmatpush.msra.mxu0 %v1711
    %2897 = vmatpush.msra.mxu0 %v1707
    %2898 = vmatpush.msra.mxu0 %v1703
    %2899 = vmatpush.msra.mxu0 %v1699
    %2900 = vmatpush.msra.mxu0 %v1695
    %2901 = vmatpush.msra.mxu0 %v1691
    %2902 = vmatpush.msra.mxu0 %v1687
    %2903 = vmatpush.msra.mxu0 %v1683
    %2904 = vmatpush.msra.mxu0 %v1679
    %2905 = vmatpush.msra.mxu0 %v1675
    %2906 = vmatpush.msra.mxu0 %v1671
    %2907 = vmatmul.f32.gmra.mxu0 %v2869
    %v2908 = vpop.f32.mrf.mxu0
    %v2909 = vadd.f32 0.0, %v2908
    %2910 = vdwg.mxu0
    %2911 = vmatpush.msra.mxu0 %v1732
    %2912 = vmatpush.msra.mxu0 %v1728
    %2913 = vmatpush.msra.mxu0 %v1724
    %2914 = vmatpush.msra.mxu0 %v1720
    %2915 = vmatpush.msra.mxu0 %v1716
    %2916 = vmatpush.msra.mxu0 %v1712
    %2917 = vmatpush.msra.mxu0 %v1708
    %2918 = vmatpush.msra.mxu0 %v1704
    %2919 = vmatpush.msra.mxu0 %v1700
    %2920 = vmatpush.msra.mxu0 %v1696
    %2921 = vmatpush.msra.mxu0 %v1692
    %2922 = vmatpush.msra.mxu0 %v1688
    %2923 = vmatpush.msra.mxu0 %v1684
    %2924 = vmatpush.msra.mxu0 %v1680
    %2925 = vmatpush.msra.mxu0 %v1676
    %2926 = vmatpush.msra.mxu0 %v1672
    %2927 = vmatmul.f32.gmra.mxu0 %v2869
    %v2928 = vpop.f32.mrf.mxu0
    %v2929 = vadd.f32 0.0, %v2928
    %2930 = vdwg.mxu0
    %2931 = vmatpush.msra.mxu0 %v1733
    %2932 = vmatpush.msra.mxu0 %v1729
    %2933 = vmatpush.msra.mxu0 %v1725
    %2934 = vmatpush.msra.mxu0 %v1721
    %2935 = vmatpush.msra.mxu0 %v1717
    %2936 = vmatpush.msra.mxu0 %v1713
    %2937 = vmatpush.msra.mxu0 %v1709
    %2938 = vmatpush.msra.mxu0 %v1705
    %2939 = vmatpush.msra.mxu0 %v1701
    %2940 = vmatpush.msra.mxu0 %v1697
    %2941 = vmatpush.msra.mxu0 %v1693
    %2942 = vmatpush.msra.mxu0 %v1689
    %2943 = vmatpush.msra.mxu0 %v1685
    %2944 = vmatpush.msra.mxu0 %v1681
    %2945 = vmatpush.msra.mxu0 %v1677
    %2946 = vmatpush.msra.mxu0 %v1673
    %2947 = vmatmul.f32.gmra.mxu0 %v2869
    %v2948 = vpop.f32.mrf.mxu0
    %v2949 = vadd.f32 0.0, %v2948
    %2950 = vdwg.mxu0
    %v2955 = vrot.slane %v2889, 1
    %v2956 = vrot.slane %v2909, 1
    %v2957 = vrot.slane %v2929, 1
    %v2958 = vrot.slane %v2949, 1
    %v2963 = vadd.f32 %v1608, %v2955
    %v2964 = vadd.f32 %v1628, %v2956
    %v2965 = vadd.f32 %v1648, %v2957
    %v2966 = vadd.f32 %v1668, %v2958
    %v2967 = vxor.u32 %v2963, 2147483648
    %v2968 = vmul.f32 %v2967, 1.442695
    %v2969 = vpow.pop %v2968
    %v2970 = vadd.f32 %v2969, 1.0
    %v2971 = vrcp.pop %v2970
    %v2972 = vmul.f32 %v2970, %v2971
    %v2973 = vsub.f32 1.0, %v2972
    %v2974 = vmul.f32 %v2971, %v2973
    %v2975 = vadd.f32 %v2971, %v2974
    %vm2976 = vweird.f32 %v2970
    %vm2977 = vweird.f32 %v2971
    %vm2978 = vmor %vm2976, %vm2977
    %v2979 = vsel %vm2978, %v2971, %v2975
    %v2980 = vand.u32 2147483647, %v2970
    %vm2981 = vcmp.eq.f32.partialorder %v2980, 8.507059e+37
    %v2982 = vand.u32 %v2970, 2147483648
    %v2983 = vor.u32 1.1754944e-38, %v2982
    %v2984 = vsel %vm2981, %v2983, %v2979
    %v2985 = vmul.f32 1.0, %v2984
    %v2986 = vxor.u32 %v2964, 2147483648
    %v2987 = vmul.f32 %v2986, 1.442695
    %v2988 = vpow.pop %v2987
    %v2989 = vadd.f32 %v2988, 1.0
    %v2990 = vrcp.pop %v2989
    %v2991 = vmul.f32 %v2989, %v2990
    %v2992 = vsub.f32 1.0, %v2991
    %v2993 = vmul.f32 %v2990, %v2992
    %v2994 = vadd.f32 %v2990, %v2993
    %vm2995 = vweird.f32 %v2989
    %vm2996 = vweird.f32 %v2990
    %vm2997 = vmor %vm2995, %vm2996
    %v2998 = vsel %vm2997, %v2990, %v2994
    %v2999 = vand.u32 2147483647, %v2989
    %vm3000 = vcmp.eq.f32.partialorder %v2999, 8.507059e+37
    %v3001 = vand.u32 %v2989, 2147483648
    %v3002 = vor.u32 1.1754944e-38, %v3001
    %v3003 = vsel %vm3000, %v3002, %v2998
    %v3004 = vmul.f32 1.0, %v3003
    %v3005 = vtanh.pop %v2965
    %v3006 = vxor.u32 %v2966, 2147483648
    %v3007 = vmul.f32 %v3006, 1.442695
    %v3008 = vpow.pop %v3007
    %v3009 = vadd.f32 %v3008, 1.0
    %v3010 = vrcp.pop %v3009
    %v3011 = vmul.f32 %v3009, %v3010
    %v3012 = vsub.f32 1.0, %v3011
    %v3013 = vmul.f32 %v3010, %v3012
    %v3014 = vadd.f32 %v3010, %v3013
    %vm3015 = vweird.f32 %v3009
    %vm3016 = vweird.f32 %v3010
    %vm3017 = vmor %vm3015, %vm3016
    %v3018 = vsel %vm3017, %v3010, %v3014
    %v3019 = vand.u32 2147483647, %v3009
    %vm3020 = vcmp.eq.f32.partialorder %v3019, 8.507059e+37
    %v3021 = vand.u32 %v3009, 2147483648
    %v3022 = vor.u32 1.1754944e-38, %v3021
    %v3023 = vsel %vm3020, %v3022, %v3018
    %v3024 = vmul.f32 1.0, %v3023
    %v3026 = vrot.slane %v2865, 7
    %v3028 = vmul.f32 %v3004, %v3026
    %v3029 = vmul.f32 %v2985, %v3005
    %v3030 = vadd.f32 %v3028, %v3029
    %v3031 = vtanh.pop %v3030
    %v3032 = vmul.f32 %v3024, %v3031
    %v3033 = vsel %vm1502, %v1880, %v2042
    %v3034 = vsel %vm1504, %v3033, %v2207
    %v3035 = vsel %vm50, %v3034, %v2372
    %v3036 = vsel %vm1507, %v3035, %v2537
    %v3037 = vsel %vm1509, %v3036, %v2702
    %v3038 = vsel %vm1511, %v3037, %v2867
    %v3039 = vsel %vm1513, %v3038, %v3032
    %v3040 = vld [vmem:[%s4] sm:$0xff]
    %v3041 = vld [vmem:[%s4 + $0x8] sm:$0xff]
    %v3042 = vld [vmem:[%s4 + $0x10] sm:$0xff]
    %v3043 = vld [vmem:[%s4 + $0x18] sm:$0xff]
    %v3044 = vld [vmem:[%s4 + $0x20] sm:$0xff]
    %v3045 = vld [vmem:[%s4 + $0x28] sm:$0xff]
    %v3046 = vld [vmem:[%s4 + $0x30] sm:$0xff]
    %v3047 = vld [vmem:[%s4 + $0x38] sm:$0xff]
    %v3048 = vld [vmem:[%s4 + $0x40] sm:$0xff]
    %v3049 = vld [vmem:[%s4 + $0x48] sm:$0xff]
    %v3050 = vld [vmem:[%s4 + $0x50] sm:$0xff]
    %v3051 = vld [vmem:[%s4 + $0x58] sm:$0xff]
    %v3052 = vld [vmem:[%s4 + $0x60] sm:$0xff]
    %v3053 = vld [vmem:[%s4 + $0x68] sm:$0xff]
    %v3054 = vld [vmem:[%s4 + $0x70] sm:$0xff]
    %v3055 = vld [vmem:[%s4 + $0x78] sm:$0xff]
    %v3056 = vld [vmem:[%s5] sm:$0x1]
    %v3058 = vperm.slane %v3056, 0
    %3060 = vmatpush.msra.mxu0 %v3055
    %3061 = vmatpush.msra.mxu0 %v3054
    %3062 = vmatpush.msra.mxu0 %v3053
    %3063 = vmatpush.msra.mxu0 %v3052
    %3064 = vmatpush.msra.mxu0 %v3051
    %3065 = vmatpush.msra.mxu0 %v3050
    %3066 = vmatpush.msra.mxu0 %v3049
    %3067 = vmatpush.msra.mxu0 %v3048
    %3068 = vmatpush.msra.mxu0 %v3047
    %3069 = vmatpush.msra.mxu0 %v3046
    %3070 = vmatpush.msra.mxu0 %v3045
    %3071 = vmatpush.msra.mxu0 %v3044
    %3072 = vmatpush.msra.mxu0 %v3043
    %3073 = vmatpush.msra.mxu0 %v3042
    %3074 = vmatpush.msra.mxu0 %v3041
    %3075 = vmatpush.msra.mxu0 %v3040
    %3076 = vmatmul.f32.gmra.mxu0 %v3039
    %v3077 = vpop.f32.mrf.mxu0
    %v3078 = vadd.f32 %v3058, %v3077
    %3079 = vdwg.mxu0
    %s3080 = scalar_lea.vmem [#allocation2], 8
    %3081 = vst [vmem:[%s3080] sm:$0xff] %v3078
    // Predicated region
    $region26: #{recurrent_nn_forward.1} parent=1 // pred_check
      _
    $region27: #{recurrent_nn_forward.1} parent=1 // pred_check_branch
      %3083 = sbr.rel (0) target = $region29
    $region28: #{recurrent_nn_forward.1} parent=1 // pred_region
      %3085 = vsyncadd [#allocation3], 0
      %s3086 = sshll.u32 [#allocation2], 4
      %s3087 = int_to_ptr.vmem [resolvable:$true] %s3086
      %s3088 = sshll.u32 %s6, 4
      %s3089 = int_to_ptr.hbm [resolvable:$true] %s3088
      %3094 = dma.vmem_to_hbm [thread:$0]  %s3087, 256, %s3089, [#allocation3], 128, 128, 8
    $region29: #{recurrent_nn_forward.1} parent=1 // pred_fallthru
      _
    // Predicated region
    $region30: #{recurrent_nn_forward.1} parent=1 // pred_check
      _
    $region31: #{recurrent_nn_forward.1} parent=1 // pred_check_branch
      %3096 = sbr.rel (0) target = $region33
    $region32: #{recurrent_nn_forward.1} parent=1 // pred_region
      %3098 = dma.done [#allocation3], 256
    $region33: #{recurrent_nn_forward.1} parent=1 // pred_fallthru
      _
    %3099 = vsyncpa [#allocation3], 1

</llo_original>
